<compile_context>
chip_gen: v7x
topology: tpu7x:2x2x1
jax: 0.10.0
libtpu: 0.0.40
codegen_flags: <defaults>
</compile_context>

<pallas_src>
import math

import jax
import jax.numpy as jnp
import numpy as np
from jax.experimental import pallas as pl
from jax.experimental.pallas import tpu as pltpu

# ---- packing constants ----
_NM = 3        # models packed on lanes: [actor | critic1 | critic2]
_C1 = 16       # per-model conv1 channels
_C2 = 32       # per-model conv2 channels
_C1PAD = 128   # padded packed conv1 width (3*16=48 -> 128)
_C2PAD = 128   # padded packed conv2 width (3*32=96 -> 128)
_HB = 128      # decoder hidden width per model
_K1, _S1 = 8, 4
_K2, _S2 = 4, 2


# ----------------------------- small helpers -----------------------------

def _softplus(x):
    # PyTorch softplus (beta=1, threshold=20)
    return jnp.where(x > 20.0, x, jnp.log1p(jnp.exp(jnp.minimum(x, 20.0))))


def _ln_relu(h):
    # torch.nn.LayerNorm(128, elementwise_affine=False): biased variance, eps=1e-5
    m = jnp.mean(h, axis=-1, keepdims=True)
    v = jnp.mean((h - m) ** 2, axis=-1, keepdims=True)
    return jnp.maximum((h - m) * jax.lax.rsqrt(v + 1e-5), 0.0)


def _full_spec(shape):
    n = len(shape)
    return pl.BlockSpec(shape, lambda *args, _n=n: (0,) * _n)


def _im2col(x, k, s):
    # x: [B, H, W, C] -> patches [B, Ho*Wo, k*k*C] (row-major over kh, kw, C)
    B, H, W, C = x.shape
    Ho = (H - k) // s + 1
    Wo = (W - k) // s + 1
    idx_h = (jnp.arange(Ho) * s)[:, None] + jnp.arange(k)[None, :]
    idx_w = (jnp.arange(Wo) * s)[:, None] + jnp.arange(k)[None, :]
    p = x[:, idx_h]                            # [B, Ho, k, W, C]
    p = p[:, :, :, idx_w]                      # [B, Ho, k, Wo, k, C]
    p = jnp.transpose(p, (0, 1, 3, 2, 4, 5))   # [B, Ho, Wo, k, k, C]
    return p.reshape(B, Ho * Wo, k * k * C), Ho, Wo


# ----------------------------- fused Pallas kernel -----------------------------

def _make_fused_kernel(n_img, B, Wo1, Ho2, Wo2, A):
    """Encoders for all images (3 models packed on lanes) + all heads, one launch."""
    inv_p2 = 1.0 / float(Ho2 * Wo2)

    def kernel(patches_ref, w1_ref, b1_ref, w2r_ref, b2_ref,
               wd_ref, ws_ref, wa_ref, db_ref, wo_ref, bo_ref,
               scalar_ref, action_ref, out_ref, y1_scr, l_scr):
        # Decoder pre-activation for all 3 models, packed on lanes:
        #   [0:128) actor | [128:256) critic1 | [256:384) critic2
        # scalar->Linear(1,64)->decoder and action->Linear(A,64)->decoder are
        # linear∘linear -> folded into ws / wa / db at pack time (no K=1 matmul).
        h = db_ref[...] + scalar_ref[...] * ws_ref[...]            # VPU broadcast
        h = h + jnp.dot(action_ref[...], wa_ref[...],
                        preferred_element_type=jnp.float32)

        for i in range(n_img):
            # conv1: one bf16 MXU matmul for all 3 models (lane-packed weights)
            y1 = jnp.dot(patches_ref[i], w1_ref[i],
                         preferred_element_type=jnp.float32)
            y1_scr[...] = jnp.maximum(y1 + b1_ref[i], 0.0)         # (P1*B, 128)

            # Build L[(oh, iw, b), (kh, ci)] with Ho2*k2 contiguous block copies
            # (y1 is position-major, so each (oh, kh) needs one 14-row slice).
            for oh in range(Ho2):
                for kh in range(_K2):
                    src = (_S2 * oh + kh) * Wo1 * B
                    l_scr[oh * Wo1 * B:(oh + 1) * Wo1 * B,
                          kh * _C1PAD:(kh + 1) * _C1PAD] = \
                        y1_scr[src:src + Wo1 * B, :]

            # conv2: ONE bf16 matmul; output columns are (kw, cout) blocks.
            partial = jnp.dot(l_scr[...].astype(jnp.bfloat16), w2r_ref[i],
                              preferred_element_type=jnp.float32)  # (Ho2*Wo1*B, 512)

            # Epilogue (VPU only): pick the stride-2 kw taps per output position,
            # add bias, ReLU, accumulate the spatial mean.
            acc = None
            for oh in range(Ho2):
                for ow in range(Wo2):
                    z = None
                    for kw in range(_K2):
                        r = (oh * Wo1 + _S2 * ow + kw) * B
                        blk = partial[r:r + B, kw * _C2PAD:(kw + 1) * _C2PAD]
                        z = blk if z is None else z + blk
                    z = jnp.maximum(z + b2_ref[i], 0.0)
                    acc = z if acc is None else acc + z
            feat = acc * inv_p2                                    # (B, 128)

            # per-image decoder conv contribution for all 3 models at once
            h = h + jnp.dot(feat, wd_ref[i],
                            preferred_element_type=jnp.float32)

        # per-model LayerNorm(128, no affine) + ReLU on lane-aligned 128-blocks
        blocks = [_ln_relu(h[:, _HB * m:_HB * (m + 1)]) for m in range(_NM)]
        hcat = jnp.concatenate(blocks, axis=-1)                    # (B, 384)

        # all heads in one matmul: columns = [mu | sigma_raw | q1 | q2]
        y = jnp.dot(hcat, wo_ref[...],
                    preferred_element_type=jnp.float32) + bo_ref[...]
        ya = y[:, 0:2 * A]
        lane = jax.lax.broadcasted_iota(jnp.int32, ya.shape, 1)
        out_ref[:, 0:2 * A] = jnp.where(lane < A, ya, _softplus(ya) + 1e-5)
        out_ref[:, 2 * A:3 * A] = jnp.minimum(y[:, 2 * A:3 * A], y[:, 3 * A:4 * A])

    return kernel


# ----------------------------- forward wrapper -----------------------------

def actor_critic_forward(packed, images_nchw, scalar, action):
    """Actor.forward (mu, var) + ActorCritic.evaluate (min(Q1,Q2)) in ONE pallas_call."""
    n = len(images_nchw)
    B = images_nchw[0].shape[0]
    patch_list, Ho1, Wo1 = [], None, None
    for x in images_nchw:
        x_nhwc = jnp.transpose(x, (0, 2, 3, 1))
        p, Ho1, Wo1 = _im2col(x_nhwc, _K1, _S1)                    # (B, P1, K1)
        # position-major rows (pos*B + b) so the in-kernel conv2 gather is a
        # handful of contiguous block copies per image.
        patch_list.append(jnp.transpose(p, (1, 0, 2)).reshape(Ho1 * Wo1 * B, -1))
    # TODO(synk): conv1 im2col stays as XLA glue (tiny at B=2); move in-kernel at
    # larger batch sizes to cut encoder HBM traffic.
    patches = jnp.stack(patch_list).astype(jnp.bfloat16)           # (n, P1*B, K1)
    P1B, K1 = patches.shape[1], patches.shape[2]
    Ho2 = (Ho1 - _K2) // _S2 + 1
    Wo2 = (Wo1 - _K2) // _S2 + 1
    A = packed['wo'].shape[1] // 4

    enc = packed['enc']
    args = (patches, enc['w1'], enc['b1'], enc['w2r'], enc['b2'],
            packed['wd'], packed['ws'], packed['wa'], packed['db'],
            packed['wo'], packed['bo'], scalar, action)

    out = pl.pallas_call(
        _make_fused_kernel(n, B, Wo1, Ho2, Wo2, A),
        out_shape=jax.ShapeDtypeStruct((B, 3 * A), jnp.float32),
        grid=(1,),
        in_specs=[_full_spec(a.shape) for a in args],
        out_specs=_full_spec((B, 3 * A)),
        scratch_shapes=[pltpu.VMEM((P1B, _C1PAD), jnp.float32),
                        pltpu.VMEM((Ho2 * Wo1 * B, _K2 * _C1PAD), jnp.float32)],
    )(*args)
    return out[:, :A], out[:, A:2 * A], out[:, 2 * A:3 * A]


# TODO(synk): ActorCritic.forward raises NotImplementedError; sample_n()/act() draw from
# a Normal distribution (stochastic) and update_target() is a training-time parameter
# EMA — none are part of the deterministic compute hot path implemented here.


# ----------------------------- parameter init & packing -----------------------------

def _uniform(key, shape, fan_in):
    bound = 1.0 / math.sqrt(fan_in)
    return jax.random.uniform(key, shape, jnp.float32, -bound, bound)


def init_conv_encoder(key, c_in):
    k = jax.random.split(key, 4)
    return {
        'w1': _uniform(k[0], (8, 8, c_in, 16), c_in * 8 * 8),
        'b1': _uniform(k[1], (16,), c_in * 8 * 8),
        'w2': _uniform(k[2], (4, 4, 16, 32), 16 * 4 * 4),
        'b2': _uniform(k[3], (32,), 16 * 4 * 4),
    }


def init_linear(key, n_in, n_out):
    k = jax.random.split(key, 2)
    return _uniform(k[0], (n_in, n_out), n_in), _uniform(k[1], (n_out,), n_in)


def init_actor(key, image_dim, n_image_inputs, n_actions):
    c_in = image_dim[0]
    keys = jax.random.split(key, n_image_inputs + 4)
    encoders = [init_conv_encoder(keys[i], c_in) for i in range(n_image_inputs)]
    lin_w, lin_b = init_linear(keys[n_image_inputs], 1, 64)
    # TODO(synk): Actor.feature_size() calls torch.stack on tensors of width 32 and 64
    # (would raise in PyTorch); we use the intended concatenated feature width.
    fc_in = 32 * n_image_inputs + 64
    dec_w, dec_b = init_linear(keys[n_image_inputs + 1], fc_in, 128)
    mu_w, mu_b = init_linear(keys[n_image_inputs + 2], 128, n_actions)
    sg_w, sg_b = init_linear(keys[n_image_inputs + 3], 128, n_actions)
    return {'encoders': encoders, 'lin_w': lin_w, 'lin_b': lin_b,
            'dec_w': dec_w, 'dec_b': dec_b,
            'mu_w': mu_w, 'mu_b': mu_b, 'sg_w': sg_w, 'sg_b': sg_b}


def init_critic(key, image_dim, n_image_inputs, n_actions):
    c_in = image_dim[0]
    keys = jax.random.split(key, n_image_inputs + 4)
    encoders = [init_conv_encoder(keys[i], c_in) for i in range(n_image_inputs)]
    lin_w, lin_b = init_linear(keys[n_image_inputs], 1, 64)
    act_w, act_b = init_linear(keys[n_image_inputs + 1], n_actions, 64)
    fc_in = 32 * n_image_inputs + 64 + 64
    dec_w, dec_b = init_linear(keys[n_image_inputs + 2], fc_in, 128)
    out_w, out_b = init_linear(keys[n_image_inputs + 3], 128, n_actions)
    return {'encoders': encoders, 'lin_w': lin_w, 'lin_b': lin_b,
            'act_w': act_w, 'act_b': act_b,
            'dec_w': dec_w, 'dec_b': dec_b, 'out_w': out_w, 'out_b': out_b}


def pack_params(ac_params, image_dim, n_image_inputs, n_actions):
    """One-time packing: lane-pack the 3 models' conv weights (block-diag, zero-padded
    to 128 lanes), reshape conv2 to (k2*c1pad, k2*c2pad) for the single-matmul conv2,
    fold the scalar/action linear encoders into the decoder, and lane-pack the heads."""
    c_in = image_dim[0]
    K1 = _K1 * _K1 * c_in
    A = n_actions
    models = (ac_params['actor'], ac_params['critic1'], ac_params['critic2'])
    pa, pc1, pc2 = models

    # ---- packed + padded conv weights ----
    w1_l, b1_l, w2_l, b2_l = [], [], [], []
    for i in range(n_image_inputs):
        w1 = jnp.zeros((K1, _C1PAD), jnp.float32)
        b1 = jnp.zeros((1, _C1PAD), jnp.float32)
        w2r = jnp.zeros((_K2 * _C1PAD, _K2 * _C2PAD), jnp.float32)
        b2 = jnp.zeros((1, _C2PAD), jnp.float32)
        for m, mod in enumerate(models):
            e = mod['encoders'][i]
            w1 = w1.at[:, _C1 * m:_C1 * (m + 1)].set(e['w1'].reshape(K1, _C1))
            b1 = b1.at[0, _C1 * m:_C1 * (m + 1)].set(e['b1'])
            b2 = b2.at[0, _C2 * m:_C2 * (m + 1)].set(e['b2'])
            for kh in range(_K2):
                for kw in range(_K2):
                    w2r = w2r.at[kh * _C1PAD + _C1 * m:kh * _C1PAD + _C1 * (m + 1),
                                 kw * _C2PAD + _C2 * m:kw * _C2PAD + _C2 * (m + 1)
                                 ].set(e['w2'][kh, kw])
        w1_l.append(w1); b1_l.append(b1); w2_l.append(w2r); b2_l.append(b2)
    enc = {'w1': jnp.stack(w1_l).astype(jnp.bfloat16),
           'b1': jnp.stack(b1_l),
           'w2r': jnp.stack(w2_l).astype(jnp.bfloat16),
           'b2': jnp.stack(b2_l)}

    # ---- heads: per-image decoder conv blocks + folded scalar/action paths ----
    nconv = _C2 * n_image_inputs
    wd = jnp.zeros((n_image_inputs, _C2PAD, _NM * _HB), jnp.float32)
    for i in range(n_image_inputs):
        for m, mod in enumerate(models):
            wd = wd.at[i, _C2 * m:_C2 * (m + 1), _HB * m:_HB * (m + 1)].set(
                mod['dec_w'][_C2 * i:_C2 * (i + 1), :])

    def _scl_w(mod):   # Linear(1,64) ∘ decoder scalar block
        return mod['lin_w'] @ mod['dec_w'][nconv:nconv + 64, :]

    def _scl_b(mod):
        return mod['lin_b'] @ mod['dec_w'][nconv:nconv + 64, :]

    def _act_w(mod):   # Linear(A,64) ∘ decoder action block (critics only)
        return mod['act_w'] @ mod['dec_w'][nconv + 64:nconv + 128, :]

    def _act_b(mod):
        return mod['act_b'] @ mod['dec_w'][nconv + 64:nconv + 128, :]

    ws = jnp.concatenate([_scl_w(pa), _scl_w(pc1), _scl_w(pc2)], axis=1)      # (1, 384)
    wa = jnp.concatenate([jnp.zeros((A, _HB), jnp.float32),
                          _act_w(pc1), _act_w(pc2)], axis=1)                  # (A, 384)
    db = jnp.concatenate([pa['dec_b'] + _scl_b(pa),
                          pc1['dec_b'] + _scl_b(pc1) + _act_b(pc1),
                          pc2['dec_b'] + _scl_b(pc2) + _act_b(pc2)],
                         axis=0).reshape(1, _NM * _HB)

    wo = jnp.zeros((_NM * _HB, 4 * A), jnp.float32)
    wo = wo.at[0:_HB, 0:A].set(pa['mu_w'])
    wo = wo.at[0:_HB, A:2 * A].set(pa['sg_w'])
    wo = wo.at[_HB:2 * _HB, 2 * A:3 * A].set(pc1['out_w'])
    wo = wo.at[2 * _HB:3 * _HB, 3 * A:4 * A].set(pc2['out_w'])
    bo = jnp.concatenate([pa['mu_b'], pa['sg_b'],
                          pc1['out_b'], pc2['out_b']]).reshape(1, 4 * A)

    return {'enc': enc, 'wd': wd, 'ws': ws, 'wa': wa, 'db': db, 'wo': wo, 'bo': bo}


# ----------------------------- pure-JAX reference (unpacked, per model) -----------------------------

_HI = jax.lax.Precision.HIGHEST


def _ref_encoder(x_nchw, e):
    x = jnp.transpose(x_nchw, (0, 2, 3, 1))
    B = x.shape[0]
    p1, Ho, Wo = _im2col(x, 8, 4)
    y1 = jnp.maximum(jnp.einsum('bpk,kn->bpn', p1, e['w1'].reshape(-1, 16),
                                precision=_HI) + e['b1'], 0.0)
    y1 = y1.reshape(B, Ho, Wo, 16)
    p2, _, _ = _im2col(y1, 4, 2)
    y2 = jnp.maximum(jnp.einsum('bpk,kn->bpn', p2, e['w2'].reshape(-1, 32),
                                precision=_HI) + e['b2'], 0.0)
    return jnp.mean(y2, axis=1)


def _ref_ln_relu(h):
    m = jnp.mean(h, axis=-1, keepdims=True)
    v = jnp.mean((h - m) ** 2, axis=-1, keepdims=True)
    return jnp.maximum((h - m) * jax.lax.rsqrt(v + 1e-5), 0.0)


def _ref_actor(p, images, scalar):
    feats = [_ref_encoder(x, e) for x, e in zip(images, p['encoders'])]
    feats.append(jnp.dot(scalar, p['lin_w'], precision=_HI) + p['lin_b'])
    f = jnp.concatenate(feats, axis=-1)
    h = _ref_ln_relu(jnp.dot(f, p['dec_w'], precision=_HI) + p['dec_b'])
    mu = jnp.dot(h, p['mu_w'], precision=_HI) + p['mu_b']
    s = jnp.dot(h, p['sg_w'], precision=_HI) + p['sg_b']
    var = jnp.where(s > 20.0, s, jnp.log1p(jnp.exp(jnp.minimum(s, 20.0)))) + 1e-5
    return mu, var


def _ref_critic(p, images, scalar, action):
    feats = [_ref_encoder(x, e) for x, e in zip(images, p['encoders'])]
    feats.append(jnp.dot(scalar, p['lin_w'], precision=_HI) + p['lin_b'])
    feats.append(jnp.dot(action, p['act_w'], precision=_HI) + p['act_b'])
    f = jnp.concatenate(feats, axis=-1)
    h = _ref_ln_relu(jnp.dot(f, p['dec_w'], precision=_HI) + p['dec_b'])
    return jnp.dot(h, p['out_w'], precision=_HI) + p['out_b']


# ----------------------------- main -----------------------------

if __name__ == "__main__":
    key = jax.random.PRNGKey(0)
    image_dim = (4, 32, 32)      # (C, H, W) — spatial 32 so conv(8,4)->conv(4,2) is valid
    n_image_inputs = 2
    n_actions = 4
    B = 2

    k_params, k_x = jax.random.split(key)
    kp = jax.random.split(k_params, 3)
    ac_params = {
        'actor': init_actor(kp[0], image_dim, n_image_inputs, n_actions),
        'critic1': init_critic(kp[1], image_dim, n_image_inputs, n_actions),
        'critic2': init_critic(kp[2], image_dim, n_image_inputs, n_actions),
    }
    packed = pack_params(ac_params, image_dim, n_image_inputs, n_actions)

    kx = jax.random.split(k_x, n_image_inputs + 2)
    images = [jax.random.normal(kx[i], (B,) + image_dim, jnp.float32)
              for i in range(n_image_inputs)]
    scalar = jax.random.normal(kx[n_image_inputs], (B, 1), jnp.float32)
    action = jax.random.normal(kx[n_image_inputs + 1], (B, n_actions), jnp.float32)

    fwd = jax.jit(actor_critic_forward)
    mu, var, q_min = fwd(packed, images, scalar, action)
    jax.block_until_ready((mu, var, q_min))

    # correctness vs pure-JAX HIGHEST-precision reference of the unpacked forward
    # (tolerance 2e-2: conv matmuls use bf16 operands with f32 accumulation)
    mu_r, var_r = _ref_actor(ac_params['actor'], images, scalar)
    q_r = jnp.minimum(_ref_critic(ac_params['critic1'], images, scalar, action),
                      _ref_critic(ac_params['critic2'], images, scalar, action))
    np.testing.assert_allclose(np.asarray(mu), np.asarray(mu_r), rtol=2e-2, atol=2e-2)
    np.testing.assert_allclose(np.asarray(var), np.asarray(var_r), rtol=2e-2, atol=2e-2)
    np.testing.assert_allclose(np.asarray(q_min), np.asarray(q_r), rtol=2e-2, atol=2e-2)

    assert mu.shape == (B, n_actions) and var.shape == (B, n_actions)
    assert q_min.shape == (B, n_actions)
    assert bool(jnp.all(var > 0.0))
    print("KERNEL_OK")
</pallas_src>

<mosaic_0001>
module attributes {stable_mosaic.version = 11 : i64} {
  func.func @kernel(%arg0: i32, %arg1: memref<2x98x256xbf16, #tpu.memory_space<vmem>>, %arg2: memref<2x256x128xbf16, #tpu.memory_space<vmem>>, %arg3: memref<2x1x128xf32, #tpu.memory_space<vmem>>, %arg4: memref<2x512x512xbf16, #tpu.memory_space<vmem>>, %arg5: memref<2x1x128xf32, #tpu.memory_space<vmem>>, %arg6: memref<2x128x384xf32, #tpu.memory_space<vmem>>, %arg7: memref<1x384xf32, #tpu.memory_space<vmem>>, %arg8: memref<4x384xf32, #tpu.memory_space<vmem>>, %arg9: memref<1x384xf32, #tpu.memory_space<vmem>>, %arg10: memref<384x16xf32, #tpu.memory_space<vmem>>, %arg11: memref<1x16xf32, #tpu.memory_space<vmem>>, %arg12: memref<2x1xf32, #tpu.memory_space<vmem>>, %arg13: memref<2x4xf32, #tpu.memory_space<vmem>>, %arg14: memref<2x12xf32, #tpu.memory_space<vmem>>, %arg15: memref<98x128xf32, #tpu.memory_space<vmem>>, %arg16: memref<28x512xf32, #tpu.memory_space<vmem>>) attributes {dimension_semantics = [#tpu.dimension_semantics<arbitrary>], iteration_bounds = array<i64: 1>, scalar_prefetch = 0 : i64, scratch_operands = 2 : i64, tpu.core_type = #tpu.core_type<tc>, window_params = [{pipeline_mode = #tpu.pipeline_mode<synchronous>, transform_indices = @transform_0, window_bounds = array<i64: 2, 98, 256>}, {pipeline_mode = #tpu.pipeline_mode<synchronous>, transform_indices = @transform_1, window_bounds = array<i64: 2, 256, 128>}, {pipeline_mode = #tpu.pipeline_mode<synchronous>, transform_indices = @transform_2, window_bounds = array<i64: 2, 1, 128>}, {pipeline_mode = #tpu.pipeline_mode<synchronous>, transform_indices = @transform_3, window_bounds = array<i64: 2, 512, 512>}, {pipeline_mode = #tpu.pipeline_mode<synchronous>, transform_indices = @transform_4, window_bounds = array<i64: 2, 1, 128>}, {pipeline_mode = #tpu.pipeline_mode<synchronous>, transform_indices = @transform_5, window_bounds = array<i64: 2, 128, 384>}, {pipeline_mode = #tpu.pipeline_mode<synchronous>, transform_indices = @transform_6, window_bounds = array<i64: 1, 384>}, {pipeline_mode = #tpu.pipeline_mode<synchronous>, transform_indices = @transform_7, window_bounds = array<i64: 4, 384>}, {pipeline_mode = #tpu.pipeline_mode<synchronous>, transform_indices = @transform_8, window_bounds = array<i64: 1, 384>}, {pipeline_mode = #tpu.pipeline_mode<synchronous>, transform_indices = @transform_9, window_bounds = array<i64: 384, 16>}, {pipeline_mode = #tpu.pipeline_mode<synchronous>, transform_indices = @transform_10, window_bounds = array<i64: 1, 16>}, {pipeline_mode = #tpu.pipeline_mode<synchronous>, transform_indices = @transform_11, window_bounds = array<i64: 2, 1>}, {pipeline_mode = #tpu.pipeline_mode<synchronous>, transform_indices = @transform_12, window_bounds = array<i64: 2, 4>}, {pipeline_mode = #tpu.pipeline_mode<synchronous>, transform_indices = @transform_13, window_bounds = array<i64: 2, 12>}]} {
    %c0 = arith.constant 0 : index
    %c0_0 = arith.constant 0 : index
    %0 = vector.load %arg9[%c0, %c0_0] : memref<1x384xf32, #tpu.memory_space<vmem>>, vector<1x384xf32>
    %c0_1 = arith.constant 0 : index
    %c0_2 = arith.constant 0 : index
    %1 = vector.load %arg12[%c0_1, %c0_2] : memref<2x1xf32, #tpu.memory_space<vmem>>, vector<2x1xf32>
    %c0_3 = arith.constant 0 : index
    %c0_4 = arith.constant 0 : index
    %2 = vector.load %arg7[%c0_3, %c0_4] : memref<1x384xf32, #tpu.memory_space<vmem>>, vector<1x384xf32>
    %3 = vector.broadcast %1 : vector<2x1xf32> to vector<2x384xf32>
    %4 = vector.broadcast %2 : vector<1x384xf32> to vector<2x384xf32>
    %5 = arith.mulf %3, %4 : vector<2x384xf32>
    %6 = vector.broadcast %0 : vector<1x384xf32> to vector<2x384xf32>
    %7 = arith.addf %6, %5 : vector<2x384xf32>
    %c0_5 = arith.constant 0 : index
    %c0_6 = arith.constant 0 : index
    %8 = vector.load %arg13[%c0_5, %c0_6] : memref<2x4xf32, #tpu.memory_space<vmem>>, vector<2x4xf32>
    %c0_7 = arith.constant 0 : index
    %c0_8 = arith.constant 0 : index
    %9 = vector.load %arg8[%c0_7, %c0_8] : memref<4x384xf32, #tpu.memory_space<vmem>>, vector<4x384xf32>
    %cst = arith.constant dense<0.000000e+00> : vector<2x384xf32>
    %10 = tpu.matmul %8, %9, %cst {dimension_numbers = #tpu.dot_dimension_numbers<[1], [0], [0], [1], [0, 0, 1, 1], [], []>} : vector<2x4xf32>, vector<4x384xf32>, vector<2x384xf32> -> vector<2x384xf32>
    %11 = arith.addf %7, %10 : vector<2x384xf32>
    %c0_9 = arith.constant 0 : index
    %c0_10 = arith.constant 0 : index
    %c0_11 = arith.constant 0 : index
    %12 = vector.load %arg1[%c0_9, %c0_10, %c0_11] : memref<2x98x256xbf16, #tpu.memory_space<vmem>>, vector<1x98x256xbf16>
    %13 = vector.shape_cast %12 : vector<1x98x256xbf16> to vector<98x256xbf16>
    %c0_12 = arith.constant 0 : index
    %c0_13 = arith.constant 0 : index
    %c0_14 = arith.constant 0 : index
    %14 = vector.load %arg2[%c0_12, %c0_13, %c0_14] : memref<2x256x128xbf16, #tpu.memory_space<vmem>>, vector<1x256x128xbf16>
    %15 = vector.shape_cast %14 : vector<1x256x128xbf16> to vector<256x128xbf16>
    %cst_15 = arith.constant dense<0.000000e+00> : vector<98x128xf32>
    %16 = tpu.matmul %13, %15, %cst_15 {dimension_numbers = #tpu.dot_dimension_numbers<[1], [0], [0], [1], [0, 0, 1, 1], [], []>} : vector<98x256xbf16>, vector<256x128xbf16>, vector<98x128xf32> -> vector<98x128xf32>
    %c0_16 = arith.constant 0 : index
    %c0_17 = arith.constant 0 : index
    %c0_18 = arith.constant 0 : index
    %17 = vector.load %arg3[%c0_16, %c0_17, %c0_18] : memref<2x1x128xf32, #tpu.memory_space<vmem>>, vector<1x1x128xf32>
    %18 = vector.shape_cast %17 : vector<1x1x128xf32> to vector<1x128xf32>
    %19 = vector.broadcast %18 : vector<1x128xf32> to vector<98x128xf32>
    %20 = arith.addf %16, %19 : vector<98x128xf32>
    %cst_19 = arith.constant 0.000000e+00 : f32
    %21 = vector.broadcast %cst_19 : f32 to vector<98x128xf32>
    %22 = arith.maximumf %20, %21 : vector<98x128xf32>
    %c0_20 = arith.constant 0 : index
    %c0_21 = arith.constant 0 : index
    %23 = vector.load %arg15[%c0_20, %c0_21] : memref<98x128xf32, #tpu.memory_space<vmem>>, vector<98x128xf32>
    tpu.vector_store %arg15[%c0_20, %c0_21], %22 {strides = array<i32>} : memref<98x128xf32, #tpu.memory_space<vmem>>, vector<98x128xf32>,
    %c0_22 = arith.constant 0 : index
    %c0_23 = arith.constant 0 : index
    %24 = vector.load %arg15[%c0_22, %c0_23] : memref<98x128xf32, #tpu.memory_space<vmem>>, vector<14x128xf32>
    %c0_24 = arith.constant 0 : index
    %c0_25 = arith.constant 0 : index
    %25 = vector.load %arg16[%c0_24, %c0_25] : memref<28x512xf32, #tpu.memory_space<vmem>>, vector<14x128xf32>
    tpu.vector_store %arg16[%c0_24, %c0_25], %24 {strides = array<i32>} : memref<28x512xf32, #tpu.memory_space<vmem>>, vector<14x128xf32>,
    %c14 = arith.constant 14 : index
    %c0_26 = arith.constant 0 : index
    %26 = vector.load %arg15[%c14, %c0_26] : memref<98x128xf32, #tpu.memory_space<vmem>>, vector<14x128xf32>
    %c0_27 = arith.constant 0 : index
    %c128 = arith.constant 128 : index
    %27 = vector.load %arg16[%c0_27, %c128] : memref<28x512xf32, #tpu.memory_space<vmem>>, vector<14x128xf32>
    tpu.vector_store %arg16[%c0_27, %c128], %26 {strides = array<i32>} : memref<28x512xf32, #tpu.memory_space<vmem>>, vector<14x128xf32>,
    %c28 = arith.constant 28 : index
    %c0_28 = arith.constant 0 : index
    %28 = vector.load %arg15[%c28, %c0_28] : memref<98x128xf32, #tpu.memory_space<vmem>>, vector<14x128xf32>
    %c0_29 = arith.constant 0 : index
    %c256 = arith.constant 256 : index
    %29 = vector.load %arg16[%c0_29, %c256] : memref<28x512xf32, #tpu.memory_space<vmem>>, vector<14x128xf32>
    tpu.vector_store %arg16[%c0_29, %c256], %28 {strides = array<i32>} : memref<28x512xf32, #tpu.memory_space<vmem>>, vector<14x128xf32>,
    %c42 = arith.constant 42 : index
    %c0_30 = arith.constant 0 : index
    %30 = vector.load %arg15[%c42, %c0_30] : memref<98x128xf32, #tpu.memory_space<vmem>>, vector<14x128xf32>
    %c0_31 = arith.constant 0 : index
    %c384 = arith.constant 384 : index
    %31 = vector.load %arg16[%c0_31, %c384] : memref<28x512xf32, #tpu.memory_space<vmem>>, vector<14x128xf32>
    tpu.vector_store %arg16[%c0_31, %c384], %30 {strides = array<i32>} : memref<28x512xf32, #tpu.memory_space<vmem>>, vector<14x128xf32>,
    %c28_32 = arith.constant 28 : index
    %c0_33 = arith.constant 0 : index
    %32 = vector.load %arg15[%c28_32, %c0_33] : memref<98x128xf32, #tpu.memory_space<vmem>>, vector<14x128xf32>
    %c14_34 = arith.constant 14 : index
    %c0_35 = arith.constant 0 : index
    %33 = vector.load %arg16[%c14_34, %c0_35] : memref<28x512xf32, #tpu.memory_space<vmem>>, vector<14x128xf32>
    tpu.vector_store %arg16[%c14_34, %c0_35], %32 {strides = array<i32>} : memref<28x512xf32, #tpu.memory_space<vmem>>, vector<14x128xf32>,
    %c42_36 = arith.constant 42 : index
    %c0_37 = arith.constant 0 : index
    %34 = vector.load %arg15[%c42_36, %c0_37] : memref<98x128xf32, #tpu.memory_space<vmem>>, vector<14x128xf32>
    %c14_38 = arith.constant 14 : index
    %c128_39 = arith.constant 128 : index
    %35 = vector.load %arg16[%c14_38, %c128_39] : memref<28x512xf32, #tpu.memory_space<vmem>>, vector<14x128xf32>
    tpu.vector_store %arg16[%c14_38, %c128_39], %34 {strides = array<i32>} : memref<28x512xf32, #tpu.memory_space<vmem>>, vector<14x128xf32>,
    %c56 = arith.constant 56 : index
    %c0_40 = arith.constant 0 : index
    %36 = vector.load %arg15[%c56, %c0_40] : memref<98x128xf32, #tpu.memory_space<vmem>>, vector<14x128xf32>
    %c14_41 = arith.constant 14 : index
    %c256_42 = arith.constant 256 : index
    %37 = vector.load %arg16[%c14_41, %c256_42] : memref<28x512xf32, #tpu.memory_space<vmem>>, vector<14x128xf32>
    tpu.vector_store %arg16[%c14_41, %c256_42], %36 {strides = array<i32>} : memref<28x512xf32, #tpu.memory_space<vmem>>, vector<14x128xf32>,
    %c70 = arith.constant 70 : index
    %c0_43 = arith.constant 0 : index
    %38 = vector.load %arg15[%c70, %c0_43] : memref<98x128xf32, #tpu.memory_space<vmem>>, vector<14x128xf32>
    %c14_44 = arith.constant 14 : index
    %c384_45 = arith.constant 384 : index
    %39 = vector.load %arg16[%c14_44, %c384_45] : memref<28x512xf32, #tpu.memory_space<vmem>>, vector<14x128xf32>
    tpu.vector_store %arg16[%c14_44, %c384_45], %38 {strides = array<i32>} : memref<28x512xf32, #tpu.memory_space<vmem>>, vector<14x128xf32>,
    %c0_46 = arith.constant 0 : index
    %c0_47 = arith.constant 0 : index
    %40 = vector.load %arg16[%c0_46, %c0_47] : memref<28x512xf32, #tpu.memory_space<vmem>>, vector<28x512xf32>
    %41 = arith.truncf %40 : vector<28x512xf32> to vector<28x512xbf16>
    %c0_48 = arith.constant 0 : index
    %c0_49 = arith.constant 0 : index
    %c0_50 = arith.constant 0 : index
    %42 = vector.load %arg4[%c0_48, %c0_49, %c0_50] : memref<2x512x512xbf16, #tpu.memory_space<vmem>>, vector<1x512x512xbf16>
    %43 = vector.shape_cast %42 : vector<1x512x512xbf16> to vector<512x512xbf16>
    %cst_51 = arith.constant dense<0.000000e+00> : vector<28x512xf32>
    %44 = tpu.matmul %41, %43, %cst_51 {dimension_numbers = #tpu.dot_dimension_numbers<[1], [0], [0], [1], [0, 0, 1, 1], [], []>} : vector<28x512xbf16>, vector<512x512xbf16>, vector<28x512xf32> -> vector<28x512xf32>
    %45 = vector.extract_strided_slice %44 {offsets = [0, 0], sizes = [2, 128], strides = [1, 1]} : vector<28x512xf32> to vector<2x128xf32>
    %46 = vector.extract_strided_slice %44 {offsets = [2, 128], sizes = [2, 128], strides = [1, 1]} : vector<28x512xf32> to vector<2x128xf32>
    %47 = arith.addf %45, %46 : vector<2x128xf32>
    %48 = vector.extract_strided_slice %44 {offsets = [4, 256], sizes = [2, 128], strides = [1, 1]} : vector<28x512xf32> to vector<2x128xf32>
    %49 = arith.addf %47, %48 : vector<2x128xf32>
    %50 = vector.extract_strided_slice %44 {offsets = [6, 384], sizes = [2, 128], strides = [1, 1]} : vector<28x512xf32> to vector<2x128xf32>
    %51 = arith.addf %49, %50 : vector<2x128xf32>
    %c0_52 = arith.constant 0 : index
    %c0_53 = arith.constant 0 : index
    %c0_54 = arith.constant 0 : index
    %52 = vector.load %arg5[%c0_52, %c0_53, %c0_54] : memref<2x1x128xf32, #tpu.memory_space<vmem>>, vector<1x1x128xf32>
    %53 = vector.shape_cast %52 : vector<1x1x128xf32> to vector<1x128xf32>
    %54 = vector.broadcast %53 : vector<1x128xf32> to vector<2x128xf32>
    %55 = arith.addf %51, %54 : vector<2x128xf32>
    %cst_55 = arith.constant 0.000000e+00 : f32
    %56 = vector.broadcast %cst_55 : f32 to vector<2x128xf32>
    %57 = arith.maximumf %55, %56 : vector<2x128xf32>
    %58 = vector.extract_strided_slice %44 {offsets = [4, 0], sizes = [2, 128], strides = [1, 1]} : vector<28x512xf32> to vector<2x128xf32>
    %59 = vector.extract_strided_slice %44 {offsets = [6, 128], sizes = [2, 128], strides = [1, 1]} : vector<28x512xf32> to vector<2x128xf32>
    %60 = arith.addf %58, %59 : vector<2x128xf32>
    %61 = vector.extract_strided_slice %44 {offsets = [8, 256], sizes = [2, 128], strides = [1, 1]} : vector<28x512xf32> to vector<2x128xf32>
    %62 = arith.addf %60, %61 : vector<2x128xf32>
    %63 = vector.extract_strided_slice %44 {offsets = [10, 384], sizes = [2, 128], strides = [1, 1]} : vector<28x512xf32> to vector<2x128xf32>
    %64 = arith.addf %62, %63 : vector<2x128xf32>
    %c0_56 = arith.constant 0 : index
    %c0_57 = arith.constant 0 : index
    %c0_58 = arith.constant 0 : index
    %65 = vector.load %arg5[%c0_56, %c0_57, %c0_58] : memref<2x1x128xf32, #tpu.memory_space<vmem>>, vector<1x1x128xf32>
    %66 = vector.shape_cast %65 : vector<1x1x128xf32> to vector<1x128xf32>
    %67 = vector.broadcast %66 : vector<1x128xf32> to vector<2x128xf32>
    %68 = arith.addf %64, %67 : vector<2x128xf32>
    %cst_59 = arith.constant 0.000000e+00 : f32
    %69 = vector.broadcast %cst_59 : f32 to vector<2x128xf32>
    %70 = arith.maximumf %68, %69 : vector<2x128xf32>
    %71 = arith.addf %57, %70 : vector<2x128xf32>
    %72 = vector.extract_strided_slice %44 {offsets = [14, 0], sizes = [2, 128], strides = [1, 1]} : vector<28x512xf32> to vector<2x128xf32>
    %73 = vector.extract_strided_slice %44 {offsets = [16, 128], sizes = [2, 128], strides = [1, 1]} : vector<28x512xf32> to vector<2x128xf32>
    %74 = arith.addf %72, %73 : vector<2x128xf32>
    %75 = vector.extract_strided_slice %44 {offsets = [18, 256], sizes = [2, 128], strides = [1, 1]} : vector<28x512xf32> to vector<2x128xf32>
    %76 = arith.addf %74, %75 : vector<2x128xf32>
    %77 = vector.extract_strided_slice %44 {offsets = [20, 384], sizes = [2, 128], strides = [1, 1]} : vector<28x512xf32> to vector<2x128xf32>
    %78 = arith.addf %76, %77 : vector<2x128xf32>
    %c0_60 = arith.constant 0 : index
    %c0_61 = arith.constant 0 : index
    %c0_62 = arith.constant 0 : index
    %79 = vector.load %arg5[%c0_60, %c0_61, %c0_62] : memref<2x1x128xf32, #tpu.memory_space<vmem>>, vector<1x1x128xf32>
    %80 = vector.shape_cast %79 : vector<1x1x128xf32> to vector<1x128xf32>
    %81 = vector.broadcast %80 : vector<1x128xf32> to vector<2x128xf32>
    %82 = arith.addf %78, %81 : vector<2x128xf32>
    %cst_63 = arith.constant 0.000000e+00 : f32
    %83 = vector.broadcast %cst_63 : f32 to vector<2x128xf32>
    %84 = arith.maximumf %82, %83 : vector<2x128xf32>
    %85 = arith.addf %71, %84 : vector<2x128xf32>
    %86 = vector.extract_strided_slice %44 {offsets = [18, 0], sizes = [2, 128], strides = [1, 1]} : vector<28x512xf32> to vector<2x128xf32>
    %87 = vector.extract_strided_slice %44 {offsets = [20, 128], sizes = [2, 128], strides = [1, 1]} : vector<28x512xf32> to vector<2x128xf32>
    %88 = arith.addf %86, %87 : vector<2x128xf32>
    %89 = vector.extract_strided_slice %44 {offsets = [22, 256], sizes = [2, 128], strides = [1, 1]} : vector<28x512xf32> to vector<2x128xf32>
    %90 = arith.addf %88, %89 : vector<2x128xf32>
    %91 = vector.extract_strided_slice %44 {offsets = [24, 384], sizes = [2, 128], strides = [1, 1]} : vector<28x512xf32> to vector<2x128xf32>
    %92 = arith.addf %90, %91 : vector<2x128xf32>
    %c0_64 = arith.constant 0 : index
    %c0_65 = arith.constant 0 : index
    %c0_66 = arith.constant 0 : index
    %93 = vector.load %arg5[%c0_64, %c0_65, %c0_66] : memref<2x1x128xf32, #tpu.memory_space<vmem>>, vector<1x1x128xf32>
    %94 = vector.shape_cast %93 : vector<1x1x128xf32> to vector<1x128xf32>
    %95 = vector.broadcast %94 : vector<1x128xf32> to vector<2x128xf32>
    %96 = arith.addf %92, %95 : vector<2x128xf32>
    %cst_67 = arith.constant 0.000000e+00 : f32
    %97 = vector.broadcast %cst_67 : f32 to vector<2x128xf32>
    %98 = arith.maximumf %96, %97 : vector<2x128xf32>
    %99 = arith.addf %85, %98 : vector<2x128xf32>
    %cst_68 = arith.constant 2.500000e-01 : f32
    %100 = vector.broadcast %cst_68 : f32 to vector<2x128xf32>
    %101 = arith.mulf %99, %100 : vector<2x128xf32>
    %c0_69 = arith.constant 0 : index
    %c0_70 = arith.constant 0 : index
    %c0_71 = arith.constant 0 : index
    %102 = vector.load %arg6[%c0_69, %c0_70, %c0_71] : memref<2x128x384xf32, #tpu.memory_space<vmem>>, vector<1x128x384xf32>
    %103 = vector.shape_cast %102 : vector<1x128x384xf32> to vector<128x384xf32>
    %cst_72 = arith.constant dense<0.000000e+00> : vector<2x384xf32>
    %104 = tpu.matmul %101, %103, %cst_72 {dimension_numbers = #tpu.dot_dimension_numbers<[1], [0], [0], [1], [0, 0, 1, 1], [], []>} : vector<2x128xf32>, vector<128x384xf32>, vector<2x384xf32> -> vector<2x384xf32>
    %105 = arith.addf %11, %104 : vector<2x384xf32>
    %c1 = arith.constant 1 : index
    %c0_73 = arith.constant 0 : index
    %c0_74 = arith.constant 0 : index
    %106 = vector.load %arg1[%c1, %c0_73, %c0_74] : memref<2x98x256xbf16, #tpu.memory_space<vmem>>, vector<1x98x256xbf16>
    %107 = vector.shape_cast %106 : vector<1x98x256xbf16> to vector<98x256xbf16>
    %c1_75 = arith.constant 1 : index
    %c0_76 = arith.constant 0 : index
    %c0_77 = arith.constant 0 : index
    %108 = vector.load %arg2[%c1_75, %c0_76, %c0_77] : memref<2x256x128xbf16, #tpu.memory_space<vmem>>, vector<1x256x128xbf16>
    %109 = vector.shape_cast %108 : vector<1x256x128xbf16> to vector<256x128xbf16>
    %cst_78 = arith.constant dense<0.000000e+00> : vector<98x128xf32>
    %110 = tpu.matmul %107, %109, %cst_78 {dimension_numbers = #tpu.dot_dimension_numbers<[1], [0], [0], [1], [0, 0, 1, 1], [], []>} : vector<98x256xbf16>, vector<256x128xbf16>, vector<98x128xf32> -> vector<98x128xf32>
    %c1_79 = arith.constant 1 : index
    %c0_80 = arith.constant 0 : index
    %c0_81 = arith.constant 0 : index
    %111 = vector.load %arg3[%c1_79, %c0_80, %c0_81] : memref<2x1x128xf32, #tpu.memory_space<vmem>>, vector<1x1x128xf32>
    %112 = vector.shape_cast %111 : vector<1x1x128xf32> to vector<1x128xf32>
    %113 = vector.broadcast %112 : vector<1x128xf32> to vector<98x128xf32>
    %114 = arith.addf %110, %113 : vector<98x128xf32>
    %cst_82 = arith.constant 0.000000e+00 : f32
    %115 = vector.broadcast %cst_82 : f32 to vector<98x128xf32>
    %116 = arith.maximumf %114, %115 : vector<98x128xf32>
    %c0_83 = arith.constant 0 : index
    %c0_84 = arith.constant 0 : index
    %117 = vector.load %arg15[%c0_83, %c0_84] : memref<98x128xf32, #tpu.memory_space<vmem>>, vector<98x128xf32>
    tpu.vector_store %arg15[%c0_83, %c0_84], %116 {strides = array<i32>} : memref<98x128xf32, #tpu.memory_space<vmem>>, vector<98x128xf32>,
    %c0_85 = arith.constant 0 : index
    %c0_86 = arith.constant 0 : index
    %118 = vector.load %arg15[%c0_85, %c0_86] : memref<98x128xf32, #tpu.memory_space<vmem>>, vector<14x128xf32>
    %c0_87 = arith.constant 0 : index
    %c0_88 = arith.constant 0 : index
    %119 = vector.load %arg16[%c0_87, %c0_88] : memref<28x512xf32, #tpu.memory_space<vmem>>, vector<14x128xf32>
    tpu.vector_store %arg16[%c0_87, %c0_88], %118 {strides = array<i32>} : memref<28x512xf32, #tpu.memory_space<vmem>>, vector<14x128xf32>,
    %c14_89 = arith.constant 14 : index
    %c0_90 = arith.constant 0 : index
    %120 = vector.load %arg15[%c14_89, %c0_90] : memref<98x128xf32, #tpu.memory_space<vmem>>, vector<14x128xf32>
    %c0_91 = arith.constant 0 : index
    %c128_92 = arith.constant 128 : index
    %121 = vector.load %arg16[%c0_91, %c128_92] : memref<28x512xf32, #tpu.memory_space<vmem>>, vector<14x128xf32>
    tpu.vector_store %arg16[%c0_91, %c128_92], %120 {strides = array<i32>} : memref<28x512xf32, #tpu.memory_space<vmem>>, vector<14x128xf32>,
    %c28_93 = arith.constant 28 : index
    %c0_94 = arith.constant 0 : index
    %122 = vector.load %arg15[%c28_93, %c0_94] : memref<98x128xf32, #tpu.memory_space<vmem>>, vector<14x128xf32>
    %c0_95 = arith.constant 0 : index
    %c256_96 = arith.constant 256 : index
    %123 = vector.load %arg16[%c0_95, %c256_96] : memref<28x512xf32, #tpu.memory_space<vmem>>, vector<14x128xf32>
    tpu.vector_store %arg16[%c0_95, %c256_96], %122 {strides = array<i32>} : memref<28x512xf32, #tpu.memory_space<vmem>>, vector<14x128xf32>,
    %c42_97 = arith.constant 42 : index
    %c0_98 = arith.constant 0 : index
    %124 = vector.load %arg15[%c42_97, %c0_98] : memref<98x128xf32, #tpu.memory_space<vmem>>, vector<14x128xf32>
    %c0_99 = arith.constant 0 : index
    %c384_100 = arith.constant 384 : index
    %125 = vector.load %arg16[%c0_99, %c384_100] : memref<28x512xf32, #tpu.memory_space<vmem>>, vector<14x128xf32>
    tpu.vector_store %arg16[%c0_99, %c384_100], %124 {strides = array<i32>} : memref<28x512xf32, #tpu.memory_space<vmem>>, vector<14x128xf32>,
    %c28_101 = arith.constant 28 : index
    %c0_102 = arith.constant 0 : index
    %126 = vector.load %arg15[%c28_101, %c0_102] : memref<98x128xf32, #tpu.memory_space<vmem>>, vector<14x128xf32>
    %c14_103 = arith.constant 14 : index
    %c0_104 = arith.constant 0 : index
    %127 = vector.load %arg16[%c14_103, %c0_104] : memref<28x512xf32, #tpu.memory_space<vmem>>, vector<14x128xf32>
    tpu.vector_store %arg16[%c14_103, %c0_104], %126 {strides = array<i32>} : memref<28x512xf32, #tpu.memory_space<vmem>>, vector<14x128xf32>,
    %c42_105 = arith.constant 42 : index
    %c0_106 = arith.constant 0 : index
    %128 = vector.load %arg15[%c42_105, %c0_106] : memref<98x128xf32, #tpu.memory_space<vmem>>, vector<14x128xf32>
    %c14_107 = arith.constant 14 : index
    %c128_108 = arith.constant 128 : index
    %129 = vector.load %arg16[%c14_107, %c128_108] : memref<28x512xf32, #tpu.memory_space<vmem>>, vector<14x128xf32>
    tpu.vector_store %arg16[%c14_107, %c128_108], %128 {strides = array<i32>} : memref<28x512xf32, #tpu.memory_space<vmem>>, vector<14x128xf32>,
    %c56_109 = arith.constant 56 : index
    %c0_110 = arith.constant 0 : index
    %130 = vector.load %arg15[%c56_109, %c0_110] : memref<98x128xf32, #tpu.memory_space<vmem>>, vector<14x128xf32>
    %c14_111 = arith.constant 14 : index
    %c256_112 = arith.constant 256 : index
    %131 = vector.load %arg16[%c14_111, %c256_112] : memref<28x512xf32, #tpu.memory_space<vmem>>, vector<14x128xf32>
    tpu.vector_store %arg16[%c14_111, %c256_112], %130 {strides = array<i32>} : memref<28x512xf32, #tpu.memory_space<vmem>>, vector<14x128xf32>,
    %c70_113 = arith.constant 70 : index
    %c0_114 = arith.constant 0 : index
    %132 = vector.load %arg15[%c70_113, %c0_114] : memref<98x128xf32, #tpu.memory_space<vmem>>, vector<14x128xf32>
    %c14_115 = arith.constant 14 : index
    %c384_116 = arith.constant 384 : index
    %133 = vector.load %arg16[%c14_115, %c384_116] : memref<28x512xf32, #tpu.memory_space<vmem>>, vector<14x128xf32>
    tpu.vector_store %arg16[%c14_115, %c384_116], %132 {strides = array<i32>} : memref<28x512xf32, #tpu.memory_space<vmem>>, vector<14x128xf32>,
    %c0_117 = arith.constant 0 : index
    %c0_118 = arith.constant 0 : index
    %134 = vector.load %arg16[%c0_117, %c0_118] : memref<28x512xf32, #tpu.memory_space<vmem>>, vector<28x512xf32>
    %135 = arith.truncf %134 : vector<28x512xf32> to vector<28x512xbf16>
    %c1_119 = arith.constant 1 : index
    %c0_120 = arith.constant 0 : index
    %c0_121 = arith.constant 0 : index
    %136 = vector.load %arg4[%c1_119, %c0_120, %c0_121] : memref<2x512x512xbf16, #tpu.memory_space<vmem>>, vector<1x512x512xbf16>
    %137 = vector.shape_cast %136 : vector<1x512x512xbf16> to vector<512x512xbf16>
    %cst_122 = arith.constant dense<0.000000e+00> : vector<28x512xf32>
    %138 = tpu.matmul %135, %137, %cst_122 {dimension_numbers = #tpu.dot_dimension_numbers<[1], [0], [0], [1], [0, 0, 1, 1], [], []>} : vector<28x512xbf16>, vector<512x512xbf16>, vector<28x512xf32> -> vector<28x512xf32>
    %139 = vector.extract_strided_slice %138 {offsets = [0, 0], sizes = [2, 128], strides = [1, 1]} : vector<28x512xf32> to vector<2x128xf32>
    %140 = vector.extract_strided_slice %138 {offsets = [2, 128], sizes = [2, 128], strides = [1, 1]} : vector<28x512xf32> to vector<2x128xf32>
    %141 = arith.addf %139, %140 : vector<2x128xf32>
    %142 = vector.extract_strided_slice %138 {offsets = [4, 256], sizes = [2, 128], strides = [1, 1]} : vector<28x512xf32> to vector<2x128xf32>
    %143 = arith.addf %141, %142 : vector<2x128xf32>
    %144 = vector.extract_strided_slice %138 {offsets = [6, 384], sizes = [2, 128], strides = [1, 1]} : vector<28x512xf32> to vector<2x128xf32>
    %145 = arith.addf %143, %144 : vector<2x128xf32>
    %c1_123 = arith.constant 1 : index
    %c0_124 = arith.constant 0 : index
    %c0_125 = arith.constant 0 : index
    %146 = vector.load %arg5[%c1_123, %c0_124, %c0_125] : memref<2x1x128xf32, #tpu.memory_space<vmem>>, vector<1x1x128xf32>
    %147 = vector.shape_cast %146 : vector<1x1x128xf32> to vector<1x128xf32>
    %148 = vector.broadcast %147 : vector<1x128xf32> to vector<2x128xf32>
    %149 = arith.addf %145, %148 : vector<2x128xf32>
    %cst_126 = arith.constant 0.000000e+00 : f32
    %150 = vector.broadcast %cst_126 : f32 to vector<2x128xf32>
    %151 = arith.maximumf %149, %150 : vector<2x128xf32>
    %152 = vector.extract_strided_slice %138 {offsets = [4, 0], sizes = [2, 128], strides = [1, 1]} : vector<28x512xf32> to vector<2x128xf32>
    %153 = vector.extract_strided_slice %138 {offsets = [6, 128], sizes = [2, 128], strides = [1, 1]} : vector<28x512xf32> to vector<2x128xf32>
    %154 = arith.addf %152, %153 : vector<2x128xf32>
    %155 = vector.extract_strided_slice %138 {offsets = [8, 256], sizes = [2, 128], strides = [1, 1]} : vector<28x512xf32> to vector<2x128xf32>
    %156 = arith.addf %154, %155 : vector<2x128xf32>
    %157 = vector.extract_strided_slice %138 {offsets = [10, 384], sizes = [2, 128], strides = [1, 1]} : vector<28x512xf32> to vector<2x128xf32>
    %158 = arith.addf %156, %157 : vector<2x128xf32>
    %c1_127 = arith.constant 1 : index
    %c0_128 = arith.constant 0 : index
    %c0_129 = arith.constant 0 : index
    %159 = vector.load %arg5[%c1_127, %c0_128, %c0_129] : memref<2x1x128xf32, #tpu.memory_space<vmem>>, vector<1x1x128xf32>
    %160 = vector.shape_cast %159 : vector<1x1x128xf32> to vector<1x128xf32>
    %161 = vector.broadcast %160 : vector<1x128xf32> to vector<2x128xf32>
    %162 = arith.addf %158, %161 : vector<2x128xf32>
    %cst_130 = arith.constant 0.000000e+00 : f32
    %163 = vector.broadcast %cst_130 : f32 to vector<2x128xf32>
    %164 = arith.maximumf %162, %163 : vector<2x128xf32>
    %165 = arith.addf %151, %164 : vector<2x128xf32>
    %166 = vector.extract_strided_slice %138 {offsets = [14, 0], sizes = [2, 128], strides = [1, 1]} : vector<28x512xf32> to vector<2x128xf32>
    %167 = vector.extract_strided_slice %138 {offsets = [16, 128], sizes = [2, 128], strides = [1, 1]} : vector<28x512xf32> to vector<2x128xf32>
    %168 = arith.addf %166, %167 : vector<2x128xf32>
    %169 = vector.extract_strided_slice %138 {offsets = [18, 256], sizes = [2, 128], strides = [1, 1]} : vector<28x512xf32> to vector<2x128xf32>
    %170 = arith.addf %168, %169 : vector<2x128xf32>
    %171 = vector.extract_strided_slice %138 {offsets = [20, 384], sizes = [2, 128], strides = [1, 1]} : vector<28x512xf32> to vector<2x128xf32>
    %172 = arith.addf %170, %171 : vector<2x128xf32>
    %c1_131 = arith.constant 1 : index
    %c0_132 = arith.constant 0 : index
    %c0_133 = arith.constant 0 : index
    %173 = vector.load %arg5[%c1_131, %c0_132, %c0_133] : memref<2x1x128xf32, #tpu.memory_space<vmem>>, vector<1x1x128xf32>
    %174 = vector.shape_cast %173 : vector<1x1x128xf32> to vector<1x128xf32>
    %175 = vector.broadcast %174 : vector<1x128xf32> to vector<2x128xf32>
    %176 = arith.addf %172, %175 : vector<2x128xf32>
    %cst_134 = arith.constant 0.000000e+00 : f32
    %177 = vector.broadcast %cst_134 : f32 to vector<2x128xf32>
    %178 = arith.maximumf %176, %177 : vector<2x128xf32>
    %179 = arith.addf %165, %178 : vector<2x128xf32>
    %180 = vector.extract_strided_slice %138 {offsets = [18, 0], sizes = [2, 128], strides = [1, 1]} : vector<28x512xf32> to vector<2x128xf32>
    %181 = vector.extract_strided_slice %138 {offsets = [20, 128], sizes = [2, 128], strides = [1, 1]} : vector<28x512xf32> to vector<2x128xf32>
    %182 = arith.addf %180, %181 : vector<2x128xf32>
    %183 = vector.extract_strided_slice %138 {offsets = [22, 256], sizes = [2, 128], strides = [1, 1]} : vector<28x512xf32> to vector<2x128xf32>
    %184 = arith.addf %182, %183 : vector<2x128xf32>
    %185 = vector.extract_strided_slice %138 {offsets = [24, 384], sizes = [2, 128], strides = [1, 1]} : vector<28x512xf32> to vector<2x128xf32>
    %186 = arith.addf %184, %185 : vector<2x128xf32>
    %c1_135 = arith.constant 1 : index
    %c0_136 = arith.constant 0 : index
    %c0_137 = arith.constant 0 : index
    %187 = vector.load %arg5[%c1_135, %c0_136, %c0_137] : memref<2x1x128xf32, #tpu.memory_space<vmem>>, vector<1x1x128xf32>
    %188 = vector.shape_cast %187 : vector<1x1x128xf32> to vector<1x128xf32>
    %189 = vector.broadcast %188 : vector<1x128xf32> to vector<2x128xf32>
    %190 = arith.addf %186, %189 : vector<2x128xf32>
    %cst_138 = arith.constant 0.000000e+00 : f32
    %191 = vector.broadcast %cst_138 : f32 to vector<2x128xf32>
    %192 = arith.maximumf %190, %191 : vector<2x128xf32>
    %193 = arith.addf %179, %192 : vector<2x128xf32>
    %cst_139 = arith.constant 2.500000e-01 : f32
    %194 = vector.broadcast %cst_139 : f32 to vector<2x128xf32>
    %195 = arith.mulf %193, %194 : vector<2x128xf32>
    %c1_140 = arith.constant 1 : index
    %c0_141 = arith.constant 0 : index
    %c0_142 = arith.constant 0 : index
    %196 = vector.load %arg6[%c1_140, %c0_141, %c0_142] : memref<2x128x384xf32, #tpu.memory_space<vmem>>, vector<1x128x384xf32>
    %197 = vector.shape_cast %196 : vector<1x128x384xf32> to vector<128x384xf32>
    %cst_143 = arith.constant dense<0.000000e+00> : vector<2x384xf32>
    %198 = tpu.matmul %195, %197, %cst_143 {dimension_numbers = #tpu.dot_dimension_numbers<[1], [0], [0], [1], [0, 0, 1, 1], [], []>} : vector<2x128xf32>, vector<128x384xf32>, vector<2x384xf32> -> vector<2x384xf32>
    %199 = arith.addf %105, %198 : vector<2x384xf32>
    %200 = vector.extract_strided_slice %199 {offsets = [0, 0], sizes = [2, 128], strides = [1, 1]} : vector<2x384xf32> to vector<2x128xf32>
    %cst_144 = arith.constant dense<0.000000e+00> : vector<2xf32>
    %201 = vector.multi_reduction <add>, %200, %cst_144 [1] : vector<2x128xf32> to vector<2xf32>
    %202 = vector.shape_cast %201 : vector<2xf32> to vector<2x1xf32>
    %cst_145 = arith.constant 1.280000e+02 : f32
    %203 = vector.broadcast %cst_145 : f32 to vector<2x1xf32>
    %204 = arith.divf %202, %203 : vector<2x1xf32>
    %205 = vector.broadcast %204 : vector<2x1xf32> to vector<2x128xf32>
    %206 = arith.subf %200, %205 : vector<2x128xf32>
    %207 = arith.mulf %206, %206 : vector<2x128xf32>
    %cst_146 = arith.constant dense<0.000000e+00> : vector<2xf32>
    %208 = vector.multi_reduction <add>, %207, %cst_146 [1] : vector<2x128xf32> to vector<2xf32>
    %209 = vector.shape_cast %208 : vector<2xf32> to vector<2x1xf32>
    %cst_147 = arith.constant 1.280000e+02 : f32
    %210 = vector.broadcast %cst_147 : f32 to vector<2x1xf32>
    %211 = arith.divf %209, %210 : vector<2x1xf32>
    %212 = vector.broadcast %204 : vector<2x1xf32> to vector<2x128xf32>
    %213 = arith.subf %200, %212 : vector<2x128xf32>
    %cst_148 = arith.constant 9.99999974E-6 : f32
    %214 = vector.broadcast %cst_148 : f32 to vector<2x1xf32>
    %215 = arith.addf %211, %214 : vector<2x1xf32>
    %216 = math.rsqrt %215 : vector<2x1xf32>
    %217 = vector.broadcast %216 : vector<2x1xf32> to vector<2x128xf32>
    %218 = arith.mulf %213, %217 : vector<2x128xf32>
    %cst_149 = arith.constant 0.000000e+00 : f32
    %219 = vector.broadcast %cst_149 : f32 to vector<2x128xf32>
    %220 = arith.maximumf %218, %219 : vector<2x128xf32>
    %221 = vector.extract_strided_slice %199 {offsets = [0, 128], sizes = [2, 128], strides = [1, 1]} : vector<2x384xf32> to vector<2x128xf32>
    %cst_150 = arith.constant dense<0.000000e+00> : vector<2xf32>
    %222 = vector.multi_reduction <add>, %221, %cst_150 [1] : vector<2x128xf32> to vector<2xf32>
    %223 = vector.shape_cast %222 : vector<2xf32> to vector<2x1xf32>
    %cst_151 = arith.constant 1.280000e+02 : f32
    %224 = vector.broadcast %cst_151 : f32 to vector<2x1xf32>
    %225 = arith.divf %223, %224 : vector<2x1xf32>
    %226 = vector.broadcast %225 : vector<2x1xf32> to vector<2x128xf32>
    %227 = arith.subf %221, %226 : vector<2x128xf32>
    %228 = arith.mulf %227, %227 : vector<2x128xf32>
    %cst_152 = arith.constant dense<0.000000e+00> : vector<2xf32>
    %229 = vector.multi_reduction <add>, %228, %cst_152 [1] : vector<2x128xf32> to vector<2xf32>
    %230 = vector.shape_cast %229 : vector<2xf32> to vector<2x1xf32>
    %cst_153 = arith.constant 1.280000e+02 : f32
    %231 = vector.broadcast %cst_153 : f32 to vector<2x1xf32>
    %232 = arith.divf %230, %231 : vector<2x1xf32>
    %233 = vector.broadcast %225 : vector<2x1xf32> to vector<2x128xf32>
    %234 = arith.subf %221, %233 : vector<2x128xf32>
    %cst_154 = arith.constant 9.99999974E-6 : f32
    %235 = vector.broadcast %cst_154 : f32 to vector<2x1xf32>
    %236 = arith.addf %232, %235 : vector<2x1xf32>
    %237 = math.rsqrt %236 : vector<2x1xf32>
    %238 = vector.broadcast %237 : vector<2x1xf32> to vector<2x128xf32>
    %239 = arith.mulf %234, %238 : vector<2x128xf32>
    %cst_155 = arith.constant 0.000000e+00 : f32
    %240 = vector.broadcast %cst_155 : f32 to vector<2x128xf32>
    %241 = arith.maximumf %239, %240 : vector<2x128xf32>
    %242 = vector.extract_strided_slice %199 {offsets = [0, 256], sizes = [2, 128], strides = [1, 1]} : vector<2x384xf32> to vector<2x128xf32>
    %cst_156 = arith.constant dense<0.000000e+00> : vector<2xf32>
    %243 = vector.multi_reduction <add>, %242, %cst_156 [1] : vector<2x128xf32> to vector<2xf32>
    %244 = vector.shape_cast %243 : vector<2xf32> to vector<2x1xf32>
    %cst_157 = arith.constant 1.280000e+02 : f32
    %245 = vector.broadcast %cst_157 : f32 to vector<2x1xf32>
    %246 = arith.divf %244, %245 : vector<2x1xf32>
    %247 = vector.broadcast %246 : vector<2x1xf32> to vector<2x128xf32>
    %248 = arith.subf %242, %247 : vector<2x128xf32>
    %249 = arith.mulf %248, %248 : vector<2x128xf32>
    %cst_158 = arith.constant dense<0.000000e+00> : vector<2xf32>
    %250 = vector.multi_reduction <add>, %249, %cst_158 [1] : vector<2x128xf32> to vector<2xf32>
    %251 = vector.shape_cast %250 : vector<2xf32> to vector<2x1xf32>
    %cst_159 = arith.constant 1.280000e+02 : f32
    %252 = vector.broadcast %cst_159 : f32 to vector<2x1xf32>
    %253 = arith.divf %251, %252 : vector<2x1xf32>
    %254 = vector.broadcast %246 : vector<2x1xf32> to vector<2x128xf32>
    %255 = arith.subf %242, %254 : vector<2x128xf32>
    %cst_160 = arith.constant 9.99999974E-6 : f32
    %256 = vector.broadcast %cst_160 : f32 to vector<2x1xf32>
    %257 = arith.addf %253, %256 : vector<2x1xf32>
    %258 = math.rsqrt %257 : vector<2x1xf32>
    %259 = vector.broadcast %258 : vector<2x1xf32> to vector<2x128xf32>
    %260 = arith.mulf %255, %259 : vector<2x128xf32>
    %cst_161 = arith.constant 0.000000e+00 : f32
    %261 = vector.broadcast %cst_161 : f32 to vector<2x128xf32>
    %262 = arith.maximumf %260, %261 : vector<2x128xf32>
    %263 = tpu.concatenate %220, %241, %262 in 1 : vector<2x128xf32>, vector<2x128xf32>, vector<2x128xf32> -> vector<2x384xf32>
    %c0_162 = arith.constant 0 : index
    %c0_163 = arith.constant 0 : index
    %264 = vector.load %arg10[%c0_162, %c0_163] : memref<384x16xf32, #tpu.memory_space<vmem>>, vector<384x16xf32>
    %cst_164 = arith.constant dense<0.000000e+00> : vector<2x16xf32>
    %265 = tpu.matmul %263, %264, %cst_164 {dimension_numbers = #tpu.dot_dimension_numbers<[1], [0], [0], [1], [0, 0, 1, 1], [], []>} : vector<2x384xf32>, vector<384x16xf32>, vector<2x16xf32> -> vector<2x16xf32>
    %c0_165 = arith.constant 0 : index
    %c0_166 = arith.constant 0 : index
    %266 = vector.load %arg11[%c0_165, %c0_166] : memref<1x16xf32, #tpu.memory_space<vmem>>, vector<1x16xf32>
    %267 = vector.broadcast %266 : vector<1x16xf32> to vector<2x16xf32>
    %268 = arith.addf %265, %267 : vector<2x16xf32>
    %269 = vector.extract_strided_slice %268 {offsets = [0, 0], sizes = [2, 8], strides = [1, 1]} : vector<2x16xf32> to vector<2x8xf32>
    %270 = tpu.iota {dimensions = array<i32: 1>} : vector<2x8xi32>
    %c4_i32 = arith.constant 4 : i32
    %271 = vector.broadcast %c4_i32 : i32 to vector<2x8xi32>
    %272 = arith.cmpi slt, %270, %271 : vector<2x8xi32>
    %cst_167 = arith.constant 2.000000e+01 : f32
    %273 = vector.broadcast %cst_167 : f32 to vector<2x8xf32>
    %274 = arith.cmpf ogt, %269, %273 : vector<2x8xf32>
    %cst_168 = arith.constant 2.000000e+01 : f32
    %275 = vector.broadcast %cst_168 : f32 to vector<2x8xf32>
    %276 = arith.minimumf %269, %275 : vector<2x8xf32>
    %277 = math.exp %276 : vector<2x8xf32>
    %278 = math.log1p %277 : vector<2x8xf32>
    %279 = arith.select %274, %269, %278 : vector<2x8xi1>, vector<2x8xf32>
    %cst_169 = arith.constant 9.99999974E-6 : f32
    %280 = vector.broadcast %cst_169 : f32 to vector<2x8xf32>
    %281 = arith.addf %279, %280 : vector<2x8xf32>
    %282 = arith.select %272, %269, %281 : vector<2x8xi1>, vector<2x8xf32>
    %c0_170 = arith.constant 0 : index
    %c0_171 = arith.constant 0 : index
    %283 = vector.load %arg14[%c0_170, %c0_171] : memref<2x12xf32, #tpu.memory_space<vmem>>, vector<2x8xf32>
    tpu.vector_store %arg14[%c0_170, %c0_171], %282 {strides = array<i32>} : memref<2x12xf32, #tpu.memory_space<vmem>>, vector<2x8xf32>,
    %284 = vector.extract_strided_slice %268 {offsets = [0, 8], sizes = [2, 4], strides = [1, 1]} : vector<2x16xf32> to vector<2x4xf32>
    %285 = vector.extract_strided_slice %268 {offsets = [0, 12], sizes = [2, 4], strides = [1, 1]} : vector<2x16xf32> to vector<2x4xf32>
    %286 = arith.minimumf %284, %285 : vector<2x4xf32>
    %c0_172 = arith.constant 0 : index
    %c8 = arith.constant 8 : index
    %287 = vector.load %arg14[%c0_172, %c8] : memref<2x12xf32, #tpu.memory_space<vmem>>, vector<2x4xf32>
    tpu.vector_store %arg14[%c0_172, %c8], %286 {strides = array<i32>} : memref<2x12xf32, #tpu.memory_space<vmem>>, vector<2x4xf32>,
    return
  }
  func.func @transform_0(%arg0: i32) -> (i32, i32, i32) {
    %c0_i32 = arith.constant 0 : i32
    %c0_i32_0 = arith.constant 0 : i32
    %c0_i32_1 = arith.constant 0 : i32
    %c0_i32_2 = arith.constant 0 : i32
    return %c0_i32, %c0_i32_0, %c0_i32_1 : i32, i32, i32
  }
  func.func @transform_1(%arg0: i32) -> (i32, i32, i32) {
    %c0_i32 = arith.constant 0 : i32
    %c0_i32_0 = arith.constant 0 : i32
    %c0_i32_1 = arith.constant 0 : i32
    %c0_i32_2 = arith.constant 0 : i32
    return %c0_i32, %c0_i32_0, %c0_i32_1 : i32, i32, i32
  }
  func.func @transform_2(%arg0: i32) -> (i32, i32, i32) {
    %c0_i32 = arith.constant 0 : i32
    %c0_i32_0 = arith.constant 0 : i32
    %c0_i32_1 = arith.constant 0 : i32
    %c0_i32_2 = arith.constant 0 : i32
    return %c0_i32, %c0_i32_0, %c0_i32_1 : i32, i32, i32
  }
  func.func @transform_3(%arg0: i32) -> (i32, i32, i32) {
    %c0_i32 = arith.constant 0 : i32
    %c0_i32_0 = arith.constant 0 : i32
    %c0_i32_1 = arith.constant 0 : i32
    %c0_i32_2 = arith.constant 0 : i32
    return %c0_i32, %c0_i32_0, %c0_i32_1 : i32, i32, i32
  }
  func.func @transform_4(%arg0: i32) -> (i32, i32, i32) {
    %c0_i32 = arith.constant 0 : i32
    %c0_i32_0 = arith.constant 0 : i32
    %c0_i32_1 = arith.constant 0 : i32
    %c0_i32_2 = arith.constant 0 : i32
    return %c0_i32, %c0_i32_0, %c0_i32_1 : i32, i32, i32
  }
  func.func @transform_5(%arg0: i32) -> (i32, i32, i32) {
    %c0_i32 = arith.constant 0 : i32
    %c0_i32_0 = arith.constant 0 : i32
    %c0_i32_1 = arith.constant 0 : i32
    %c0_i32_2 = arith.constant 0 : i32
    return %c0_i32, %c0_i32_0, %c0_i32_1 : i32, i32, i32
  }
  func.func @transform_6(%arg0: i32) -> (i32, i32) {
    %c0_i32 = arith.constant 0 : i32
    %c0_i32_0 = arith.constant 0 : i32
    %c0_i32_1 = arith.constant 0 : i32
    return %c0_i32, %c0_i32_0 : i32, i32
  }
  func.func @transform_7(%arg0: i32) -> (i32, i32) {
    %c0_i32 = arith.constant 0 : i32
    %c0_i32_0 = arith.constant 0 : i32
    %c0_i32_1 = arith.constant 0 : i32
    return %c0_i32, %c0_i32_0 : i32, i32
  }
  func.func @transform_8(%arg0: i32) -> (i32, i32) {
    %c0_i32 = arith.constant 0 : i32
    %c0_i32_0 = arith.constant 0 : i32
    %c0_i32_1 = arith.constant 0 : i32
    return %c0_i32, %c0_i32_0 : i32, i32
  }
  func.func @transform_9(%arg0: i32) -> (i32, i32) {
    %c0_i32 = arith.constant 0 : i32
    %c0_i32_0 = arith.constant 0 : i32
    %c0_i32_1 = arith.constant 0 : i32
    return %c0_i32, %c0_i32_0 : i32, i32
  }
  func.func @transform_10(%arg0: i32) -> (i32, i32) {
    %c0_i32 = arith.constant 0 : i32
    %c0_i32_0 = arith.constant 0 : i32
    %c0_i32_1 = arith.constant 0 : i32
    return %c0_i32, %c0_i32_0 : i32, i32
  }
  func.func @transform_11(%arg0: i32) -> (i32, i32) {
    %c0_i32 = arith.constant 0 : i32
    %c0_i32_0 = arith.constant 0 : i32
    %c0_i32_1 = arith.constant 0 : i32
    return %c0_i32, %c0_i32_0 : i32, i32
  }
  func.func @transform_12(%arg0: i32) -> (i32, i32) {
    %c0_i32 = arith.constant 0 : i32
    %c0_i32_0 = arith.constant 0 : i32
    %c0_i32_1 = arith.constant 0 : i32
    return %c0_i32, %c0_i32_0 : i32, i32
  }
  func.func @transform_13(%arg0: i32) -> (i32, i32) {
    %c0_i32 = arith.constant 0 : i32
    %c0_i32_0 = arith.constant 0 : i32
    %c0_i32_1 = arith.constant 0 : i32
    return %c0_i32, %c0_i32_0 : i32, i32
  }
}

</mosaic_0001>

<llo_original>
// kernel: actor_critic_forward.1
$region0: #{actor_critic_forward.1}
  #allocation0 [shape = 'u32[]', space=smem, size = 0x4, offset = 0x4, fixed_abs, tag = 'smem constant byte address 0x4 - core index']
  #allocation1 [shape = 'u32[144,128]{1,0:T(1,128)}', space=vmem, size = 0x12000, scoped, tag = 'internal scratch']
  #allocation2 [shape = 'f32[98,128]{1,0:T(8,128)}', space=vmem, size = 0xd000, scoped, tag = 'scratch operand']
  #allocation3 [shape = 'f32[28,512]{1,0:T(8,128)}', space=vmem, size = 0x10000, scoped, tag = 'scratch operand']
  %s0 = inlined_call_operand.vmem [shape: bf16[2,98,256], index: 0, kind: input, shape index: {}]
  %s1 = inlined_call_operand.vmem [shape: bf16[2,256,128], index: 1, kind: input, shape index: {}]
  %s2 = inlined_call_operand.vmem [shape: f32[2,1,128], index: 2, kind: input, shape index: {}]
  %s3 = inlined_call_operand.vmem [shape: bf16[2,512,512], index: 3, kind: input, shape index: {}]
  %s4 = inlined_call_operand.vmem [shape: f32[2,1,128], index: 4, kind: input, shape index: {}]
  %s5 = inlined_call_operand.vmem [shape: f32[2,128,384], index: 5, kind: input, shape index: {}]
  %s6 = inlined_call_operand.vmem [shape: f32[1,384], index: 6, kind: input, shape index: {}]
  %s7 = inlined_call_operand.vmem [shape: f32[4,384], index: 7, kind: input, shape index: {}]
  %s8 = inlined_call_operand.vmem [shape: f32[1,384], index: 8, kind: input, shape index: {}]
  %s9 = inlined_call_operand.vmem [shape: f32[384,16], index: 9, kind: input, shape index: {}]
  %s10 = inlined_call_operand.vmem [shape: f32[1,16], index: 10, kind: input, shape index: {}]
  %s11 = inlined_call_operand.vmem [shape: f32[2,1], index: 11, kind: input, shape index: {}]
  %s12 = inlined_call_operand.vmem [shape: f32[2,4], index: 12, kind: input, shape index: {}]
  %s13 = inlined_call_operand.vmem [shape: f32[2,12], index: 13, kind: output, shape index: {}]
  %s14 = sld [smem:[#allocation0]]
  $region62: #{actor_critic_forward.1} parent=0
    _
  %s16 = ssub.s32 1, %s14
  %s17 = scalar_select 0, %s16, %s14
  // Predicated region
  $region2: #{actor_critic_forward.1} parent=0 // pred_check
    _
  $region3: #{actor_critic_forward.1} parent=0 // pred_check_branch
    %19 = sbr.rel (0) target = $region5
  $region4: #{actor_critic_forward.1} parent=0 // pred_region
    _
  $region5: #{actor_critic_forward.1} parent=0 // pred_fallthru
    _
  // Predicated region
  $region6: #{actor_critic_forward.1} parent=0 // pred_check
    _
  $region7: #{actor_critic_forward.1} parent=0 // pred_check_branch
    %21 = sbr.rel (0) target = $region9
  $region8: #{actor_critic_forward.1} parent=0 // pred_region
    _
  $region9: #{actor_critic_forward.1} parent=0 // pred_fallthru
    _
  // Predicated region
  $region10: #{actor_critic_forward.1} parent=0 // pred_check
    _
  $region11: #{actor_critic_forward.1} parent=0 // pred_check_branch
    %23 = sbr.rel (0) target = $region13
  $region12: #{actor_critic_forward.1} parent=0 // pred_region
    _
  $region13: #{actor_critic_forward.1} parent=0 // pred_fallthru
    _
  // Predicated region
  $region14: #{actor_critic_forward.1} parent=0 // pred_check
    _
  $region15: #{actor_critic_forward.1} parent=0 // pred_check_branch
    %25 = sbr.rel (0) target = $region17
  $region16: #{actor_critic_forward.1} parent=0 // pred_region
    _
  $region17: #{actor_critic_forward.1} parent=0 // pred_fallthru
    _
  // Predicated region
  $region18: #{actor_critic_forward.1} parent=0 // pred_check
    _
  $region19: #{actor_critic_forward.1} parent=0 // pred_check_branch
    %27 = sbr.rel (0) target = $region21
  $region20: #{actor_critic_forward.1} parent=0 // pred_region
    _
  $region21: #{actor_critic_forward.1} parent=0 // pred_fallthru
    _
  // Predicated region
  $region22: #{actor_critic_forward.1} parent=0 // pred_check
    _
  $region23: #{actor_critic_forward.1} parent=0 // pred_check_branch
    %29 = sbr.rel (0) target = $region25
  $region24: #{actor_critic_forward.1} parent=0 // pred_region
    _
  $region25: #{actor_critic_forward.1} parent=0 // pred_fallthru
    _
  // Predicated region
  $region26: #{actor_critic_forward.1} parent=0 // pred_check
    _
  $region27: #{actor_critic_forward.1} parent=0 // pred_check_branch
    %31 = sbr.rel (0) target = $region29
  $region28: #{actor_critic_forward.1} parent=0 // pred_region
    _
  $region29: #{actor_critic_forward.1} parent=0 // pred_fallthru
    _
  // Predicated region
  $region30: #{actor_critic_forward.1} parent=0 // pred_check
    _
  $region31: #{actor_critic_forward.1} parent=0 // pred_check_branch
    %33 = sbr.rel (0) target = $region33
  $region32: #{actor_critic_forward.1} parent=0 // pred_region
    _
  $region33: #{actor_critic_forward.1} parent=0 // pred_fallthru
    _
  // Predicated region
  $region34: #{actor_critic_forward.1} parent=0 // pred_check
    _
  $region35: #{actor_critic_forward.1} parent=0 // pred_check_branch
    %35 = sbr.rel (0) target = $region37
  $region36: #{actor_critic_forward.1} parent=0 // pred_region
    _
  $region37: #{actor_critic_forward.1} parent=0 // pred_fallthru
    _
  // Predicated region
  $region38: #{actor_critic_forward.1} parent=0 // pred_check
    _
  $region39: #{actor_critic_forward.1} parent=0 // pred_check_branch
    %37 = sbr.rel (0) target = $region41
  $region40: #{actor_critic_forward.1} parent=0 // pred_region
    _
  $region41: #{actor_critic_forward.1} parent=0 // pred_fallthru
    _
  // Predicated region
  $region42: #{actor_critic_forward.1} parent=0 // pred_check
    _
  $region43: #{actor_critic_forward.1} parent=0 // pred_check_branch
    %39 = sbr.rel (0) target = $region45
  $region44: #{actor_critic_forward.1} parent=0 // pred_region
    _
  $region45: #{actor_critic_forward.1} parent=0 // pred_fallthru
    _
  // Predicated region
  $region46: #{actor_critic_forward.1} parent=0 // pred_check
    _
  $region47: #{actor_critic_forward.1} parent=0 // pred_check_branch
    %41 = sbr.rel (0) target = $region49
  $region48: #{actor_critic_forward.1} parent=0 // pred_region
    _
  $region49: #{actor_critic_forward.1} parent=0 // pred_fallthru
    _
  // Predicated region
  $region50: #{actor_critic_forward.1} parent=0 // pred_check
    _
  $region51: #{actor_critic_forward.1} parent=0 // pred_check_branch
    %43 = sbr.rel (0) target = $region53
  $region52: #{actor_critic_forward.1} parent=0 // pred_region
    _
  $region53: #{actor_critic_forward.1} parent=0 // pred_fallthru
    _
  %v45 = vld [vmem:[%s8] sm:$0x7]
  %v46 = vld [vmem:[%s11] sm:$0x3]
  %v47 = vld [vmem:[%s6] sm:$0x7]
  %49 = vset.pattern.permute.xlu0 0
  %50 = vperm.xlu0 %49, %v46
  %v51 = vpop.permute.xlu0 %50
  %v54 = vlaneseq
  %v55 = vshrl.u32 %v54, 7
  %v56 = vsub.s32 0, %v55
  %v57 = vrot.slane %v47, %v56
  %v58 = vlaneseq
  %v59 = vshrl.u32 %v58, 7
  %v60 = vsub.s32 1, %v59
  %v61 = vrot.slane %v47, %v60
  %v62 = vlaneseq
  %v63 = vshrl.u32 %v62, 7
  %v64 = vsub.s32 2, %v63
  %v65 = vrot.slane %v47, %v64
  %v69 = vmul.f32 %v51, %v57
  %v70 = vmul.f32 %v51, %v61
  %v71 = vmul.f32 %v51, %v65
  %v73 = vlaneseq
  %v74 = vshrl.u32 %v73, 7
  %v75 = vsub.s32 0, %v74
  %v76 = vrot.slane %v45, %v75
  %v77 = vlaneseq
  %v78 = vshrl.u32 %v77, 7
  %v79 = vsub.s32 1, %v78
  %v80 = vrot.slane %v45, %v79
  %v81 = vlaneseq
  %v82 = vshrl.u32 %v81, 7
  %v83 = vsub.s32 2, %v82
  %v84 = vrot.slane %v45, %v83
  %v88 = vadd.f32 %v76, %v69
  %v89 = vadd.f32 %v80, %v70
  %v90 = vadd.f32 %v84, %v71
  %v91 = vld [vmem:[%s12] sm:$0x3]
  %v92 = vld [vmem:[%s7] sm:$0xff]
  %v93 = vld [vmem:[%s7 + $0x8] sm:$0xf]
  %v96 = vcombine.high %v92, %v92
  %vm97 = vcmask 31744
  %v99 = vsel %vm97, %v91, 0
  %vm101 = vcmask 1043456
  %v102 = vsel %vm101, %v92, 0
  %v104 = vsel %vm101, %v96, 0
  %v106 = vsel %vm101, %v93, 0
  %108 = vmatprep.subr.mxu0 %v104
  %109 = vmatpush1.msra.mxu0 %v102
  %110 = vmatprep.subr.mxu0 0.0
  %111 = vmatpush1.msra.mxu0 0.0
  %112 = vmatprep.subr.mxu0 0.0
  %113 = vmatpush1.msra.mxu0 0.0
  %114 = vmatprep.subr.mxu0 0.0
  %115 = vmatpush1.msra.mxu0 0.0
  %116 = vmatprep.subr.mxu0 0.0
  %117 = vmatpush1.msra.mxu0 0.0
  %118 = vmatprep.subr.mxu0 0.0
  %119 = vmatpush1.msra.mxu0 0.0
  %120 = vmatprep.subr.mxu0 0.0
  %121 = vmatpush1.msra.mxu0 0.0
  %122 = vmatprep.subr.mxu0 0.0
  %123 = vmatpush1.msra.mxu0 0.0
  %124 = vmatprep.subr.mxu0 0.0
  %125 = vmatpush1.msra.mxu0 0.0
  %126 = vmatprep.subr.mxu0 0.0
  %127 = vmatpush1.msra.mxu0 0.0
  %128 = vmatprep.subr.mxu0 0.0
  %129 = vmatpush1.msra.mxu0 0.0
  %130 = vmatprep.subr.mxu0 0.0
  %131 = vmatpush1.msra.mxu0 0.0
  %132 = vmatprep.subr.mxu0 0.0
  %133 = vmatpush1.msra.mxu0 0.0
  %134 = vmatprep.subr.mxu0 0.0
  %135 = vmatpush1.msra.mxu0 0.0
  %136 = vmatprep.subr.mxu0 0.0
  %137 = vmatpush1.msra.mxu0 0.0
  %138 = vmatprep.subr.mxu0 0.0
  %139 = vmatpush1.msra.mxu0 0.0
  %140 = vmatprep.subr.mxu0 0.0
  %141 = vmatpush1.msra.mxu0 0.0
  %142 = vmatprep.subr.mxu0 0.0
  %143 = vmatpush1.msra.mxu0 0.0
  %144 = vmatprep.subr.mxu0 0.0
  %145 = vmatpush1.msra.mxu0 0.0
  %146 = vmatprep.subr.mxu0 0.0
  %147 = vmatpush1.msra.mxu0 0.0
  %148 = vmatprep.subr.mxu0 0.0
  %149 = vmatpush1.msra.mxu0 0.0
  %150 = vmatprep.subr.mxu0 0.0
  %151 = vmatpush1.msra.mxu0 0.0
  %152 = vmatprep.subr.mxu0 0.0
  %153 = vmatpush1.msra.mxu0 0.0
  %154 = vmatprep.subr.mxu0 0.0
  %155 = vmatpush1.msra.mxu0 0.0
  %156 = vmatprep.subr.mxu0 0.0
  %157 = vmatpush1.msra.mxu0 0.0
  %158 = vmatprep.subr.mxu0 0.0
  %159 = vmatpush1.msra.mxu0 0.0
  %160 = vmatprep.subr.mxu0 0.0
  %161 = vmatpush1.msra.mxu0 0.0
  %162 = vmatprep.subr.mxu0 0.0
  %163 = vmatpush1.msra.mxu0 0.0
  %164 = vmatprep.subr.mxu0 0.0
  %165 = vmatpush1.msra.mxu0 0.0
  %166 = vmatprep.subr.mxu0 0.0
  %167 = vmatpush1.msra.mxu0 0.0
  %168 = vmatprep.subr.mxu0 0.0
  %169 = vmatpush1.msra.mxu0 0.0
  %170 = vmatprep.subr.mxu0 0.0
  %171 = vmatpush1.msra.mxu0 0.0
  %172 = vmatprep.mubr.f32.mxu0 0.0
  %173 = vmatmul.mubr.f32.gmra.mrb[0].mxu0 %v99
  %v174 = vpop.f32.mrb[0].mxu0
  %v175 = vadd.f32 0.0, %v174
  %v176 = vpop.f32.mrb[0].mxu0
  %v177 = vadd.f32 0.0, %v176
  %178 = vdwg.mxu0
  %179 = vmatprep.subr.mxu0 0.0
  %180 = vmatpush1.msra.mxu0 %v106
  %181 = vmatprep.subr.mxu0 0.0
  %182 = vmatpush1.msra.mxu0 0.0
  %183 = vmatprep.subr.mxu0 0.0
  %184 = vmatpush1.msra.mxu0 0.0
  %185 = vmatprep.subr.mxu0 0.0
  %186 = vmatpush1.msra.mxu0 0.0
  %187 = vmatprep.subr.mxu0 0.0
  %188 = vmatpush1.msra.mxu0 0.0
  %189 = vmatprep.subr.mxu0 0.0
  %190 = vmatpush1.msra.mxu0 0.0
  %191 = vmatprep.subr.mxu0 0.0
  %192 = vmatpush1.msra.mxu0 0.0
  %193 = vmatprep.subr.mxu0 0.0
  %194 = vmatpush1.msra.mxu0 0.0
  %195 = vmatprep.subr.mxu0 0.0
  %196 = vmatpush1.msra.mxu0 0.0
  %197 = vmatprep.subr.mxu0 0.0
  %198 = vmatpush1.msra.mxu0 0.0
  %199 = vmatprep.subr.mxu0 0.0
  %200 = vmatpush1.msra.mxu0 0.0
  %201 = vmatprep.subr.mxu0 0.0
  %202 = vmatpush1.msra.mxu0 0.0
  %203 = vmatprep.subr.mxu0 0.0
  %204 = vmatpush1.msra.mxu0 0.0
  %205 = vmatprep.subr.mxu0 0.0
  %206 = vmatpush1.msra.mxu0 0.0
  %207 = vmatprep.subr.mxu0 0.0
  %208 = vmatpush1.msra.mxu0 0.0
  %209 = vmatprep.subr.mxu0 0.0
  %210 = vmatpush1.msra.mxu0 0.0
  %211 = vmatprep.subr.mxu0 0.0
  %212 = vmatpush1.msra.mxu0 0.0
  %213 = vmatprep.subr.mxu0 0.0
  %214 = vmatpush1.msra.mxu0 0.0
  %215 = vmatprep.subr.mxu0 0.0
  %216 = vmatpush1.msra.mxu0 0.0
  %217 = vmatprep.subr.mxu0 0.0
  %218 = vmatpush1.msra.mxu0 0.0
  %219 = vmatprep.subr.mxu0 0.0
  %220 = vmatpush1.msra.mxu0 0.0
  %221 = vmatprep.subr.mxu0 0.0
  %222 = vmatpush1.msra.mxu0 0.0
  %223 = vmatprep.subr.mxu0 0.0
  %224 = vmatpush1.msra.mxu0 0.0
  %225 = vmatprep.subr.mxu0 0.0
  %226 = vmatpush1.msra.mxu0 0.0
  %227 = vmatprep.subr.mxu0 0.0
  %228 = vmatpush1.msra.mxu0 0.0
  %229 = vmatprep.subr.mxu0 0.0
  %230 = vmatpush1.msra.mxu0 0.0
  %231 = vmatprep.subr.mxu0 0.0
  %232 = vmatpush1.msra.mxu0 0.0
  %233 = vmatprep.subr.mxu0 0.0
  %234 = vmatpush1.msra.mxu0 0.0
  %235 = vmatprep.subr.mxu0 0.0
  %236 = vmatpush1.msra.mxu0 0.0
  %237 = vmatprep.subr.mxu0 0.0
  %238 = vmatpush1.msra.mxu0 0.0
  %239 = vmatprep.subr.mxu0 0.0
  %240 = vmatpush1.msra.mxu0 0.0
  %241 = vmatprep.subr.mxu0 0.0
  %242 = vmatpush1.msra.mxu0 0.0
  %243 = vmatprep.mubr.f32.mxu0 0.0
  %244 = vmatmul.mubr.f32.gmra.mrb[0].mxu0 %v99
  %v245 = vpop.f32.mrb[0].mxu0
  %v246 = vadd.f32 0.0, %v245
  %v247 = vpop.f32.mrb[0].mxu0
  %248 = vdwg.mxu0
  %v249 = vadd.f32 %v88, %v175
  %v250 = vadd.f32 %v89, %v177
  %v251 = vadd.f32 %v90, %v246
  %v252 = vld [vmem:[%s0] sm:$0xff]
  %v253 = vld [vmem:[%s0 + $0x8] sm:$0xff]
  %v254 = vld [vmem:[%s0 + $0x10] sm:$0xff]
  %v255 = vld [vmem:[%s0 + $0x18] sm:$0xff]
  %v256 = vld [vmem:[%s0 + $0x20] sm:$0xff]
  %v257 = vld [vmem:[%s0 + $0x28] sm:$0xff]
  %v258 = vld [vmem:[%s0 + $0x30] sm:$0xff]
  %v259 = vld [vmem:[%s0 + $0x38] sm:$0xff]
  %v260 = vld [vmem:[%s0 + $0x40] sm:$0xff]
  %v261 = vld [vmem:[%s0 + $0x48] sm:$0xff]
  %v262 = vld [vmem:[%s0 + $0x50] sm:$0xff]
  %v263 = vld [vmem:[%s0 + $0x58] sm:$0xff]
  %v264 = vld [vmem:[%s0 + $0x60] sm:$0x11]
  %v265 = vld [vmem:[%s1] sm:$0xf]
  %v266 = vld [vmem:[%s1 + $0x4] sm:$0xf]
  %v267 = vld [vmem:[%s1 + $0x8] sm:$0xf]
  %v268 = vld [vmem:[%s1 + $0xc] sm:$0xf]
  %v269 = vld [vmem:[%s1 + $0x10] sm:$0xf]
  %v270 = vld [vmem:[%s1 + $0x14] sm:$0xf]
  %v271 = vld [vmem:[%s1 + $0x18] sm:$0xf]
  %v272 = vld [vmem:[%s1 + $0x1c] sm:$0xf]
  %v273 = vld [vmem:[%s1 + $0x20] sm:$0xf]
  %v274 = vld [vmem:[%s1 + $0x24] sm:$0xf]
  %v275 = vld [vmem:[%s1 + $0x28] sm:$0xf]
  %v276 = vld [vmem:[%s1 + $0x2c] sm:$0xf]
  %v277 = vld [vmem:[%s1 + $0x30] sm:$0xf]
  %v278 = vld [vmem:[%s1 + $0x34] sm:$0xf]
  %v279 = vld [vmem:[%s1 + $0x38] sm:$0xf]
  %v280 = vld [vmem:[%s1 + $0x3c] sm:$0xf]
  %v281 = vld [vmem:[%s1 + $0x40] sm:$0xf]
  %v282 = vld [vmem:[%s1 + $0x44] sm:$0xf]
  %v283 = vld [vmem:[%s1 + $0x48] sm:$0xf]
  %v284 = vld [vmem:[%s1 + $0x4c] sm:$0xf]
  %v285 = vld [vmem:[%s1 + $0x50] sm:$0xf]
  %v286 = vld [vmem:[%s1 + $0x54] sm:$0xf]
  %v287 = vld [vmem:[%s1 + $0x58] sm:$0xf]
  %v288 = vld [vmem:[%s1 + $0x5c] sm:$0xf]
  %v289 = vld [vmem:[%s1 + $0x60] sm:$0xf]
  %v290 = vld [vmem:[%s1 + $0x64] sm:$0xf]
  %v291 = vld [vmem:[%s1 + $0x68] sm:$0xf]
  %v292 = vld [vmem:[%s1 + $0x6c] sm:$0xf]
  %v293 = vld [vmem:[%s1 + $0x70] sm:$0xf]
  %v294 = vld [vmem:[%s1 + $0x74] sm:$0xf]
  %v295 = vld [vmem:[%s1 + $0x78] sm:$0xf]
  %v296 = vld [vmem:[%s1 + $0x7c] sm:$0xf]
  %v297 = vld [vmem:[%s2] sm:$0x1]
  %v299 = vlaneseq
  %v300 = vshrl.u32 %v299, 7
  %v301 = vsub.s32 0, %v300
  %v302 = vrot.slane %v297, %v301
  %v317 = vunpack.c.l.b16 %v252
  %v318 = vunpack.c.h.b16 %v252
  %v319 = vunpack.c.l.b16 %v253
  %v320 = vunpack.c.h.b16 %v253
  %v321 = vunpack.c.l.b16 %v254
  %v322 = vunpack.c.h.b16 %v254
  %v323 = vunpack.c.l.b16 %v255
  %v324 = vunpack.c.h.b16 %v255
  %v325 = vunpack.c.l.b16 %v256
  %v326 = vunpack.c.h.b16 %v256
  %v327 = vunpack.c.l.b16 %v257
  %v328 = vunpack.c.h.b16 %v257
  %v329 = vunpack.c.l.b16 %v258
  %v330 = vunpack.c.h.b16 %v258
  %v331 = vunpack.c.l.b16 %v259
  %v332 = vunpack.c.h.b16 %v259
  %v333 = vunpack.c.l.b16 %v260
  %v334 = vunpack.c.h.b16 %v260
  %v335 = vunpack.c.l.b16 %v261
  %v336 = vunpack.c.h.b16 %v261
  %v337 = vunpack.c.l.b16 %v262
  %v338 = vunpack.c.h.b16 %v262
  %v339 = vunpack.c.l.b16 %v263
  %v340 = vunpack.c.h.b16 %v263
  %v341 = vunpack.c.l.b16 %v264
  %v342 = vunpack.c.h.b16 %v264
  %v343 = vpack.c.b16 %v319, %v317
  %v344 = vpack.c.b16 %v320, %v318
  %v345 = vpack.c.b16 %v323, %v321
  %v346 = vpack.c.b16 %v324, %v322
  %v347 = vpack.c.b16 %v327, %v325
  %v348 = vpack.c.b16 %v328, %v326
  %v349 = vpack.c.b16 %v331, %v329
  %v350 = vpack.c.b16 %v332, %v330
  %v351 = vpack.c.b16 %v335, %v333
  %v352 = vpack.c.b16 %v336, %v334
  %v353 = vpack.c.b16 %v339, %v337
  %v354 = vpack.c.b16 %v340, %v338
  %v355 = vpack.c.b16 %v341, %v341
  %v356 = vpack.c.b16 %v342, %v342
  %v403 = vunpack.c.l.b16 %v265
  %v404 = vunpack.c.l.b16 %v266
  %v405 = vunpack.c.l.b16 %v267
  %v406 = vunpack.c.l.b16 %v268
  %v407 = vunpack.c.l.b16 %v269
  %v408 = vunpack.c.l.b16 %v270
  %v409 = vunpack.c.l.b16 %v271
  %v410 = vunpack.c.l.b16 %v272
  %v411 = vunpack.c.l.b16 %v273
  %v412 = vunpack.c.l.b16 %v274
  %v413 = vunpack.c.l.b16 %v275
  %v414 = vunpack.c.l.b16 %v276
  %v415 = vunpack.c.l.b16 %v277
  %v416 = vunpack.c.l.b16 %v278
  %v417 = vunpack.c.l.b16 %v279
  %v418 = vunpack.c.l.b16 %v280
  %v419 = vunpack.c.l.b16 %v281
  %v420 = vunpack.c.l.b16 %v282
  %v421 = vunpack.c.l.b16 %v283
  %v422 = vunpack.c.l.b16 %v284
  %v423 = vunpack.c.l.b16 %v285
  %v424 = vunpack.c.l.b16 %v286
  %v425 = vunpack.c.l.b16 %v287
  %v426 = vunpack.c.l.b16 %v288
  %v427 = vunpack.c.l.b16 %v289
  %v428 = vunpack.c.l.b16 %v290
  %v429 = vunpack.c.l.b16 %v291
  %v430 = vunpack.c.l.b16 %v292
  %v431 = vunpack.c.l.b16 %v293
  %v432 = vunpack.c.l.b16 %v294
  %v433 = vunpack.c.l.b16 %v295
  %v434 = vunpack.c.l.b16 %v296
  %v435 = vpack.c.b16 %v404, %v403
  %v436 = vpack.c.b16 %v406, %v405
  %v437 = vpack.c.b16 %v408, %v407
  %v438 = vpack.c.b16 %v410, %v409
  %v439 = vpack.c.b16 %v412, %v411
  %v440 = vpack.c.b16 %v414, %v413
  %v441 = vpack.c.b16 %v416, %v415
  %v442 = vpack.c.b16 %v418, %v417
  %v443 = vpack.c.b16 %v420, %v419
  %v444 = vpack.c.b16 %v422, %v421
  %v445 = vpack.c.b16 %v424, %v423
  %v446 = vpack.c.b16 %v426, %v425
  %v447 = vpack.c.b16 %v428, %v427
  %v448 = vpack.c.b16 %v430, %v429
  %v449 = vpack.c.b16 %v432, %v431
  %v450 = vpack.c.b16 %v434, %v433
  %467 = vmatprep.subr.bf16.mxu0 0
  %468 = vmatpush1.bf16.msra.mxu0 %v435
  %469 = vmatprep.subr.bf16.mxu0 0
  %470 = vmatpush1.bf16.msra.mxu0 %v436
  %471 = vmatprep.subr.bf16.mxu0 0
  %472 = vmatpush1.bf16.msra.mxu0 %v437
  %473 = vmatprep.subr.bf16.mxu0 0
  %474 = vmatpush1.bf16.msra.mxu0 %v438
  %475 = vmatprep.subr.bf16.mxu0 0
  %476 = vmatpush1.bf16.msra.mxu0 %v439
  %477 = vmatprep.subr.bf16.mxu0 0
  %478 = vmatpush1.bf16.msra.mxu0 %v440
  %479 = vmatprep.subr.bf16.mxu0 0
  %480 = vmatpush1.bf16.msra.mxu0 %v441
  %481 = vmatprep.subr.bf16.mxu0 0
  %482 = vmatpush1.bf16.msra.mxu0 %v442
  %483 = vmatprep.subr.bf16.mxu0 0
  %484 = vmatpush1.bf16.msra.mxu0 %v443
  %485 = vmatprep.subr.bf16.mxu0 0
  %486 = vmatpush1.bf16.msra.mxu0 %v444
  %487 = vmatprep.subr.bf16.mxu0 0
  %488 = vmatpush1.bf16.msra.mxu0 %v445
  %489 = vmatprep.subr.bf16.mxu0 0
  %490 = vmatpush1.bf16.msra.mxu0 %v446
  %491 = vmatprep.subr.bf16.mxu0 0
  %492 = vmatpush1.bf16.msra.mxu0 %v447
  %493 = vmatprep.subr.bf16.mxu0 0
  %494 = vmatpush1.bf16.msra.mxu0 %v448
  %495 = vmatprep.subr.bf16.mxu0 0
  %496 = vmatpush1.bf16.msra.mxu0 %v449
  %497 = vmatprep.subr.bf16.mxu0 0
  %498 = vmatpush1.bf16.msra.mxu0 %v450
  %499 = vmatprep.mubr.bf16.mxu0 %v344
  %500 = vmatmul.mubr.bf16.gmra.mrb[0].mxu0 %v343
  %v501 = vpop.f32.mrb[0].mxu0
  %v502 = vadd.f32 %v302, %v501
  %v503 = vpop.f32.mrb[0].mxu0
  %v504 = vpop.f32.mrb[0].mxu0
  %v505 = vadd.f32 %v302, %v504
  %v506 = vpop.f32.mrb[0].mxu0
  %507 = vmatprep.mubr.bf16.mxu0 %v346
  %508 = vmatmul.mubr.bf16.gmra.mrb[0].mxu0 %v345
  %v509 = vpop.f32.mrb[0].mxu0
  %v510 = vadd.f32 %v302, %v509
  %v511 = vpop.f32.mrb[0].mxu0
  %v512 = vpop.f32.mrb[0].mxu0
  %v513 = vadd.f32 %v302, %v512
  %v514 = vpop.f32.mrb[0].mxu0
  %515 = vmatprep.mubr.bf16.mxu0 %v348
  %516 = vmatmul.mubr.bf16.gmra.mrb[0].mxu0 %v347
  %v517 = vpop.f32.mrb[0].mxu0
  %v518 = vadd.f32 %v302, %v517
  %v519 = vpop.f32.mrb[0].mxu0
  %v520 = vpop.f32.mrb[0].mxu0
  %v521 = vadd.f32 %v302, %v520
  %v522 = vpop.f32.mrb[0].mxu0
  %523 = vmatprep.mubr.bf16.mxu0 %v350
  %524 = vmatmul.mubr.bf16.gmra.mrb[0].mxu0 %v349
  %v525 = vpop.f32.mrb[0].mxu0
  %v526 = vadd.f32 %v302, %v525
  %v527 = vpop.f32.mrb[0].mxu0
  %v528 = vpop.f32.mrb[0].mxu0
  %v529 = vadd.f32 %v302, %v528
  %v530 = vpop.f32.mrb[0].mxu0
  %531 = vmatprep.mubr.bf16.mxu0 %v352
  %532 = vmatmul.mubr.bf16.gmra.mrb[0].mxu0 %v351
  %v533 = vpop.f32.mrb[0].mxu0
  %v534 = vadd.f32 %v302, %v533
  %v535 = vpop.f32.mrb[0].mxu0
  %v536 = vpop.f32.mrb[0].mxu0
  %v537 = vadd.f32 %v302, %v536
  %v538 = vpop.f32.mrb[0].mxu0
  %539 = vmatprep.mubr.bf16.mxu0 %v354
  %540 = vmatmul.mubr.bf16.gmra.mrb[0].mxu0 %v353
  %v541 = vpop.f32.mrb[0].mxu0
  %v542 = vadd.f32 %v302, %v541
  %v543 = vpop.f32.mrb[0].mxu0
  %v544 = vpop.f32.mrb[0].mxu0
  %v545 = vadd.f32 %v302, %v544
  %v546 = vpop.f32.mrb[0].mxu0
  %547 = vmatprep.mubr.bf16.mxu0 %v356
  %548 = vmatmul.mubr.bf16.gmra.mrb[0].mxu0 %v355
  %v549 = vpop.f32.mrb[0].mxu0
  %v550 = vadd.f32 %v302, %v549
  %v551 = vpop.f32.mrb[0].mxu0
  %v552 = vpop.f32.mrb[0].mxu0
  %v553 = vpop.f32.mrb[0].mxu0
  %554 = vdwg.mxu0
  %v555 = vmax.f32 %v502, 0.0
  %v556 = vmax.f32 %v505, 0.0
  %v557 = vmax.f32 %v510, 0.0
  %v558 = vmax.f32 %v513, 0.0
  %v559 = vmax.f32 %v518, 0.0
  %v560 = vmax.f32 %v521, 0.0
  %v561 = vmax.f32 %v526, 0.0
  %v562 = vmax.f32 %v529, 0.0
  %v563 = vmax.f32 %v534, 0.0
  %v564 = vmax.f32 %v537, 0.0
  %v565 = vmax.f32 %v542, 0.0
  %v566 = vmax.f32 %v545, 0.0
  %v567 = vmax.f32 %v550, 0.0
  %568 = vst [vmem:[#allocation2] sm:$0xff] %v555
  %569 = vst [vmem:[#allocation2 + $0x8] sm:$0xff] %v556
  %570 = vst [vmem:[#allocation2 + $0x10] sm:$0xff] %v557
  %571 = vst [vmem:[#allocation2 + $0x18] sm:$0xff] %v558
  %572 = vst [vmem:[#allocation2 + $0x20] sm:$0xff] %v559
  %573 = vst [vmem:[#allocation2 + $0x28] sm:$0xff] %v560
  %574 = vst [vmem:[#allocation2 + $0x30] sm:$0xff] %v561
  %575 = vst [vmem:[#allocation2 + $0x38] sm:$0xff] %v562
  %576 = vst [vmem:[#allocation2 + $0x40] sm:$0xff] %v563
  %577 = vst [vmem:[#allocation2 + $0x48] sm:$0xff] %v564
  %578 = vst [vmem:[#allocation2 + $0x50] sm:$0xff] %v565
  %579 = vst [vmem:[#allocation2 + $0x58] sm:$0xff] %v566
  %580 = vst [vmem:[#allocation2 + $0x60] sm:$0x3] %v567
  %v581 = vld [vmem:[#allocation2] sm:$0xff]
  %v582 = vld [vmem:[#allocation2 + $0x8] sm:$0x3f]
  %583 = vst [vmem:[#allocation3] sm:$0xff] %v581
  %584 = vst [vmem:[#allocation3 + $0x20] sm:$0x3f] %v582
  %v585 = vld [vmem:[#allocation2 + $0xe] sm:$0xff]
  %v586 = vld [vmem:[#allocation2 + $0x16] sm:$0x3f]
  %587 = vst [vmem:[#allocation3 + $0x8] sm:$0xff] %v585
  %588 = vst [vmem:[#allocation3 + $0x28] sm:$0x3f] %v586
  %v589 = vld [vmem:[#allocation2 + $0x1c] sm:$0xff]
  %v590 = vld [vmem:[#allocation2 + $0x24] sm:$0x3f]
  %591 = vst [vmem:[#allocation3 + $0x10] sm:$0xff] %v589
  %592 = vst [vmem:[#allocation3 + $0x30] sm:$0x3f] %v590
  %v593 = vld [vmem:[#allocation2 + $0x2a] sm:$0xff]
  %v594 = vld [vmem:[#allocation2 + $0x32] sm:$0x3f]
  %595 = vst [vmem:[#allocation3 + $0x18] sm:$0xff] %v593
  %596 = vst [vmem:[#allocation3 + $0x38] sm:$0x3f] %v594
  %v597 = vld [vmem:[#allocation2 + $0x1c] sm:$0xff]
  %v598 = vld [vmem:[#allocation2 + $0x24] sm:$0x3f]
  %vm601 = vcmask 1045504
  %v602 = vrot.slane %v597, 2
  %v603 = vrot.slane %v598, 2
  %v604 = vsel %vm601, %v602, %v603
  %608 = vst [vmem:[#allocation3 + $0x20] sm:$0xc0] %v602
  %609 = vst [vmem:[#allocation3 + $0x40] sm:$0xff] %v604
  %610 = vst [vmem:[#allocation3 + $0x60] sm:$0xf] %v603
  %v611 = vld [vmem:[#allocation2 + $0x2a] sm:$0xff]
  %v612 = vld [vmem:[#allocation2 + $0x32] sm:$0x3f]
  %v615 = vrot.slane %v611, 2
  %v616 = vrot.slane %v612, 2
  %v617 = vsel %vm601, %v615, %v616
  %621 = vst [vmem:[#allocation3 + $0x28] sm:$0xc0] %v615
  %622 = vst [vmem:[#allocation3 + $0x48] sm:$0xff] %v617
  %623 = vst [vmem:[#allocation3 + $0x68] sm:$0xf] %v616
  %v624 = vld [vmem:[#allocation2 + $0x38] sm:$0xff]
  %v625 = vld [vmem:[#allocation2 + $0x40] sm:$0x3f]
  %v628 = vrot.slane %v624, 2
  %v629 = vrot.slane %v625, 2
  %v630 = vsel %vm601, %v628, %v629
  %634 = vst [vmem:[#allocation3 + $0x30] sm:$0xc0] %v628
  %635 = vst [vmem:[#allocation3 + $0x50] sm:$0xff] %v630
  %636 = vst [vmem:[#allocation3 + $0x70] sm:$0xf] %v629
  %v637 = vld [vmem:[#allocation2 + $0x46] sm:$0xff]
  %v638 = vld [vmem:[#allocation2 + $0x4e] sm:$0x3f]
  %v641 = vrot.slane %v637, 2
  %v642 = vrot.slane %v638, 2
  %v643 = vsel %vm601, %v641, %v642
  %647 = vst [vmem:[#allocation3 + $0x38] sm:$0xc0] %v641
  %648 = vst [vmem:[#allocation3 + $0x58] sm:$0xff] %v643
  %649 = vst [vmem:[#allocation3 + $0x78] sm:$0xf] %v642
  %v650 = vld [vmem:[#allocation3] sm:$0xff]
  %v651 = vld [vmem:[#allocation3 + $0x8] sm:$0xff]
  %v652 = vld [vmem:[#allocation3 + $0x10] sm:$0xff]
  %v653 = vld [vmem:[#allocation3 + $0x18] sm:$0xff]
  %v654 = vld [vmem:[#allocation3 + $0x20] sm:$0xff]
  %v655 = vld [vmem:[#allocation3 + $0x28] sm:$0xff]
  %v656 = vld [vmem:[#allocation3 + $0x30] sm:$0xff]
  %v657 = vld [vmem:[#allocation3 + $0x38] sm:$0xff]
  %v658 = vld [vmem:[#allocation3 + $0x40] sm:$0xff]
  %v659 = vld [vmem:[#allocation3 + $0x48] sm:$0xff]
  %v660 = vld [vmem:[#allocation3 + $0x50] sm:$0xff]
  %v661 = vld [vmem:[#allocation3 + $0x58] sm:$0xff]
  %v662 = vld [vmem:[#allocation3 + $0x60] sm:$0xf]
  %v663 = vld [vmem:[#allocation3 + $0x68] sm:$0xf]
  %v664 = vld [vmem:[#allocation3 + $0x70] sm:$0xf]
  %v665 = vld [vmem:[#allocation3 + $0x78] sm:$0xf]
  %v666 = vpack.c.bf16 %v654, %v650
  %v667 = vpack.c.bf16 %v655, %v651
  %v668 = vpack.c.bf16 %v656, %v652
  %v669 = vpack.c.bf16 %v657, %v653
  %v670 = vpack.c.bf16 %v662, %v658
  %v671 = vpack.c.bf16 %v663, %v659
  %v672 = vpack.c.bf16 %v664, %v660
  %v673 = vpack.c.bf16 %v665, %v661
  %v674 = vld [vmem:[%s3] sm:$0xff]
  %v675 = vld [vmem:[%s3 + $0x8] sm:$0xff]
  %v676 = vld [vmem:[%s3 + $0x10] sm:$0xff]
  %v677 = vld [vmem:[%s3 + $0x18] sm:$0xff]
  %v678 = vld [vmem:[%s3 + $0x20] sm:$0xff]
  %v679 = vld [vmem:[%s3 + $0x28] sm:$0xff]
  %v680 = vld [vmem:[%s3 + $0x30] sm:$0xff]
  %v681 = vld [vmem:[%s3 + $0x38] sm:$0xff]
  %v682 = vld [vmem:[%s3 + $0x40] sm:$0xff]
  %v683 = vld [vmem:[%s3 + $0x48] sm:$0xff]
  %v684 = vld [vmem:[%s3 + $0x50] sm:$0xff]
  %v685 = vld [vmem:[%s3 + $0x58] sm:$0xff]
  %v686 = vld [vmem:[%s3 + $0x60] sm:$0xff]
  %v687 = vld [vmem:[%s3 + $0x68] sm:$0xff]
  %v688 = vld [vmem:[%s3 + $0x70] sm:$0xff]
  %v689 = vld [vmem:[%s3 + $0x78] sm:$0xff]
  %v690 = vld [vmem:[%s3 + $0x80] sm:$0xff]
  %v691 = vld [vmem:[%s3 + $0x88] sm:$0xff]
  %v692 = vld [vmem:[%s3 + $0x90] sm:$0xff]
  %v693 = vld [vmem:[%s3 + $0x98] sm:$0xff]
  %v694 = vld [vmem:[%s3 + $0xa0] sm:$0xff]
  %v695 = vld [vmem:[%s3 + $0xa8] sm:$0xff]
  %v696 = vld [vmem:[%s3 + $0xb0] sm:$0xff]
  %v697 = vld [vmem:[%s3 + $0xb8] sm:$0xff]
  %v698 = vld [vmem:[%s3 + $0xc0] sm:$0xff]
  %v699 = vld [vmem:[%s3 + $0xc8] sm:$0xff]
  %v700 = vld [vmem:[%s3 + $0xd0] sm:$0xff]
  %v701 = vld [vmem:[%s3 + $0xd8] sm:$0xff]
  %v702 = vld [vmem:[%s3 + $0xe0] sm:$0xff]
  %v703 = vld [vmem:[%s3 + $0xe8] sm:$0xff]
  %v704 = vld [vmem:[%s3 + $0xf0] sm:$0xff]
  %v705 = vld [vmem:[%s3 + $0xf8] sm:$0xff]
  %v706 = vld [vmem:[%s3 + $0x100] sm:$0xff]
  %v707 = vld [vmem:[%s3 + $0x108] sm:$0xff]
  %v708 = vld [vmem:[%s3 + $0x110] sm:$0xff]
  %v709 = vld [vmem:[%s3 + $0x118] sm:$0xff]
  %v710 = vld [vmem:[%s3 + $0x120] sm:$0xff]
  %v711 = vld [vmem:[%s3 + $0x128] sm:$0xff]
  %v712 = vld [vmem:[%s3 + $0x130] sm:$0xff]
  %v713 = vld [vmem:[%s3 + $0x138] sm:$0xff]
  %v714 = vld [vmem:[%s3 + $0x140] sm:$0xff]
  %v715 = vld [vmem:[%s3 + $0x148] sm:$0xff]
  %v716 = vld [vmem:[%s3 + $0x150] sm:$0xff]
  %v717 = vld [vmem:[%s3 + $0x158] sm:$0xff]
  %v718 = vld [vmem:[%s3 + $0x160] sm:$0xff]
  %v719 = vld [vmem:[%s3 + $0x168] sm:$0xff]
  %v720 = vld [vmem:[%s3 + $0x170] sm:$0xff]
  %v721 = vld [vmem:[%s3 + $0x178] sm:$0xff]
  %v722 = vld [vmem:[%s3 + $0x180] sm:$0xff]
  %v723 = vld [vmem:[%s3 + $0x188] sm:$0xff]
  %v724 = vld [vmem:[%s3 + $0x190] sm:$0xff]
  %v725 = vld [vmem:[%s3 + $0x198] sm:$0xff]
  %v726 = vld [vmem:[%s3 + $0x1a0] sm:$0xff]
  %v727 = vld [vmem:[%s3 + $0x1a8] sm:$0xff]
  %v728 = vld [vmem:[%s3 + $0x1b0] sm:$0xff]
  %v729 = vld [vmem:[%s3 + $0x1b8] sm:$0xff]
  %v730 = vld [vmem:[%s3 + $0x1c0] sm:$0xff]
  %v731 = vld [vmem:[%s3 + $0x1c8] sm:$0xff]
  %v732 = vld [vmem:[%s3 + $0x1d0] sm:$0xff]
  %v733 = vld [vmem:[%s3 + $0x1d8] sm:$0xff]
  %v734 = vld [vmem:[%s3 + $0x1e0] sm:$0xff]
  %v735 = vld [vmem:[%s3 + $0x1e8] sm:$0xff]
  %v736 = vld [vmem:[%s3 + $0x1f0] sm:$0xff]
  %v737 = vld [vmem:[%s3 + $0x1f8] sm:$0xff]
  %v738 = vld [vmem:[%s3 + $0x200] sm:$0xff]
  %v739 = vld [vmem:[%s3 + $0x208] sm:$0xff]
  %v740 = vld [vmem:[%s3 + $0x210] sm:$0xff]
  %v741 = vld [vmem:[%s3 + $0x218] sm:$0xff]
  %v742 = vld [vmem:[%s3 + $0x220] sm:$0xff]
  %v743 = vld [vmem:[%s3 + $0x228] sm:$0xff]
  %v744 = vld [vmem:[%s3 + $0x230] sm:$0xff]
  %v745 = vld [vmem:[%s3 + $0x238] sm:$0xff]
  %v746 = vld [vmem:[%s3 + $0x240] sm:$0xff]
  %v747 = vld [vmem:[%s3 + $0x248] sm:$0xff]
  %v748 = vld [vmem:[%s3 + $0x250] sm:$0xff]
  %v749 = vld [vmem:[%s3 + $0x258] sm:$0xff]
  %v750 = vld [vmem:[%s3 + $0x260] sm:$0xff]
  %v751 = vld [vmem:[%s3 + $0x268] sm:$0xff]
  %v752 = vld [vmem:[%s3 + $0x270] sm:$0xff]
  %v753 = vld [vmem:[%s3 + $0x278] sm:$0xff]
  %v754 = vld [vmem:[%s3 + $0x280] sm:$0xff]
  %v755 = vld [vmem:[%s3 + $0x288] sm:$0xff]
  %v756 = vld [vmem:[%s3 + $0x290] sm:$0xff]
  %v757 = vld [vmem:[%s3 + $0x298] sm:$0xff]
  %v758 = vld [vmem:[%s3 + $0x2a0] sm:$0xff]
  %v759 = vld [vmem:[%s3 + $0x2a8] sm:$0xff]
  %v760 = vld [vmem:[%s3 + $0x2b0] sm:$0xff]
  %v761 = vld [vmem:[%s3 + $0x2b8] sm:$0xff]
  %v762 = vld [vmem:[%s3 + $0x2c0] sm:$0xff]
  %v763 = vld [vmem:[%s3 + $0x2c8] sm:$0xff]
  %v764 = vld [vmem:[%s3 + $0x2d0] sm:$0xff]
  %v765 = vld [vmem:[%s3 + $0x2d8] sm:$0xff]
  %v766 = vld [vmem:[%s3 + $0x2e0] sm:$0xff]
  %v767 = vld [vmem:[%s3 + $0x2e8] sm:$0xff]
  %v768 = vld [vmem:[%s3 + $0x2f0] sm:$0xff]
  %v769 = vld [vmem:[%s3 + $0x2f8] sm:$0xff]
  %v770 = vld [vmem:[%s3 + $0x300] sm:$0xff]
  %v771 = vld [vmem:[%s3 + $0x308] sm:$0xff]
  %v772 = vld [vmem:[%s3 + $0x310] sm:$0xff]
  %v773 = vld [vmem:[%s3 + $0x318] sm:$0xff]
  %v774 = vld [vmem:[%s3 + $0x320] sm:$0xff]
  %v775 = vld [vmem:[%s3 + $0x328] sm:$0xff]
  %v776 = vld [vmem:[%s3 + $0x330] sm:$0xff]
  %v777 = vld [vmem:[%s3 + $0x338] sm:$0xff]
  %v778 = vld [vmem:[%s3 + $0x340] sm:$0xff]
  %v779 = vld [vmem:[%s3 + $0x348] sm:$0xff]
  %v780 = vld [vmem:[%s3 + $0x350] sm:$0xff]
  %v781 = vld [vmem:[%s3 + $0x358] sm:$0xff]
  %v782 = vld [vmem:[%s3 + $0x360] sm:$0xff]
  %v783 = vld [vmem:[%s3 + $0x368] sm:$0xff]
  %v784 = vld [vmem:[%s3 + $0x370] sm:$0xff]
  %v785 = vld [vmem:[%s3 + $0x378] sm:$0xff]
  %v786 = vld [vmem:[%s3 + $0x380] sm:$0xff]
  %v787 = vld [vmem:[%s3 + $0x388] sm:$0xff]
  %v788 = vld [vmem:[%s3 + $0x390] sm:$0xff]
  %v789 = vld [vmem:[%s3 + $0x398] sm:$0xff]
  %v790 = vld [vmem:[%s3 + $0x3a0] sm:$0xff]
  %v791 = vld [vmem:[%s3 + $0x3a8] sm:$0xff]
  %v792 = vld [vmem:[%s3 + $0x3b0] sm:$0xff]
  %v793 = vld [vmem:[%s3 + $0x3b8] sm:$0xff]
  %v794 = vld [vmem:[%s3 + $0x3c0] sm:$0xff]
  %v795 = vld [vmem:[%s3 + $0x3c8] sm:$0xff]
  %v796 = vld [vmem:[%s3 + $0x3d0] sm:$0xff]
  %v797 = vld [vmem:[%s3 + $0x3d8] sm:$0xff]
  %v798 = vld [vmem:[%s3 + $0x3e0] sm:$0xff]
  %v799 = vld [vmem:[%s3 + $0x3e8] sm:$0xff]
  %v800 = vld [vmem:[%s3 + $0x3f0] sm:$0xff]
  %v801 = vld [vmem:[%s3 + $0x3f8] sm:$0xff]
  %v930 = vunpack.c.l.b16 %v674
  %v931 = vunpack.c.h.b16 %v674
  %v932 = vunpack.c.l.b16 %v675
  %v933 = vunpack.c.h.b16 %v675
  %v934 = vunpack.c.l.b16 %v676
  %v935 = vunpack.c.h.b16 %v676
  %v936 = vunpack.c.l.b16 %v677
  %v937 = vunpack.c.h.b16 %v677
  %v938 = vunpack.c.l.b16 %v678
  %v939 = vunpack.c.h.b16 %v678
  %v940 = vunpack.c.l.b16 %v679
  %v941 = vunpack.c.h.b16 %v679
  %v942 = vunpack.c.l.b16 %v680
  %v943 = vunpack.c.h.b16 %v680
  %v944 = vunpack.c.l.b16 %v681
  %v945 = vunpack.c.h.b16 %v681
  %v946 = vunpack.c.l.b16 %v682
  %v947 = vunpack.c.h.b16 %v682
  %v948 = vunpack.c.l.b16 %v683
  %v949 = vunpack.c.h.b16 %v683
  %v950 = vunpack.c.l.b16 %v684
  %v951 = vunpack.c.h.b16 %v684
  %v952 = vunpack.c.l.b16 %v685
  %v953 = vunpack.c.h.b16 %v685
  %v954 = vunpack.c.l.b16 %v686
  %v955 = vunpack.c.h.b16 %v686
  %v956 = vunpack.c.l.b16 %v687
  %v957 = vunpack.c.h.b16 %v687
  %v958 = vunpack.c.l.b16 %v688
  %v959 = vunpack.c.h.b16 %v688
  %v960 = vunpack.c.l.b16 %v689
  %v961 = vunpack.c.h.b16 %v689
  %v962 = vunpack.c.l.b16 %v690
  %v963 = vunpack.c.h.b16 %v690
  %v964 = vunpack.c.l.b16 %v691
  %v965 = vunpack.c.h.b16 %v691
  %v966 = vunpack.c.l.b16 %v692
  %v967 = vunpack.c.h.b16 %v692
  %v968 = vunpack.c.l.b16 %v693
  %v969 = vunpack.c.h.b16 %v693
  %v970 = vunpack.c.l.b16 %v694
  %v971 = vunpack.c.h.b16 %v694
  %v972 = vunpack.c.l.b16 %v695
  %v973 = vunpack.c.h.b16 %v695
  %v974 = vunpack.c.l.b16 %v696
  %v975 = vunpack.c.h.b16 %v696
  %v976 = vunpack.c.l.b16 %v697
  %v977 = vunpack.c.h.b16 %v697
  %v978 = vunpack.c.l.b16 %v698
  %v979 = vunpack.c.h.b16 %v698
  %v980 = vunpack.c.l.b16 %v699
  %v981 = vunpack.c.h.b16 %v699
  %v982 = vunpack.c.l.b16 %v700
  %v983 = vunpack.c.h.b16 %v700
  %v984 = vunpack.c.l.b16 %v701
  %v985 = vunpack.c.h.b16 %v701
  %v986 = vunpack.c.l.b16 %v702
  %v987 = vunpack.c.h.b16 %v702
  %v988 = vunpack.c.l.b16 %v703
  %v989 = vunpack.c.h.b16 %v703
  %v990 = vunpack.c.l.b16 %v704
  %v991 = vunpack.c.h.b16 %v704
  %v992 = vunpack.c.l.b16 %v705
  %v993 = vunpack.c.h.b16 %v705
  %v994 = vunpack.c.l.b16 %v706
  %v995 = vunpack.c.h.b16 %v706
  %v996 = vunpack.c.l.b16 %v707
  %v997 = vunpack.c.h.b16 %v707
  %v998 = vunpack.c.l.b16 %v708
  %v999 = vunpack.c.h.b16 %v708
  %v1000 = vunpack.c.l.b16 %v709
  %v1001 = vunpack.c.h.b16 %v709
  %v1002 = vunpack.c.l.b16 %v710
  %v1003 = vunpack.c.h.b16 %v710
  %v1004 = vunpack.c.l.b16 %v711
  %v1005 = vunpack.c.h.b16 %v711
  %v1006 = vunpack.c.l.b16 %v712
  %v1007 = vunpack.c.h.b16 %v712
  %v1008 = vunpack.c.l.b16 %v713
  %v1009 = vunpack.c.h.b16 %v713
  %v1010 = vunpack.c.l.b16 %v714
  %v1011 = vunpack.c.h.b16 %v714
  %v1012 = vunpack.c.l.b16 %v715
  %v1013 = vunpack.c.h.b16 %v715
  %v1014 = vunpack.c.l.b16 %v716
  %v1015 = vunpack.c.h.b16 %v716
  %v1016 = vunpack.c.l.b16 %v717
  %v1017 = vunpack.c.h.b16 %v717
  %v1018 = vunpack.c.l.b16 %v718
  %v1019 = vunpack.c.h.b16 %v718
  %v1020 = vunpack.c.l.b16 %v719
  %v1021 = vunpack.c.h.b16 %v719
  %v1022 = vunpack.c.l.b16 %v720
  %v1023 = vunpack.c.h.b16 %v720
  %v1024 = vunpack.c.l.b16 %v721
  %v1025 = vunpack.c.h.b16 %v721
  %v1026 = vunpack.c.l.b16 %v722
  %v1027 = vunpack.c.h.b16 %v722
  %v1028 = vunpack.c.l.b16 %v723
  %v1029 = vunpack.c.h.b16 %v723
  %v1030 = vunpack.c.l.b16 %v724
  %v1031 = vunpack.c.h.b16 %v724
  %v1032 = vunpack.c.l.b16 %v725
  %v1033 = vunpack.c.h.b16 %v725
  %v1034 = vunpack.c.l.b16 %v726
  %v1035 = vunpack.c.h.b16 %v726
  %v1036 = vunpack.c.l.b16 %v727
  %v1037 = vunpack.c.h.b16 %v727
  %v1038 = vunpack.c.l.b16 %v728
  %v1039 = vunpack.c.h.b16 %v728
  %v1040 = vunpack.c.l.b16 %v729
  %v1041 = vunpack.c.h.b16 %v729
  %v1042 = vunpack.c.l.b16 %v730
  %v1043 = vunpack.c.h.b16 %v730
  %v1044 = vunpack.c.l.b16 %v731
  %v1045 = vunpack.c.h.b16 %v731
  %v1046 = vunpack.c.l.b16 %v732
  %v1047 = vunpack.c.h.b16 %v732
  %v1048 = vunpack.c.l.b16 %v733
  %v1049 = vunpack.c.h.b16 %v733
  %v1050 = vunpack.c.l.b16 %v734
  %v1051 = vunpack.c.h.b16 %v734
  %v1052 = vunpack.c.l.b16 %v735
  %v1053 = vunpack.c.h.b16 %v735
  %v1054 = vunpack.c.l.b16 %v736
  %v1055 = vunpack.c.h.b16 %v736
  %v1056 = vunpack.c.l.b16 %v737
  %v1057 = vunpack.c.h.b16 %v737
  %v1058 = vunpack.c.l.b16 %v738
  %v1059 = vunpack.c.h.b16 %v738
  %v1060 = vunpack.c.l.b16 %v739
  %v1061 = vunpack.c.h.b16 %v739
  %v1062 = vunpack.c.l.b16 %v740
  %v1063 = vunpack.c.h.b16 %v740
  %v1064 = vunpack.c.l.b16 %v741
  %v1065 = vunpack.c.h.b16 %v741
  %v1066 = vunpack.c.l.b16 %v742
  %v1067 = vunpack.c.h.b16 %v742
  %v1068 = vunpack.c.l.b16 %v743
  %v1069 = vunpack.c.h.b16 %v743
  %v1070 = vunpack.c.l.b16 %v744
  %v1071 = vunpack.c.h.b16 %v744
  %v1072 = vunpack.c.l.b16 %v745
  %v1073 = vunpack.c.h.b16 %v745
  %v1074 = vunpack.c.l.b16 %v746
  %v1075 = vunpack.c.h.b16 %v746
  %v1076 = vunpack.c.l.b16 %v747
  %v1077 = vunpack.c.h.b16 %v747
  %v1078 = vunpack.c.l.b16 %v748
  %v1079 = vunpack.c.h.b16 %v748
  %v1080 = vunpack.c.l.b16 %v749
  %v1081 = vunpack.c.h.b16 %v749
  %v1082 = vunpack.c.l.b16 %v750
  %v1083 = vunpack.c.h.b16 %v750
  %v1084 = vunpack.c.l.b16 %v751
  %v1085 = vunpack.c.h.b16 %v751
  %v1086 = vunpack.c.l.b16 %v752
  %v1087 = vunpack.c.h.b16 %v752
  %v1088 = vunpack.c.l.b16 %v753
  %v1089 = vunpack.c.h.b16 %v753
  %v1090 = vunpack.c.l.b16 %v754
  %v1091 = vunpack.c.h.b16 %v754
  %v1092 = vunpack.c.l.b16 %v755
  %v1093 = vunpack.c.h.b16 %v755
  %v1094 = vunpack.c.l.b16 %v756
  %v1095 = vunpack.c.h.b16 %v756
  %v1096 = vunpack.c.l.b16 %v757
  %v1097 = vunpack.c.h.b16 %v757
  %v1098 = vunpack.c.l.b16 %v758
  %v1099 = vunpack.c.h.b16 %v758
  %v1100 = vunpack.c.l.b16 %v759
  %v1101 = vunpack.c.h.b16 %v759
  %v1102 = vunpack.c.l.b16 %v760
  %v1103 = vunpack.c.h.b16 %v760
  %v1104 = vunpack.c.l.b16 %v761
  %v1105 = vunpack.c.h.b16 %v761
  %v1106 = vunpack.c.l.b16 %v762
  %v1107 = vunpack.c.h.b16 %v762
  %v1108 = vunpack.c.l.b16 %v763
  %v1109 = vunpack.c.h.b16 %v763
  %v1110 = vunpack.c.l.b16 %v764
  %v1111 = vunpack.c.h.b16 %v764
  %v1112 = vunpack.c.l.b16 %v765
  %v1113 = vunpack.c.h.b16 %v765
  %v1114 = vunpack.c.l.b16 %v766
  %v1115 = vunpack.c.h.b16 %v766
  %v1116 = vunpack.c.l.b16 %v767
  %v1117 = vunpack.c.h.b16 %v767
  %v1118 = vunpack.c.l.b16 %v768
  %v1119 = vunpack.c.h.b16 %v768
  %v1120 = vunpack.c.l.b16 %v769
  %v1121 = vunpack.c.h.b16 %v769
  %v1122 = vunpack.c.l.b16 %v770
  %v1123 = vunpack.c.h.b16 %v770
  %v1124 = vunpack.c.l.b16 %v771
  %v1125 = vunpack.c.h.b16 %v771
  %v1126 = vunpack.c.l.b16 %v772
  %v1127 = vunpack.c.h.b16 %v772
  %v1128 = vunpack.c.l.b16 %v773
  %v1129 = vunpack.c.h.b16 %v773
  %v1130 = vunpack.c.l.b16 %v774
  %v1131 = vunpack.c.h.b16 %v774
  %v1132 = vunpack.c.l.b16 %v775
  %v1133 = vunpack.c.h.b16 %v775
  %v1134 = vunpack.c.l.b16 %v776
  %v1135 = vunpack.c.h.b16 %v776
  %v1136 = vunpack.c.l.b16 %v777
  %v1137 = vunpack.c.h.b16 %v777
  %v1138 = vunpack.c.l.b16 %v778
  %v1139 = vunpack.c.h.b16 %v778
  %v1140 = vunpack.c.l.b16 %v779
  %v1141 = vunpack.c.h.b16 %v779
  %v1142 = vunpack.c.l.b16 %v780
  %v1143 = vunpack.c.h.b16 %v780
  %v1144 = vunpack.c.l.b16 %v781
  %v1145 = vunpack.c.h.b16 %v781
  %v1146 = vunpack.c.l.b16 %v782
  %v1147 = vunpack.c.h.b16 %v782
  %v1148 = vunpack.c.l.b16 %v783
  %v1149 = vunpack.c.h.b16 %v783
  %v1150 = vunpack.c.l.b16 %v784
  %v1151 = vunpack.c.h.b16 %v784
  %v1152 = vunpack.c.l.b16 %v785
  %v1153 = vunpack.c.h.b16 %v785
  %v1154 = vunpack.c.l.b16 %v786
  %v1155 = vunpack.c.h.b16 %v786
  %v1156 = vunpack.c.l.b16 %v787
  %v1157 = vunpack.c.h.b16 %v787
  %v1158 = vunpack.c.l.b16 %v788
  %v1159 = vunpack.c.h.b16 %v788
  %v1160 = vunpack.c.l.b16 %v789
  %v1161 = vunpack.c.h.b16 %v789
  %v1162 = vunpack.c.l.b16 %v790
  %v1163 = vunpack.c.h.b16 %v790
  %v1164 = vunpack.c.l.b16 %v791
  %v1165 = vunpack.c.h.b16 %v791
  %v1166 = vunpack.c.l.b16 %v792
  %v1167 = vunpack.c.h.b16 %v792
  %v1168 = vunpack.c.l.b16 %v793
  %v1169 = vunpack.c.h.b16 %v793
  %v1170 = vunpack.c.l.b16 %v794
  %v1171 = vunpack.c.h.b16 %v794
  %v1172 = vunpack.c.l.b16 %v795
  %v1173 = vunpack.c.h.b16 %v795
  %v1174 = vunpack.c.l.b16 %v796
  %v1175 = vunpack.c.h.b16 %v796
  %v1176 = vunpack.c.l.b16 %v797
  %v1177 = vunpack.c.h.b16 %v797
  %v1178 = vunpack.c.l.b16 %v798
  %v1179 = vunpack.c.h.b16 %v798
  %v1180 = vunpack.c.l.b16 %v799
  %v1181 = vunpack.c.h.b16 %v799
  %v1182 = vunpack.c.l.b16 %v800
  %v1183 = vunpack.c.h.b16 %v800
  %v1184 = vunpack.c.l.b16 %v801
  %v1185 = vunpack.c.h.b16 %v801
  %v1186 = vpack.c.b16 %v934, %v930
  %v1187 = vpack.c.b16 %v935, %v931
  %v1188 = vpack.c.b16 %v936, %v932
  %v1189 = vpack.c.b16 %v937, %v933
  %v1190 = vpack.c.b16 %v942, %v938
  %v1191 = vpack.c.b16 %v943, %v939
  %v1192 = vpack.c.b16 %v944, %v940
  %v1193 = vpack.c.b16 %v945, %v941
  %v1194 = vpack.c.b16 %v950, %v946
  %v1195 = vpack.c.b16 %v951, %v947
  %v1196 = vpack.c.b16 %v952, %v948
  %v1197 = vpack.c.b16 %v953, %v949
  %v1198 = vpack.c.b16 %v958, %v954
  %v1199 = vpack.c.b16 %v959, %v955
  %v1200 = vpack.c.b16 %v960, %v956
  %v1201 = vpack.c.b16 %v961, %v957
  %v1202 = vpack.c.b16 %v966, %v962
  %v1203 = vpack.c.b16 %v967, %v963
  %v1204 = vpack.c.b16 %v968, %v964
  %v1205 = vpack.c.b16 %v969, %v965
  %v1206 = vpack.c.b16 %v974, %v970
  %v1207 = vpack.c.b16 %v975, %v971
  %v1208 = vpack.c.b16 %v976, %v972
  %v1209 = vpack.c.b16 %v977, %v973
  %v1210 = vpack.c.b16 %v982, %v978
  %v1211 = vpack.c.b16 %v983, %v979
  %v1212 = vpack.c.b16 %v984, %v980
  %v1213 = vpack.c.b16 %v985, %v981
  %v1214 = vpack.c.b16 %v990, %v986
  %v1215 = vpack.c.b16 %v991, %v987
  %v1216 = vpack.c.b16 %v992, %v988
  %v1217 = vpack.c.b16 %v993, %v989
  %v1218 = vpack.c.b16 %v998, %v994
  %v1219 = vpack.c.b16 %v999, %v995
  %v1220 = vpack.c.b16 %v1000, %v996
  %v1221 = vpack.c.b16 %v1001, %v997
  %v1222 = vpack.c.b16 %v1006, %v1002
  %v1223 = vpack.c.b16 %v1007, %v1003
  %v1224 = vpack.c.b16 %v1008, %v1004
  %v1225 = vpack.c.b16 %v1009, %v1005
  %v1226 = vpack.c.b16 %v1014, %v1010
  %v1227 = vpack.c.b16 %v1015, %v1011
  %v1228 = vpack.c.b16 %v1016, %v1012
  %v1229 = vpack.c.b16 %v1017, %v1013
  %v1230 = vpack.c.b16 %v1022, %v1018
  %v1231 = vpack.c.b16 %v1023, %v1019
  %v1232 = vpack.c.b16 %v1024, %v1020
  %v1233 = vpack.c.b16 %v1025, %v1021
  %v1234 = vpack.c.b16 %v1030, %v1026
  %v1235 = vpack.c.b16 %v1031, %v1027
  %v1236 = vpack.c.b16 %v1032, %v1028
  %v1237 = vpack.c.b16 %v1033, %v1029
  %v1238 = vpack.c.b16 %v1038, %v1034
  %v1239 = vpack.c.b16 %v1039, %v1035
  %v1240 = vpack.c.b16 %v1040, %v1036
  %v1241 = vpack.c.b16 %v1041, %v1037
  %v1242 = vpack.c.b16 %v1046, %v1042
  %v1243 = vpack.c.b16 %v1047, %v1043
  %v1244 = vpack.c.b16 %v1048, %v1044
  %v1245 = vpack.c.b16 %v1049, %v1045
  %v1246 = vpack.c.b16 %v1054, %v1050
  %v1247 = vpack.c.b16 %v1055, %v1051
  %v1248 = vpack.c.b16 %v1056, %v1052
  %v1249 = vpack.c.b16 %v1057, %v1053
  %v1250 = vpack.c.b16 %v1062, %v1058
  %v1251 = vpack.c.b16 %v1063, %v1059
  %v1252 = vpack.c.b16 %v1064, %v1060
  %v1253 = vpack.c.b16 %v1065, %v1061
  %v1254 = vpack.c.b16 %v1070, %v1066
  %v1255 = vpack.c.b16 %v1071, %v1067
  %v1256 = vpack.c.b16 %v1072, %v1068
  %v1257 = vpack.c.b16 %v1073, %v1069
  %v1258 = vpack.c.b16 %v1078, %v1074
  %v1259 = vpack.c.b16 %v1079, %v1075
  %v1260 = vpack.c.b16 %v1080, %v1076
  %v1261 = vpack.c.b16 %v1081, %v1077
  %v1262 = vpack.c.b16 %v1086, %v1082
  %v1263 = vpack.c.b16 %v1087, %v1083
  %v1264 = vpack.c.b16 %v1088, %v1084
  %v1265 = vpack.c.b16 %v1089, %v1085
  %v1266 = vpack.c.b16 %v1094, %v1090
  %v1267 = vpack.c.b16 %v1095, %v1091
  %v1268 = vpack.c.b16 %v1096, %v1092
  %v1269 = vpack.c.b16 %v1097, %v1093
  %v1270 = vpack.c.b16 %v1102, %v1098
  %v1271 = vpack.c.b16 %v1103, %v1099
  %v1272 = vpack.c.b16 %v1104, %v1100
  %v1273 = vpack.c.b16 %v1105, %v1101
  %v1274 = vpack.c.b16 %v1110, %v1106
  %v1275 = vpack.c.b16 %v1111, %v1107
  %v1276 = vpack.c.b16 %v1112, %v1108
  %v1277 = vpack.c.b16 %v1113, %v1109
  %v1278 = vpack.c.b16 %v1118, %v1114
  %v1279 = vpack.c.b16 %v1119, %v1115
  %v1280 = vpack.c.b16 %v1120, %v1116
  %v1281 = vpack.c.b16 %v1121, %v1117
  %v1282 = vpack.c.b16 %v1126, %v1122
  %v1283 = vpack.c.b16 %v1127, %v1123
  %v1284 = vpack.c.b16 %v1128, %v1124
  %v1285 = vpack.c.b16 %v1129, %v1125
  %v1286 = vpack.c.b16 %v1134, %v1130
  %v1287 = vpack.c.b16 %v1135, %v1131
  %v1288 = vpack.c.b16 %v1136, %v1132
  %v1289 = vpack.c.b16 %v1137, %v1133
  %v1290 = vpack.c.b16 %v1142, %v1138
  %v1291 = vpack.c.b16 %v1143, %v1139
  %v1292 = vpack.c.b16 %v1144, %v1140
  %v1293 = vpack.c.b16 %v1145, %v1141
  %v1294 = vpack.c.b16 %v1150, %v1146
  %v1295 = vpack.c.b16 %v1151, %v1147
  %v1296 = vpack.c.b16 %v1152, %v1148
  %v1297 = vpack.c.b16 %v1153, %v1149
  %v1298 = vpack.c.b16 %v1158, %v1154
  %v1299 = vpack.c.b16 %v1159, %v1155
  %v1300 = vpack.c.b16 %v1160, %v1156
  %v1301 = vpack.c.b16 %v1161, %v1157
  %v1302 = vpack.c.b16 %v1166, %v1162
  %v1303 = vpack.c.b16 %v1167, %v1163
  %v1304 = vpack.c.b16 %v1168, %v1164
  %v1305 = vpack.c.b16 %v1169, %v1165
  %v1306 = vpack.c.b16 %v1174, %v1170
  %v1307 = vpack.c.b16 %v1175, %v1171
  %v1308 = vpack.c.b16 %v1176, %v1172
  %v1309 = vpack.c.b16 %v1177, %v1173
  %v1310 = vpack.c.b16 %v1182, %v1178
  %v1311 = vpack.c.b16 %v1183, %v1179
  %v1312 = vpack.c.b16 %v1184, %v1180
  %v1313 = vpack.c.b16 %v1185, %v1181
  %1442 = vmatprep.subr.bf16.mxu0 %v1187
  %1443 = vmatpush1.bf16.msra.mxu0 %v1186
  %1444 = vmatprep.subr.bf16.mxu0 %v1191
  %1445 = vmatpush1.bf16.msra.mxu0 %v1190
  %1446 = vmatprep.subr.bf16.mxu0 %v1195
  %1447 = vmatpush1.bf16.msra.mxu0 %v1194
  %1448 = vmatprep.subr.bf16.mxu0 %v1199
  %1449 = vmatpush1.bf16.msra.mxu0 %v1198
  %1450 = vmatprep.subr.bf16.mxu0 %v1203
  %1451 = vmatpush1.bf16.msra.mxu0 %v1202
  %1452 = vmatprep.subr.bf16.mxu0 %v1207
  %1453 = vmatpush1.bf16.msra.mxu0 %v1206
  %1454 = vmatprep.subr.bf16.mxu0 %v1211
  %1455 = vmatpush1.bf16.msra.mxu0 %v1210
  %1456 = vmatprep.subr.bf16.mxu0 %v1215
  %1457 = vmatpush1.bf16.msra.mxu0 %v1214
  %1458 = vmatprep.subr.bf16.mxu0 %v1219
  %1459 = vmatpush1.bf16.msra.mxu0 %v1218
  %1460 = vmatprep.subr.bf16.mxu0 %v1223
  %1461 = vmatpush1.bf16.msra.mxu0 %v1222
  %1462 = vmatprep.subr.bf16.mxu0 %v1227
  %1463 = vmatpush1.bf16.msra.mxu0 %v1226
  %1464 = vmatprep.subr.bf16.mxu0 %v1231
  %1465 = vmatpush1.bf16.msra.mxu0 %v1230
  %1466 = vmatprep.subr.bf16.mxu0 %v1235
  %1467 = vmatpush1.bf16.msra.mxu0 %v1234
  %1468 = vmatprep.subr.bf16.mxu0 %v1239
  %1469 = vmatpush1.bf16.msra.mxu0 %v1238
  %1470 = vmatprep.subr.bf16.mxu0 %v1243
  %1471 = vmatpush1.bf16.msra.mxu0 %v1242
  %1472 = vmatprep.subr.bf16.mxu0 %v1247
  %1473 = vmatpush1.bf16.msra.mxu0 %v1246
  %1474 = vmatprep.mubr.bf16.mxu0 %v667
  %1475 = vmatmul.mubr.bf16.gmra.mrb[0].mxu0 %v666
  %v1476 = vpop.f32.mrb[0].mxu0
  %v1477 = vadd.f32 0.0, %v1476
  %v1478 = vpop.f32.mrb[0].mxu0
  %v1479 = vadd.f32 0.0, %v1478
  %v1480 = vpop.f32.mrb[0].mxu0
  %v1481 = vadd.f32 0.0, %v1480
  %v1482 = vpop.f32.mrb[0].mxu0
  %1483 = vmatprep.mubr.bf16.mxu0 %v671
  %1484 = vmatmul.mubr.bf16.gmra.mrb[0].mxu0 %v670
  %v1485 = vpop.f32.mrb[0].mxu0
  %v1486 = vadd.f32 0.0, %v1485
  %v1487 = vpop.f32.mrb[0].mxu0
  %v1488 = vadd.f32 0.0, %v1487
  %v1489 = vpop.f32.mrb[0].mxu0
  %v1490 = vpop.f32.mrb[0].mxu0
  %1491 = vdwg.mxu0
  %1492 = vmatprep.subr.bf16.mxu0 %v1251
  %1493 = vmatpush1.bf16.msra.mxu0 %v1250
  %1494 = vmatprep.subr.bf16.mxu0 %v1255
  %1495 = vmatpush1.bf16.msra.mxu0 %v1254
  %1496 = vmatprep.subr.bf16.mxu0 %v1259
  %1497 = vmatpush1.bf16.msra.mxu0 %v1258
  %1498 = vmatprep.subr.bf16.mxu0 %v1263
  %1499 = vmatpush1.bf16.msra.mxu0 %v1262
  %1500 = vmatprep.subr.bf16.mxu0 %v1267
  %1501 = vmatpush1.bf16.msra.mxu0 %v1266
  %1502 = vmatprep.subr.bf16.mxu0 %v1271
  %1503 = vmatpush1.bf16.msra.mxu0 %v1270
  %1504 = vmatprep.subr.bf16.mxu0 %v1275
  %1505 = vmatpush1.bf16.msra.mxu0 %v1274
  %1506 = vmatprep.subr.bf16.mxu0 %v1279
  %1507 = vmatpush1.bf16.msra.mxu0 %v1278
  %1508 = vmatprep.subr.bf16.mxu0 %v1283
  %1509 = vmatpush1.bf16.msra.mxu0 %v1282
  %1510 = vmatprep.subr.bf16.mxu0 %v1287
  %1511 = vmatpush1.bf16.msra.mxu0 %v1286
  %1512 = vmatprep.subr.bf16.mxu0 %v1291
  %1513 = vmatpush1.bf16.msra.mxu0 %v1290
  %1514 = vmatprep.subr.bf16.mxu0 %v1295
  %1515 = vmatpush1.bf16.msra.mxu0 %v1294
  %1516 = vmatprep.subr.bf16.mxu0 %v1299
  %1517 = vmatpush1.bf16.msra.mxu0 %v1298
  %1518 = vmatprep.subr.bf16.mxu0 %v1303
  %1519 = vmatpush1.bf16.msra.mxu0 %v1302
  %1520 = vmatprep.subr.bf16.mxu0 %v1307
  %1521 = vmatpush1.bf16.msra.mxu0 %v1306
  %1522 = vmatprep.subr.bf16.mxu0 %v1311
  %1523 = vmatpush1.bf16.msra.mxu0 %v1310
  %1524 = vmatprep.mubr.bf16.mxu0 %v669
  %1525 = vmatmul.mubr.bf16.gmra.mrb[0].mxu0 %v668
  %v1526 = vpop.f32.mrb[0].mxu0
  %v1527 = vadd.f32 %v1477, %v1526
  %v1528 = vpop.f32.mrb[0].mxu0
  %v1529 = vadd.f32 %v1479, %v1528
  %v1530 = vpop.f32.mrb[0].mxu0
  %v1531 = vadd.f32 %v1481, %v1530
  %v1532 = vpop.f32.mrb[0].mxu0
  %1533 = vmatprep.mubr.bf16.mxu0 %v673
  %1534 = vmatmul.mubr.bf16.gmra.mrb[0].mxu0 %v672
  %v1535 = vpop.f32.mrb[0].mxu0
  %v1536 = vadd.f32 %v1486, %v1535
  %v1537 = vpop.f32.mrb[0].mxu0
  %v1538 = vadd.f32 %v1488, %v1537
  %v1539 = vpop.f32.mrb[0].mxu0
  %v1540 = vpop.f32.mrb[0].mxu0
  %1541 = vdwg.mxu0
  %1542 = vmatprep.subr.bf16.mxu0 %v1189
  %1543 = vmatpush1.bf16.msra.mxu0 %v1188
  %1544 = vmatprep.subr.bf16.mxu0 %v1193
  %1545 = vmatpush1.bf16.msra.mxu0 %v1192
  %1546 = vmatprep.subr.bf16.mxu0 %v1197
  %1547 = vmatpush1.bf16.msra.mxu0 %v1196
  %1548 = vmatprep.subr.bf16.mxu0 %v1201
  %1549 = vmatpush1.bf16.msra.mxu0 %v1200
  %1550 = vmatprep.subr.bf16.mxu0 %v1205
  %1551 = vmatpush1.bf16.msra.mxu0 %v1204
  %1552 = vmatprep.subr.bf16.mxu0 %v1209
  %1553 = vmatpush1.bf16.msra.mxu0 %v1208
  %1554 = vmatprep.subr.bf16.mxu0 %v1213
  %1555 = vmatpush1.bf16.msra.mxu0 %v1212
  %1556 = vmatprep.subr.bf16.mxu0 %v1217
  %1557 = vmatpush1.bf16.msra.mxu0 %v1216
  %1558 = vmatprep.subr.bf16.mxu0 %v1221
  %1559 = vmatpush1.bf16.msra.mxu0 %v1220
  %1560 = vmatprep.subr.bf16.mxu0 %v1225
  %1561 = vmatpush1.bf16.msra.mxu0 %v1224
  %1562 = vmatprep.subr.bf16.mxu0 %v1229
  %1563 = vmatpush1.bf16.msra.mxu0 %v1228
  %1564 = vmatprep.subr.bf16.mxu0 %v1233
  %1565 = vmatpush1.bf16.msra.mxu0 %v1232
  %1566 = vmatprep.subr.bf16.mxu0 %v1237
  %1567 = vmatpush1.bf16.msra.mxu0 %v1236
  %1568 = vmatprep.subr.bf16.mxu0 %v1241
  %1569 = vmatpush1.bf16.msra.mxu0 %v1240
  %1570 = vmatprep.subr.bf16.mxu0 %v1245
  %1571 = vmatpush1.bf16.msra.mxu0 %v1244
  %1572 = vmatprep.subr.bf16.mxu0 %v1249
  %1573 = vmatpush1.bf16.msra.mxu0 %v1248
  %1574 = vmatprep.mubr.bf16.mxu0 %v667
  %1575 = vmatmul.mubr.bf16.gmra.mrb[0].mxu0 %v666
  %v1576 = vpop.f32.mrb[0].mxu0
  %v1577 = vadd.f32 0.0, %v1576
  %v1578 = vpop.f32.mrb[0].mxu0
  %v1579 = vadd.f32 0.0, %v1578
  %v1580 = vpop.f32.mrb[0].mxu0
  %v1581 = vadd.f32 0.0, %v1580
  %v1582 = vpop.f32.mrb[0].mxu0
  %v1583 = vadd.f32 0.0, %v1582
  %1584 = vmatprep.mubr.bf16.mxu0 %v671
  %1585 = vmatmul.mubr.bf16.gmra.mrb[0].mxu0 %v670
  %v1586 = vpop.f32.mrb[0].mxu0
  %v1587 = vadd.f32 0.0, %v1586
  %v1588 = vpop.f32.mrb[0].mxu0
  %v1589 = vadd.f32 0.0, %v1588
  %v1590 = vpop.f32.mrb[0].mxu0
  %v1591 = vpop.f32.mrb[0].mxu0
  %v1592 = vadd.f32 0.0, %v1591
  %1593 = vdwg.mxu0
  %1594 = vmatprep.subr.bf16.mxu0 %v1253
  %1595 = vmatpush1.bf16.msra.mxu0 %v1252
  %1596 = vmatprep.subr.bf16.mxu0 %v1257
  %1597 = vmatpush1.bf16.msra.mxu0 %v1256
  %1598 = vmatprep.subr.bf16.mxu0 %v1261
  %1599 = vmatpush1.bf16.msra.mxu0 %v1260
  %1600 = vmatprep.subr.bf16.mxu0 %v1265
  %1601 = vmatpush1.bf16.msra.mxu0 %v1264
  %1602 = vmatprep.subr.bf16.mxu0 %v1269
  %1603 = vmatpush1.bf16.msra.mxu0 %v1268
  %1604 = vmatprep.subr.bf16.mxu0 %v1273
  %1605 = vmatpush1.bf16.msra.mxu0 %v1272
  %1606 = vmatprep.subr.bf16.mxu0 %v1277
  %1607 = vmatpush1.bf16.msra.mxu0 %v1276
  %1608 = vmatprep.subr.bf16.mxu0 %v1281
  %1609 = vmatpush1.bf16.msra.mxu0 %v1280
  %1610 = vmatprep.subr.bf16.mxu0 %v1285
  %1611 = vmatpush1.bf16.msra.mxu0 %v1284
  %1612 = vmatprep.subr.bf16.mxu0 %v1289
  %1613 = vmatpush1.bf16.msra.mxu0 %v1288
  %1614 = vmatprep.subr.bf16.mxu0 %v1293
  %1615 = vmatpush1.bf16.msra.mxu0 %v1292
  %1616 = vmatprep.subr.bf16.mxu0 %v1297
  %1617 = vmatpush1.bf16.msra.mxu0 %v1296
  %1618 = vmatprep.subr.bf16.mxu0 %v1301
  %1619 = vmatpush1.bf16.msra.mxu0 %v1300
  %1620 = vmatprep.subr.bf16.mxu0 %v1305
  %1621 = vmatpush1.bf16.msra.mxu0 %v1304
  %1622 = vmatprep.subr.bf16.mxu0 %v1309
  %1623 = vmatpush1.bf16.msra.mxu0 %v1308
  %1624 = vmatprep.subr.bf16.mxu0 %v1313
  %1625 = vmatpush1.bf16.msra.mxu0 %v1312
  %1626 = vmatprep.mubr.bf16.mxu0 %v669
  %1627 = vmatmul.mubr.bf16.gmra.mrb[0].mxu0 %v668
  %v1628 = vpop.f32.mrb[0].mxu0
  %v1629 = vadd.f32 %v1577, %v1628
  %v1630 = vpop.f32.mrb[0].mxu0
  %v1631 = vadd.f32 %v1579, %v1630
  %v1632 = vpop.f32.mrb[0].mxu0
  %v1633 = vadd.f32 %v1581, %v1632
  %v1634 = vpop.f32.mrb[0].mxu0
  %v1635 = vadd.f32 %v1583, %v1634
  %1636 = vmatprep.mubr.bf16.mxu0 %v673
  %1637 = vmatmul.mubr.bf16.gmra.mrb[0].mxu0 %v672
  %v1638 = vpop.f32.mrb[0].mxu0
  %v1639 = vadd.f32 %v1587, %v1638
  %v1640 = vpop.f32.mrb[0].mxu0
  %v1641 = vadd.f32 %v1589, %v1640
  %v1642 = vpop.f32.mrb[0].mxu0
  %v1643 = vpop.f32.mrb[0].mxu0
  %v1644 = vadd.f32 %v1592, %v1643
  %1645 = vdwg.mxu0
  %v1647 = vrot.slane %v1529, 2
  %v1649 = vadd.f32 %v1527, %v1647
  %v1651 = vrot.slane %v1629, 4
  %v1653 = vadd.f32 %v1649, %v1651
  %v1655 = vrot.slane %v1631, 6
  %v1657 = vadd.f32 %v1653, %v1655
  %v1658 = vld [vmem:[%s4] sm:$0x1]
  %v1660 = vlaneseq
  %v1661 = vshrl.u32 %v1660, 7
  %v1662 = vsub.s32 0, %v1661
  %v1663 = vrot.slane %v1658, %v1662
  %v1665 = vadd.f32 %v1657, %v1663
  %v1666 = vmax.f32 %v1665, 0.0
  %v1668 = vrot.slane %v1633, 4
  %v1670 = vadd.f32 %v1649, %v1668
  %v1672 = vrot.slane %v1635, 6
  %v1674 = vadd.f32 %v1670, %v1672
  %v1675 = vadd.f32 %v1674, %v1663
  %v1676 = vmax.f32 %v1675, 0.0
  %v1678 = vrot.slane %v1676, 4
  %v1680 = vadd.f32 %v1666, %v1678
  %v1682 = vrot.slane %v1538, 2
  %v1684 = vadd.f32 %v1531, %v1682
  %v1686 = vrot.slane %v1639, 4
  %v1688 = vadd.f32 %v1684, %v1686
  %v1690 = vrot.slane %v1641, 6
  %v1692 = vadd.f32 %v1688, %v1690
  %v1693 = vadd.f32 %v1692, %v1663
  %v1694 = vmax.f32 %v1693, 0.0
  %v1696 = vrot.slane %v1694, 6
  %v1698 = vadd.f32 %v1680, %v1696
  %v1699 = vadd.f32 %v1536, %v1682
  %v1700 = vadd.f32 %v1699, %v1686
  %v1702 = vrot.slane %v1644, 6
  %v1704 = vadd.f32 %v1700, %v1702
  %v1705 = vadd.f32 %v1704, %v1663
  %v1706 = vmax.f32 %v1705, 0.0
  %v1708 = vrot.slane %v1706, 2
  %v1710 = vadd.f32 %v1698, %v1708
  %v1711 = vmul.f32 %v1710, 0.25
  %v1712 = vld [vmem:[%s5] sm:$0xff]
  %v1713 = vld [vmem:[%s5 + $0x8] sm:$0xff]
  %v1714 = vld [vmem:[%s5 + $0x10] sm:$0xff]
  %v1715 = vld [vmem:[%s5 + $0x18] sm:$0xff]
  %v1716 = vld [vmem:[%s5 + $0x20] sm:$0xff]
  %v1717 = vld [vmem:[%s5 + $0x28] sm:$0xff]
  %v1718 = vld [vmem:[%s5 + $0x30] sm:$0xff]
  %v1719 = vld [vmem:[%s5 + $0x38] sm:$0xff]
  %v1720 = vld [vmem:[%s5 + $0x40] sm:$0xff]
  %v1721 = vld [vmem:[%s5 + $0x48] sm:$0xff]
  %v1722 = vld [vmem:[%s5 + $0x50] sm:$0xff]
  %v1723 = vld [vmem:[%s5 + $0x58] sm:$0xff]
  %v1724 = vld [vmem:[%s5 + $0x60] sm:$0xff]
  %v1725 = vld [vmem:[%s5 + $0x68] sm:$0xff]
  %v1726 = vld [vmem:[%s5 + $0x70] sm:$0xff]
  %v1727 = vld [vmem:[%s5 + $0x78] sm:$0xff]
  %v1728 = vld [vmem:[%s5 + $0x80] sm:$0xff]
  %v1729 = vld [vmem:[%s5 + $0x88] sm:$0xff]
  %v1730 = vld [vmem:[%s5 + $0x90] sm:$0xff]
  %v1731 = vld [vmem:[%s5 + $0x98] sm:$0xff]
  %v1732 = vld [vmem:[%s5 + $0xa0] sm:$0xff]
  %v1733 = vld [vmem:[%s5 + $0xa8] sm:$0xff]
  %v1734 = vld [vmem:[%s5 + $0xb0] sm:$0xff]
  %v1735 = vld [vmem:[%s5 + $0xb8] sm:$0xff]
  %v1736 = vld [vmem:[%s5 + $0xc0] sm:$0xff]
  %v1737 = vld [vmem:[%s5 + $0xc8] sm:$0xff]
  %v1738 = vld [vmem:[%s5 + $0xd0] sm:$0xff]
  %v1739 = vld [vmem:[%s5 + $0xd8] sm:$0xff]
  %v1740 = vld [vmem:[%s5 + $0xe0] sm:$0xff]
  %v1741 = vld [vmem:[%s5 + $0xe8] sm:$0xff]
  %v1742 = vld [vmem:[%s5 + $0xf0] sm:$0xff]
  %v1743 = vld [vmem:[%s5 + $0xf8] sm:$0xff]
  %v1744 = vld [vmem:[%s5 + $0x100] sm:$0xff]
  %v1745 = vld [vmem:[%s5 + $0x108] sm:$0xff]
  %v1746 = vld [vmem:[%s5 + $0x110] sm:$0xff]
  %v1747 = vld [vmem:[%s5 + $0x118] sm:$0xff]
  %v1748 = vld [vmem:[%s5 + $0x120] sm:$0xff]
  %v1749 = vld [vmem:[%s5 + $0x128] sm:$0xff]
  %v1750 = vld [vmem:[%s5 + $0x130] sm:$0xff]
  %v1751 = vld [vmem:[%s5 + $0x138] sm:$0xff]
  %v1752 = vld [vmem:[%s5 + $0x140] sm:$0xff]
  %v1753 = vld [vmem:[%s5 + $0x148] sm:$0xff]
  %v1754 = vld [vmem:[%s5 + $0x150] sm:$0xff]
  %v1755 = vld [vmem:[%s5 + $0x158] sm:$0xff]
  %v1756 = vld [vmem:[%s5 + $0x160] sm:$0xff]
  %v1757 = vld [vmem:[%s5 + $0x168] sm:$0xff]
  %v1758 = vld [vmem:[%s5 + $0x170] sm:$0xff]
  %v1759 = vld [vmem:[%s5 + $0x178] sm:$0xff]
  %1760 = vmatprep.subr.mxu0 %v1713
  %1761 = vmatpush1.msra.mxu0 %v1712
  %1762 = vmatprep.subr.mxu0 %v1716
  %1763 = vmatpush1.msra.mxu0 %v1715
  %1764 = vmatprep.subr.mxu0 %v1719
  %1765 = vmatpush1.msra.mxu0 %v1718
  %1766 = vmatprep.subr.mxu0 %v1722
  %1767 = vmatpush1.msra.mxu0 %v1721
  %1768 = vmatprep.subr.mxu0 %v1725
  %1769 = vmatpush1.msra.mxu0 %v1724
  %1770 = vmatprep.subr.mxu0 %v1728
  %1771 = vmatpush1.msra.mxu0 %v1727
  %1772 = vmatprep.subr.mxu0 %v1731
  %1773 = vmatpush1.msra.mxu0 %v1730
  %1774 = vmatprep.subr.mxu0 %v1734
  %1775 = vmatpush1.msra.mxu0 %v1733
  %1776 = vmatprep.subr.mxu0 %v1737
  %1777 = vmatpush1.msra.mxu0 %v1736
  %1778 = vmatprep.subr.mxu0 %v1740
  %1779 = vmatpush1.msra.mxu0 %v1739
  %1780 = vmatprep.subr.mxu0 %v1743
  %1781 = vmatpush1.msra.mxu0 %v1742
  %1782 = vmatprep.subr.mxu0 %v1746
  %1783 = vmatpush1.msra.mxu0 %v1745
  %1784 = vmatprep.subr.mxu0 %v1749
  %1785 = vmatpush1.msra.mxu0 %v1748
  %1786 = vmatprep.subr.mxu0 %v1752
  %1787 = vmatpush1.msra.mxu0 %v1751
  %1788 = vmatprep.subr.mxu0 %v1755
  %1789 = vmatpush1.msra.mxu0 %v1754
  %1790 = vmatprep.subr.mxu0 %v1758
  %1791 = vmatpush1.msra.mxu0 %v1757
  %1792 = vmatprep.subr.mxu0 0.0
  %1793 = vmatpush1.msra.mxu0 0.0
  %1794 = vmatprep.subr.mxu0 0.0
  %1795 = vmatpush1.msra.mxu0 0.0
  %1796 = vmatprep.subr.mxu0 0.0
  %1797 = vmatpush1.msra.mxu0 0.0
  %1798 = vmatprep.subr.mxu0 0.0
  %1799 = vmatpush1.msra.mxu0 0.0
  %1800 = vmatprep.subr.mxu0 0.0
  %1801 = vmatpush1.msra.mxu0 0.0
  %1802 = vmatprep.subr.mxu0 0.0
  %1803 = vmatpush1.msra.mxu0 0.0
  %1804 = vmatprep.subr.mxu0 0.0
  %1805 = vmatpush1.msra.mxu0 0.0
  %1806 = vmatprep.subr.mxu0 0.0
  %1807 = vmatpush1.msra.mxu0 0.0
  %1808 = vmatprep.subr.mxu0 0.0
  %1809 = vmatpush1.msra.mxu0 0.0
  %1810 = vmatprep.subr.mxu0 0.0
  %1811 = vmatpush1.msra.mxu0 0.0
  %1812 = vmatprep.subr.mxu0 0.0
  %1813 = vmatpush1.msra.mxu0 0.0
  %1814 = vmatprep.subr.mxu0 0.0
  %1815 = vmatpush1.msra.mxu0 0.0
  %1816 = vmatprep.subr.mxu0 0.0
  %1817 = vmatpush1.msra.mxu0 0.0
  %1818 = vmatprep.subr.mxu0 0.0
  %1819 = vmatpush1.msra.mxu0 0.0
  %1820 = vmatprep.subr.mxu0 0.0
  %1821 = vmatpush1.msra.mxu0 0.0
  %1822 = vmatprep.subr.mxu0 0.0
  %1823 = vmatpush1.msra.mxu0 0.0
  %1824 = vmatprep.mubr.f32.mxu0 0.0
  %1825 = vmatmul.mubr.f32.gmra.mrb[0].mxu0 %v1711
  %v1826 = vpop.f32.mrb[0].mxu0
  %v1827 = vadd.f32 0.0, %v1826
  %v1828 = vpop.f32.mrb[0].mxu0
  %v1829 = vadd.f32 0.0, %v1828
  %1830 = vdwg.mxu0
  %1831 = vmatprep.subr.mxu0 0.0
  %1832 = vmatpush1.msra.mxu0 %v1714
  %1833 = vmatprep.subr.mxu0 0.0
  %1834 = vmatpush1.msra.mxu0 %v1717
  %1835 = vmatprep.subr.mxu0 0.0
  %1836 = vmatpush1.msra.mxu0 %v1720
  %1837 = vmatprep.subr.mxu0 0.0
  %1838 = vmatpush1.msra.mxu0 %v1723
  %1839 = vmatprep.subr.mxu0 0.0
  %1840 = vmatpush1.msra.mxu0 %v1726
  %1841 = vmatprep.subr.mxu0 0.0
  %1842 = vmatpush1.msra.mxu0 %v1729
  %1843 = vmatprep.subr.mxu0 0.0
  %1844 = vmatpush1.msra.mxu0 %v1732
  %1845 = vmatprep.subr.mxu0 0.0
  %1846 = vmatpush1.msra.mxu0 %v1735
  %1847 = vmatprep.subr.mxu0 0.0
  %1848 = vmatpush1.msra.mxu0 %v1738
  %1849 = vmatprep.subr.mxu0 0.0
  %1850 = vmatpush1.msra.mxu0 %v1741
  %1851 = vmatprep.subr.mxu0 0.0
  %1852 = vmatpush1.msra.mxu0 %v1744
  %1853 = vmatprep.subr.mxu0 0.0
  %1854 = vmatpush1.msra.mxu0 %v1747
  %1855 = vmatprep.subr.mxu0 0.0
  %1856 = vmatpush1.msra.mxu0 %v1750
  %1857 = vmatprep.subr.mxu0 0.0
  %1858 = vmatpush1.msra.mxu0 %v1753
  %1859 = vmatprep.subr.mxu0 0.0
  %1860 = vmatpush1.msra.mxu0 %v1756
  %1861 = vmatprep.subr.mxu0 0.0
  %1862 = vmatpush1.msra.mxu0 %v1759
  %1863 = vmatprep.subr.mxu0 0.0
  %1864 = vmatpush1.msra.mxu0 0.0
  %1865 = vmatprep.subr.mxu0 0.0
  %1866 = vmatpush1.msra.mxu0 0.0
  %1867 = vmatprep.subr.mxu0 0.0
  %1868 = vmatpush1.msra.mxu0 0.0
  %1869 = vmatprep.subr.mxu0 0.0
  %1870 = vmatpush1.msra.mxu0 0.0
  %1871 = vmatprep.subr.mxu0 0.0
  %1872 = vmatpush1.msra.mxu0 0.0
  %1873 = vmatprep.subr.mxu0 0.0
  %1874 = vmatpush1.msra.mxu0 0.0
  %1875 = vmatprep.subr.mxu0 0.0
  %1876 = vmatpush1.msra.mxu0 0.0
  %1877 = vmatprep.subr.mxu0 0.0
  %1878 = vmatpush1.msra.mxu0 0.0
  %1879 = vmatprep.subr.mxu0 0.0
  %1880 = vmatpush1.msra.mxu0 0.0
  %1881 = vmatprep.subr.mxu0 0.0
  %1882 = vmatpush1.msra.mxu0 0.0
  %1883 = vmatprep.subr.mxu0 0.0
  %1884 = vmatpush1.msra.mxu0 0.0
  %1885 = vmatprep.subr.mxu0 0.0
  %1886 = vmatpush1.msra.mxu0 0.0
  %1887 = vmatprep.subr.mxu0 0.0
  %1888 = vmatpush1.msra.mxu0 0.0
  %1889 = vmatprep.subr.mxu0 0.0
  %1890 = vmatpush1.msra.mxu0 0.0
  %1891 = vmatprep.subr.mxu0 0.0
  %1892 = vmatpush1.msra.mxu0 0.0
  %1893 = vmatprep.subr.mxu0 0.0
  %1894 = vmatpush1.msra.mxu0 0.0
  %1895 = vmatprep.mubr.f32.mxu0 0.0
  %1896 = vmatmul.mubr.f32.gmra.mrb[0].mxu0 %v1711
  %v1897 = vpop.f32.mrb[0].mxu0
  %v1898 = vadd.f32 0.0, %v1897
  %v1899 = vpop.f32.mrb[0].mxu0
  %1900 = vdwg.mxu0
  %v1901 = vadd.f32 %v249, %v1827
  %v1902 = vadd.f32 %v250, %v1829
  %v1903 = vadd.f32 %v251, %v1898
  %s1904 = scalar_lea.vmem %s0, 104
  %v1905 = vld [vmem:[%s1904] sm:$0xff]
  %v1906 = vld [vmem:[%s1904 + $0x8] sm:$0xff]
  %v1907 = vld [vmem:[%s1904 + $0x10] sm:$0xff]
  %v1908 = vld [vmem:[%s1904 + $0x18] sm:$0xff]
  %v1909 = vld [vmem:[%s1904 + $0x20] sm:$0xff]
  %v1910 = vld [vmem:[%s1904 + $0x28] sm:$0xff]
  %v1911 = vld [vmem:[%s1904 + $0x30] sm:$0xff]
  %v1912 = vld [vmem:[%s1904 + $0x38] sm:$0xff]
  %v1913 = vld [vmem:[%s1904 + $0x40] sm:$0xff]
  %v1914 = vld [vmem:[%s1904 + $0x48] sm:$0xff]
  %v1915 = vld [vmem:[%s1904 + $0x50] sm:$0xff]
  %v1916 = vld [vmem:[%s1904 + $0x58] sm:$0xff]
  %v1917 = vld [vmem:[%s1904 + $0x60] sm:$0x11]
  %s1918 = scalar_lea.vmem %s1, 128
  %v1919 = vld [vmem:[%s1918] sm:$0xf]
  %v1920 = vld [vmem:[%s1918 + $0x4] sm:$0xf]
  %v1921 = vld [vmem:[%s1918 + $0x8] sm:$0xf]
  %v1922 = vld [vmem:[%s1918 + $0xc] sm:$0xf]
  %v1923 = vld [vmem:[%s1918 + $0x10] sm:$0xf]
  %v1924 = vld [vmem:[%s1918 + $0x14] sm:$0xf]
  %v1925 = vld [vmem:[%s1918 + $0x18] sm:$0xf]
  %v1926 = vld [vmem:[%s1918 + $0x1c] sm:$0xf]
  %v1927 = vld [vmem:[%s1918 + $0x20] sm:$0xf]
  %v1928 = vld [vmem:[%s1918 + $0x24] sm:$0xf]
  %v1929 = vld [vmem:[%s1918 + $0x28] sm:$0xf]
  %v1930 = vld [vmem:[%s1918 + $0x2c] sm:$0xf]
  %v1931 = vld [vmem:[%s1918 + $0x30] sm:$0xf]
  %v1932 = vld [vmem:[%s1918 + $0x34] sm:$0xf]
  %v1933 = vld [vmem:[%s1918 + $0x38] sm:$0xf]
  %v1934 = vld [vmem:[%s1918 + $0x3c] sm:$0xf]
  %v1935 = vld [vmem:[%s1918 + $0x40] sm:$0xf]
  %v1936 = vld [vmem:[%s1918 + $0x44] sm:$0xf]
  %v1937 = vld [vmem:[%s1918 + $0x48] sm:$0xf]
  %v1938 = vld [vmem:[%s1918 + $0x4c] sm:$0xf]
  %v1939 = vld [vmem:[%s1918 + $0x50] sm:$0xf]
  %v1940 = vld [vmem:[%s1918 + $0x54] sm:$0xf]
  %v1941 = vld [vmem:[%s1918 + $0x58] sm:$0xf]
  %v1942 = vld [vmem:[%s1918 + $0x5c] sm:$0xf]
  %v1943 = vld [vmem:[%s1918 + $0x60] sm:$0xf]
  %v1944 = vld [vmem:[%s1918 + $0x64] sm:$0xf]
  %v1945 = vld [vmem:[%s1918 + $0x68] sm:$0xf]
  %v1946 = vld [vmem:[%s1918 + $0x6c] sm:$0xf]
  %v1947 = vld [vmem:[%s1918 + $0x70] sm:$0xf]
  %v1948 = vld [vmem:[%s1918 + $0x74] sm:$0xf]
  %v1949 = vld [vmem:[%s1918 + $0x78] sm:$0xf]
  %v1950 = vld [vmem:[%s1918 + $0x7c] sm:$0xf]
  %s1951 = scalar_lea.vmem %s2, 1
  %v1952 = vld [vmem:[%s1951] sm:$0x1]
  %v1954 = vlaneseq
  %v1955 = vshrl.u32 %v1954, 7
  %v1956 = vsub.s32 0, %v1955
  %v1957 = vrot.slane %v1952, %v1956
  %v1972 = vunpack.c.l.b16 %v1905
  %v1973 = vunpack.c.h.b16 %v1905
  %v1974 = vunpack.c.l.b16 %v1906
  %v1975 = vunpack.c.h.b16 %v1906
  %v1976 = vunpack.c.l.b16 %v1907
  %v1977 = vunpack.c.h.b16 %v1907
  %v1978 = vunpack.c.l.b16 %v1908
  %v1979 = vunpack.c.h.b16 %v1908
  %v1980 = vunpack.c.l.b16 %v1909
  %v1981 = vunpack.c.h.b16 %v1909
  %v1982 = vunpack.c.l.b16 %v1910
  %v1983 = vunpack.c.h.b16 %v1910
  %v1984 = vunpack.c.l.b16 %v1911
  %v1985 = vunpack.c.h.b16 %v1911
  %v1986 = vunpack.c.l.b16 %v1912
  %v1987 = vunpack.c.h.b16 %v1912
  %v1988 = vunpack.c.l.b16 %v1913
  %v1989 = vunpack.c.h.b16 %v1913
  %v1990 = vunpack.c.l.b16 %v1914
  %v1991 = vunpack.c.h.b16 %v1914
  %v1992 = vunpack.c.l.b16 %v1915
  %v1993 = vunpack.c.h.b16 %v1915
  %v1994 = vunpack.c.l.b16 %v1916
  %v1995 = vunpack.c.h.b16 %v1916
  %v1996 = vunpack.c.l.b16 %v1917
  %v1997 = vunpack.c.h.b16 %v1917
  %v1998 = vpack.c.b16 %v1974, %v1972
  %v1999 = vpack.c.b16 %v1975, %v1973
  %v2000 = vpack.c.b16 %v1978, %v1976
  %v2001 = vpack.c.b16 %v1979, %v1977
  %v2002 = vpack.c.b16 %v1982, %v1980
  %v2003 = vpack.c.b16 %v1983, %v1981
  %v2004 = vpack.c.b16 %v1986, %v1984
  %v2005 = vpack.c.b16 %v1987, %v1985
  %v2006 = vpack.c.b16 %v1990, %v1988
  %v2007 = vpack.c.b16 %v1991, %v1989
  %v2008 = vpack.c.b16 %v1994, %v1992
  %v2009 = vpack.c.b16 %v1995, %v1993
  %v2010 = vpack.c.b16 %v1996, %v1996
  %v2011 = vpack.c.b16 %v1997, %v1997
  %v2058 = vunpack.c.l.b16 %v1919
  %v2059 = vunpack.c.l.b16 %v1920
  %v2060 = vunpack.c.l.b16 %v1921
  %v2061 = vunpack.c.l.b16 %v1922
  %v2062 = vunpack.c.l.b16 %v1923
  %v2063 = vunpack.c.l.b16 %v1924
  %v2064 = vunpack.c.l.b16 %v1925
  %v2065 = vunpack.c.l.b16 %v1926
  %v2066 = vunpack.c.l.b16 %v1927
  %v2067 = vunpack.c.l.b16 %v1928
  %v2068 = vunpack.c.l.b16 %v1929
  %v2069 = vunpack.c.l.b16 %v1930
  %v2070 = vunpack.c.l.b16 %v1931
  %v2071 = vunpack.c.l.b16 %v1932
  %v2072 = vunpack.c.l.b16 %v1933
  %v2073 = vunpack.c.l.b16 %v1934
  %v2074 = vunpack.c.l.b16 %v1935
  %v2075 = vunpack.c.l.b16 %v1936
  %v2076 = vunpack.c.l.b16 %v1937
  %v2077 = vunpack.c.l.b16 %v1938
  %v2078 = vunpack.c.l.b16 %v1939
  %v2079 = vunpack.c.l.b16 %v1940
  %v2080 = vunpack.c.l.b16 %v1941
  %v2081 = vunpack.c.l.b16 %v1942
  %v2082 = vunpack.c.l.b16 %v1943
  %v2083 = vunpack.c.l.b16 %v1944
  %v2084 = vunpack.c.l.b16 %v1945
  %v2085 = vunpack.c.l.b16 %v1946
  %v2086 = vunpack.c.l.b16 %v1947
  %v2087 = vunpack.c.l.b16 %v1948
  %v2088 = vunpack.c.l.b16 %v1949
  %v2089 = vunpack.c.l.b16 %v1950
  %v2090 = vpack.c.b16 %v2059, %v2058
  %v2091 = vpack.c.b16 %v2061, %v2060
  %v2092 = vpack.c.b16 %v2063, %v2062
  %v2093 = vpack.c.b16 %v2065, %v2064
  %v2094 = vpack.c.b16 %v2067, %v2066
  %v2095 = vpack.c.b16 %v2069, %v2068
  %v2096 = vpack.c.b16 %v2071, %v2070
  %v2097 = vpack.c.b16 %v2073, %v2072
  %v2098 = vpack.c.b16 %v2075, %v2074
  %v2099 = vpack.c.b16 %v2077, %v2076
  %v2100 = vpack.c.b16 %v2079, %v2078
  %v2101 = vpack.c.b16 %v2081, %v2080
  %v2102 = vpack.c.b16 %v2083, %v2082
  %v2103 = vpack.c.b16 %v2085, %v2084
  %v2104 = vpack.c.b16 %v2087, %v2086
  %v2105 = vpack.c.b16 %v2089, %v2088
  %2122 = vmatprep.subr.bf16.mxu0 0
  %2123 = vmatpush1.bf16.msra.mxu0 %v2090
  %2124 = vmatprep.subr.bf16.mxu0 0
  %2125 = vmatpush1.bf16.msra.mxu0 %v2091
  %2126 = vmatprep.subr.bf16.mxu0 0
  %2127 = vmatpush1.bf16.msra.mxu0 %v2092
  %2128 = vmatprep.subr.bf16.mxu0 0
  %2129 = vmatpush1.bf16.msra.mxu0 %v2093
  %2130 = vmatprep.subr.bf16.mxu0 0
  %2131 = vmatpush1.bf16.msra.mxu0 %v2094
  %2132 = vmatprep.subr.bf16.mxu0 0
  %2133 = vmatpush1.bf16.msra.mxu0 %v2095
  %2134 = vmatprep.subr.bf16.mxu0 0
  %2135 = vmatpush1.bf16.msra.mxu0 %v2096
  %2136 = vmatprep.subr.bf16.mxu0 0
  %2137 = vmatpush1.bf16.msra.mxu0 %v2097
  %2138 = vmatprep.subr.bf16.mxu0 0
  %2139 = vmatpush1.bf16.msra.mxu0 %v2098
  %2140 = vmatprep.subr.bf16.mxu0 0
  %2141 = vmatpush1.bf16.msra.mxu0 %v2099
  %2142 = vmatprep.subr.bf16.mxu0 0
  %2143 = vmatpush1.bf16.msra.mxu0 %v2100
  %2144 = vmatprep.subr.bf16.mxu0 0
  %2145 = vmatpush1.bf16.msra.mxu0 %v2101
  %2146 = vmatprep.subr.bf16.mxu0 0
  %2147 = vmatpush1.bf16.msra.mxu0 %v2102
  %2148 = vmatprep.subr.bf16.mxu0 0
  %2149 = vmatpush1.bf16.msra.mxu0 %v2103
  %2150 = vmatprep.subr.bf16.mxu0 0
  %2151 = vmatpush1.bf16.msra.mxu0 %v2104
  %2152 = vmatprep.subr.bf16.mxu0 0
  %2153 = vmatpush1.bf16.msra.mxu0 %v2105
  %2154 = vmatprep.mubr.bf16.mxu0 %v1999
  %2155 = vmatmul.mubr.bf16.gmra.mrb[0].mxu0 %v1998
  %v2156 = vpop.f32.mrb[0].mxu0
  %v2157 = vadd.f32 %v1957, %v2156
  %v2158 = vpop.f32.mrb[0].mxu0
  %v2159 = vpop.f32.mrb[0].mxu0
  %v2160 = vadd.f32 %v1957, %v2159
  %v2161 = vpop.f32.mrb[0].mxu0
  %2162 = vmatprep.mubr.bf16.mxu0 %v2001
  %2163 = vmatmul.mubr.bf16.gmra.mrb[0].mxu0 %v2000
  %v2164 = vpop.f32.mrb[0].mxu0
  %v2165 = vadd.f32 %v1957, %v2164
  %v2166 = vpop.f32.mrb[0].mxu0
  %v2167 = vpop.f32.mrb[0].mxu0
  %v2168 = vadd.f32 %v1957, %v2167
  %v2169 = vpop.f32.mrb[0].mxu0
  %2170 = vmatprep.mubr.bf16.mxu0 %v2003
  %2171 = vmatmul.mubr.bf16.gmra.mrb[0].mxu0 %v2002
  %v2172 = vpop.f32.mrb[0].mxu0
  %v2173 = vadd.f32 %v1957, %v2172
  %v2174 = vpop.f32.mrb[0].mxu0
  %v2175 = vpop.f32.mrb[0].mxu0
  %v2176 = vadd.f32 %v1957, %v2175
  %v2177 = vpop.f32.mrb[0].mxu0
  %2178 = vmatprep.mubr.bf16.mxu0 %v2005
  %2179 = vmatmul.mubr.bf16.gmra.mrb[0].mxu0 %v2004
  %v2180 = vpop.f32.mrb[0].mxu0
  %v2181 = vadd.f32 %v1957, %v2180
  %v2182 = vpop.f32.mrb[0].mxu0
  %v2183 = vpop.f32.mrb[0].mxu0
  %v2184 = vadd.f32 %v1957, %v2183
  %v2185 = vpop.f32.mrb[0].mxu0
  %2186 = vmatprep.mubr.bf16.mxu0 %v2007
  %2187 = vmatmul.mubr.bf16.gmra.mrb[0].mxu0 %v2006
  %v2188 = vpop.f32.mrb[0].mxu0
  %v2189 = vadd.f32 %v1957, %v2188
  %v2190 = vpop.f32.mrb[0].mxu0
  %v2191 = vpop.f32.mrb[0].mxu0
  %v2192 = vadd.f32 %v1957, %v2191
  %v2193 = vpop.f32.mrb[0].mxu0
  %2194 = vmatprep.mubr.bf16.mxu0 %v2009
  %2195 = vmatmul.mubr.bf16.gmra.mrb[0].mxu0 %v2008
  %v2196 = vpop.f32.mrb[0].mxu0
  %v2197 = vadd.f32 %v1957, %v2196
  %v2198 = vpop.f32.mrb[0].mxu0
  %v2199 = vpop.f32.mrb[0].mxu0
  %v2200 = vadd.f32 %v1957, %v2199
  %v2201 = vpop.f32.mrb[0].mxu0
  %2202 = vmatprep.mubr.bf16.mxu0 %v2011
  %2203 = vmatmul.mubr.bf16.gmra.mrb[0].mxu0 %v2010
  %v2204 = vpop.f32.mrb[0].mxu0
  %v2205 = vadd.f32 %v1957, %v2204
  %v2206 = vpop.f32.mrb[0].mxu0
  %v2207 = vpop.f32.mrb[0].mxu0
  %v2208 = vpop.f32.mrb[0].mxu0
  %2209 = vdwg.mxu0
  %v2210 = vmax.f32 %v2157, 0.0
  %v2211 = vmax.f32 %v2160, 0.0
  %v2212 = vmax.f32 %v2165, 0.0
  %v2213 = vmax.f32 %v2168, 0.0
  %v2214 = vmax.f32 %v2173, 0.0
  %v2215 = vmax.f32 %v2176, 0.0
  %v2216 = vmax.f32 %v2181, 0.0
  %v2217 = vmax.f32 %v2184, 0.0
  %v2218 = vmax.f32 %v2189, 0.0
  %v2219 = vmax.f32 %v2192, 0.0
  %v2220 = vmax.f32 %v2197, 0.0
  %v2221 = vmax.f32 %v2200, 0.0
  %v2222 = vmax.f32 %v2205, 0.0
  %2223 = vst [vmem:[#allocation2] sm:$0xff] %v2210
  %2224 = vst [vmem:[#allocation2 + $0x8] sm:$0xff] %v2211
  %2225 = vst [vmem:[#allocation2 + $0x10] sm:$0xff] %v2212
  %2226 = vst [vmem:[#allocation2 + $0x18] sm:$0xff] %v2213
  %2227 = vst [vmem:[#allocation2 + $0x20] sm:$0xff] %v2214
  %2228 = vst [vmem:[#allocation2 + $0x28] sm:$0xff] %v2215
  %2229 = vst [vmem:[#allocation2 + $0x30] sm:$0xff] %v2216
  %2230 = vst [vmem:[#allocation2 + $0x38] sm:$0xff] %v2217
  %2231 = vst [vmem:[#allocation2 + $0x40] sm:$0xff] %v2218
  %2232 = vst [vmem:[#allocation2 + $0x48] sm:$0xff] %v2219
  %2233 = vst [vmem:[#allocation2 + $0x50] sm:$0xff] %v2220
  %2234 = vst [vmem:[#allocation2 + $0x58] sm:$0xff] %v2221
  %2235 = vst [vmem:[#allocation2 + $0x60] sm:$0x3] %v2222
  %v2236 = vld [vmem:[#allocation2] sm:$0xff]
  %v2237 = vld [vmem:[#allocation2 + $0x8] sm:$0x3f]
  %2238 = vst [vmem:[#allocation3] sm:$0xff] %v2236
  %2239 = vst [vmem:[#allocation3 + $0x20] sm:$0x3f] %v2237
  %v2240 = vld [vmem:[#allocation2 + $0xe] sm:$0xff]
  %v2241 = vld [vmem:[#allocation2 + $0x16] sm:$0x3f]
  %2242 = vst [vmem:[#allocation3 + $0x8] sm:$0xff] %v2240
  %2243 = vst [vmem:[#allocation3 + $0x28] sm:$0x3f] %v2241
  %v2244 = vld [vmem:[#allocation2 + $0x1c] sm:$0xff]
  %v2245 = vld [vmem:[#allocation2 + $0x24] sm:$0x3f]
  %2246 = vst [vmem:[#allocation3 + $0x10] sm:$0xff] %v2244
  %2247 = vst [vmem:[#allocation3 + $0x30] sm:$0x3f] %v2245
  %v2248 = vld [vmem:[#allocation2 + $0x2a] sm:$0xff]
  %v2249 = vld [vmem:[#allocation2 + $0x32] sm:$0x3f]
  %2250 = vst [vmem:[#allocation3 + $0x18] sm:$0xff] %v2248
  %2251 = vst [vmem:[#allocation3 + $0x38] sm:$0x3f] %v2249
  %v2252 = vld [vmem:[#allocation2 + $0x1c] sm:$0xff]
  %v2253 = vld [vmem:[#allocation2 + $0x24] sm:$0x3f]
  %v2256 = vrot.slane %v2252, 2
  %v2257 = vrot.slane %v2253, 2
  %v2258 = vsel %vm601, %v2256, %v2257
  %2262 = vst [vmem:[#allocation3 + $0x20] sm:$0xc0] %v2256
  %2263 = vst [vmem:[#allocation3 + $0x40] sm:$0xff] %v2258
  %2264 = vst [vmem:[#allocation3 + $0x60] sm:$0xf] %v2257
  %v2265 = vld [vmem:[#allocation2 + $0x2a] sm:$0xff]
  %v2266 = vld [vmem:[#allocation2 + $0x32] sm:$0x3f]
  %v2269 = vrot.slane %v2265, 2
  %v2270 = vrot.slane %v2266, 2
  %v2271 = vsel %vm601, %v2269, %v2270
  %2275 = vst [vmem:[#allocation3 + $0x28] sm:$0xc0] %v2269
  %2276 = vst [vmem:[#allocation3 + $0x48] sm:$0xff] %v2271
  %2277 = vst [vmem:[#allocation3 + $0x68] sm:$0xf] %v2270
  %v2278 = vld [vmem:[#allocation2 + $0x38] sm:$0xff]
  %v2279 = vld [vmem:[#allocation2 + $0x40] sm:$0x3f]
  %v2282 = vrot.slane %v2278, 2
  %v2283 = vrot.slane %v2279, 2
  %v2284 = vsel %vm601, %v2282, %v2283
  %2288 = vst [vmem:[#allocation3 + $0x30] sm:$0xc0] %v2282
  %2289 = vst [vmem:[#allocation3 + $0x50] sm:$0xff] %v2284
  %2290 = vst [vmem:[#allocation3 + $0x70] sm:$0xf] %v2283
  %v2291 = vld [vmem:[#allocation2 + $0x46] sm:$0xff]
  %v2292 = vld [vmem:[#allocation2 + $0x4e] sm:$0x3f]
  %v2295 = vrot.slane %v2291, 2
  %v2296 = vrot.slane %v2292, 2
  %v2297 = vsel %vm601, %v2295, %v2296
  %2301 = vst [vmem:[#allocation3 + $0x38] sm:$0xc0] %v2295
  %2302 = vst [vmem:[#allocation3 + $0x58] sm:$0xff] %v2297
  %2303 = vst [vmem:[#allocation3 + $0x78] sm:$0xf] %v2296
  %v2304 = vld [vmem:[#allocation3] sm:$0xff]
  %v2305 = vld [vmem:[#allocation3 + $0x8] sm:$0xff]
  %v2306 = vld [vmem:[#allocation3 + $0x10] sm:$0xff]
  %v2307 = vld [vmem:[#allocation3 + $0x18] sm:$0xff]
  %v2308 = vld [vmem:[#allocation3 + $0x20] sm:$0xff]
  %v2309 = vld [vmem:[#allocation3 + $0x28] sm:$0xff]
  %v2310 = vld [vmem:[#allocation3 + $0x30] sm:$0xff]
  %v2311 = vld [vmem:[#allocation3 + $0x38] sm:$0xff]
  %v2312 = vld [vmem:[#allocation3 + $0x40] sm:$0xff]
  %v2313 = vld [vmem:[#allocation3 + $0x48] sm:$0xff]
  %v2314 = vld [vmem:[#allocation3 + $0x50] sm:$0xff]
  %v2315 = vld [vmem:[#allocation3 + $0x58] sm:$0xff]
  %v2316 = vld [vmem:[#allocation3 + $0x60] sm:$0xf]
  %v2317 = vld [vmem:[#allocation3 + $0x68] sm:$0xf]
  %v2318 = vld [vmem:[#allocation3 + $0x70] sm:$0xf]
  %v2319 = vld [vmem:[#allocation3 + $0x78] sm:$0xf]
  %v2320 = vpack.c.bf16 %v2308, %v2304
  %v2321 = vpack.c.bf16 %v2309, %v2305
  %v2322 = vpack.c.bf16 %v2310, %v2306
  %v2323 = vpack.c.bf16 %v2311, %v2307
  %v2324 = vpack.c.bf16 %v2316, %v2312
  %v2325 = vpack.c.bf16 %v2317, %v2313
  %v2326 = vpack.c.bf16 %v2318, %v2314
  %v2327 = vpack.c.bf16 %v2319, %v2315
  %s2328 = scalar_lea.vmem %s3, 1024
  %v2329 = vld [vmem:[%s2328] sm:$0xff]
  %v2330 = vld [vmem:[%s2328 + $0x8] sm:$0xff]
  %v2331 = vld [vmem:[%s2328 + $0x10] sm:$0xff]
  %v2332 = vld [vmem:[%s2328 + $0x18] sm:$0xff]
  %v2333 = vld [vmem:[%s2328 + $0x20] sm:$0xff]
  %v2334 = vld [vmem:[%s2328 + $0x28] sm:$0xff]
  %v2335 = vld [vmem:[%s2328 + $0x30] sm:$0xff]
  %v2336 = vld [vmem:[%s2328 + $0x38] sm:$0xff]
  %v2337 = vld [vmem:[%s2328 + $0x40] sm:$0xff]
  %v2338 = vld [vmem:[%s2328 + $0x48] sm:$0xff]
  %v2339 = vld [vmem:[%s2328 + $0x50] sm:$0xff]
  %v2340 = vld [vmem:[%s2328 + $0x58] sm:$0xff]
  %v2341 = vld [vmem:[%s2328 + $0x60] sm:$0xff]
  %v2342 = vld [vmem:[%s2328 + $0x68] sm:$0xff]
  %v2343 = vld [vmem:[%s2328 + $0x70] sm:$0xff]
  %v2344 = vld [vmem:[%s2328 + $0x78] sm:$0xff]
  %v2345 = vld [vmem:[%s2328 + $0x80] sm:$0xff]
  %v2346 = vld [vmem:[%s2328 + $0x88] sm:$0xff]
  %v2347 = vld [vmem:[%s2328 + $0x90] sm:$0xff]
  %v2348 = vld [vmem:[%s2328 + $0x98] sm:$0xff]
  %v2349 = vld [vmem:[%s2328 + $0xa0] sm:$0xff]
  %v2350 = vld [vmem:[%s2328 + $0xa8] sm:$0xff]
  %v2351 = vld [vmem:[%s2328 + $0xb0] sm:$0xff]
  %v2352 = vld [vmem:[%s2328 + $0xb8] sm:$0xff]
  %v2353 = vld [vmem:[%s2328 + $0xc0] sm:$0xff]
  %v2354 = vld [vmem:[%s2328 + $0xc8] sm:$0xff]
  %v2355 = vld [vmem:[%s2328 + $0xd0] sm:$0xff]
  %v2356 = vld [vmem:[%s2328 + $0xd8] sm:$0xff]
  %v2357 = vld [vmem:[%s2328 + $0xe0] sm:$0xff]
  %v2358 = vld [vmem:[%s2328 + $0xe8] sm:$0xff]
  %v2359 = vld [vmem:[%s2328 + $0xf0] sm:$0xff]
  %v2360 = vld [vmem:[%s2328 + $0xf8] sm:$0xff]
  %v2361 = vld [vmem:[%s2328 + $0x100] sm:$0xff]
  %v2362 = vld [vmem:[%s2328 + $0x108] sm:$0xff]
  %v2363 = vld [vmem:[%s2328 + $0x110] sm:$0xff]
  %v2364 = vld [vmem:[%s2328 + $0x118] sm:$0xff]
  %v2365 = vld [vmem:[%s2328 + $0x120] sm:$0xff]
  %v2366 = vld [vmem:[%s2328 + $0x128] sm:$0xff]
  %v2367 = vld [vmem:[%s2328 + $0x130] sm:$0xff]
  %v2368 = vld [vmem:[%s2328 + $0x138] sm:$0xff]
  %v2369 = vld [vmem:[%s2328 + $0x140] sm:$0xff]
  %v2370 = vld [vmem:[%s2328 + $0x148] sm:$0xff]
  %v2371 = vld [vmem:[%s2328 + $0x150] sm:$0xff]
  %v2372 = vld [vmem:[%s2328 + $0x158] sm:$0xff]
  %v2373 = vld [vmem:[%s2328 + $0x160] sm:$0xff]
  %v2374 = vld [vmem:[%s2328 + $0x168] sm:$0xff]
  %v2375 = vld [vmem:[%s2328 + $0x170] sm:$0xff]
  %v2376 = vld [vmem:[%s2328 + $0x178] sm:$0xff]
  %v2377 = vld [vmem:[%s2328 + $0x180] sm:$0xff]
  %v2378 = vld [vmem:[%s2328 + $0x188] sm:$0xff]
  %v2379 = vld [vmem:[%s2328 + $0x190] sm:$0xff]
  %v2380 = vld [vmem:[%s2328 + $0x198] sm:$0xff]
  %v2381 = vld [vmem:[%s2328 + $0x1a0] sm:$0xff]
  %v2382 = vld [vmem:[%s2328 + $0x1a8] sm:$0xff]
  %v2383 = vld [vmem:[%s2328 + $0x1b0] sm:$0xff]
  %v2384 = vld [vmem:[%s2328 + $0x1b8] sm:$0xff]
  %v2385 = vld [vmem:[%s2328 + $0x1c0] sm:$0xff]
  %v2386 = vld [vmem:[%s2328 + $0x1c8] sm:$0xff]
  %v2387 = vld [vmem:[%s2328 + $0x1d0] sm:$0xff]
  %v2388 = vld [vmem:[%s2328 + $0x1d8] sm:$0xff]
  %v2389 = vld [vmem:[%s2328 + $0x1e0] sm:$0xff]
  %v2390 = vld [vmem:[%s2328 + $0x1e8] sm:$0xff]
  %v2391 = vld [vmem:[%s2328 + $0x1f0] sm:$0xff]
  %v2392 = vld [vmem:[%s2328 + $0x1f8] sm:$0xff]
  %v2393 = vld [vmem:[%s2328 + $0x200] sm:$0xff]
  %v2394 = vld [vmem:[%s2328 + $0x208] sm:$0xff]
  %v2395 = vld [vmem:[%s2328 + $0x210] sm:$0xff]
  %v2396 = vld [vmem:[%s2328 + $0x218] sm:$0xff]
  %v2397 = vld [vmem:[%s2328 + $0x220] sm:$0xff]
  %v2398 = vld [vmem:[%s2328 + $0x228] sm:$0xff]
  %v2399 = vld [vmem:[%s2328 + $0x230] sm:$0xff]
  %v2400 = vld [vmem:[%s2328 + $0x238] sm:$0xff]
  %v2401 = vld [vmem:[%s2328 + $0x240] sm:$0xff]
  %v2402 = vld [vmem:[%s2328 + $0x248] sm:$0xff]
  %v2403 = vld [vmem:[%s2328 + $0x250] sm:$0xff]
  %v2404 = vld [vmem:[%s2328 + $0x258] sm:$0xff]
  %v2405 = vld [vmem:[%s2328 + $0x260] sm:$0xff]
  %v2406 = vld [vmem:[%s2328 + $0x268] sm:$0xff]
  %v2407 = vld [vmem:[%s2328 + $0x270] sm:$0xff]
  %v2408 = vld [vmem:[%s2328 + $0x278] sm:$0xff]
  %v2409 = vld [vmem:[%s2328 + $0x280] sm:$0xff]
  %v2410 = vld [vmem:[%s2328 + $0x288] sm:$0xff]
  %v2411 = vld [vmem:[%s2328 + $0x290] sm:$0xff]
  %v2412 = vld [vmem:[%s2328 + $0x298] sm:$0xff]
  %v2413 = vld [vmem:[%s2328 + $0x2a0] sm:$0xff]
  %v2414 = vld [vmem:[%s2328 + $0x2a8] sm:$0xff]
  %v2415 = vld [vmem:[%s2328 + $0x2b0] sm:$0xff]
  %v2416 = vld [vmem:[%s2328 + $0x2b8] sm:$0xff]
  %v2417 = vld [vmem:[%s2328 + $0x2c0] sm:$0xff]
  %v2418 = vld [vmem:[%s2328 + $0x2c8] sm:$0xff]
  %v2419 = vld [vmem:[%s2328 + $0x2d0] sm:$0xff]
  %v2420 = vld [vmem:[%s2328 + $0x2d8] sm:$0xff]
  %v2421 = vld [vmem:[%s2328 + $0x2e0] sm:$0xff]
  %v2422 = vld [vmem:[%s2328 + $0x2e8] sm:$0xff]
  %v2423 = vld [vmem:[%s2328 + $0x2f0] sm:$0xff]
  %v2424 = vld [vmem:[%s2328 + $0x2f8] sm:$0xff]
  %v2425 = vld [vmem:[%s2328 + $0x300] sm:$0xff]
  %v2426 = vld [vmem:[%s2328 + $0x308] sm:$0xff]
  %v2427 = vld [vmem:[%s2328 + $0x310] sm:$0xff]
  %v2428 = vld [vmem:[%s2328 + $0x318] sm:$0xff]
  %v2429 = vld [vmem:[%s2328 + $0x320] sm:$0xff]
  %v2430 = vld [vmem:[%s2328 + $0x328] sm:$0xff]
  %v2431 = vld [vmem:[%s2328 + $0x330] sm:$0xff]
  %v2432 = vld [vmem:[%s2328 + $0x338] sm:$0xff]
  %v2433 = vld [vmem:[%s2328 + $0x340] sm:$0xff]
  %v2434 = vld [vmem:[%s2328 + $0x348] sm:$0xff]
  %v2435 = vld [vmem:[%s2328 + $0x350] sm:$0xff]
  %v2436 = vld [vmem:[%s2328 + $0x358] sm:$0xff]
  %v2437 = vld [vmem:[%s2328 + $0x360] sm:$0xff]
  %v2438 = vld [vmem:[%s2328 + $0x368] sm:$0xff]
  %v2439 = vld [vmem:[%s2328 + $0x370] sm:$0xff]
  %v2440 = vld [vmem:[%s2328 + $0x378] sm:$0xff]
  %v2441 = vld [vmem:[%s2328 + $0x380] sm:$0xff]
  %v2442 = vld [vmem:[%s2328 + $0x388] sm:$0xff]
  %v2443 = vld [vmem:[%s2328 + $0x390] sm:$0xff]
  %v2444 = vld [vmem:[%s2328 + $0x398] sm:$0xff]
  %v2445 = vld [vmem:[%s2328 + $0x3a0] sm:$0xff]
  %v2446 = vld [vmem:[%s2328 + $0x3a8] sm:$0xff]
  %v2447 = vld [vmem:[%s2328 + $0x3b0] sm:$0xff]
  %v2448 = vld [vmem:[%s2328 + $0x3b8] sm:$0xff]
  %v2449 = vld [vmem:[%s2328 + $0x3c0] sm:$0xff]
  %v2450 = vld [vmem:[%s2328 + $0x3c8] sm:$0xff]
  %v2451 = vld [vmem:[%s2328 + $0x3d0] sm:$0xff]
  %v2452 = vld [vmem:[%s2328 + $0x3d8] sm:$0xff]
  %v2453 = vld [vmem:[%s2328 + $0x3e0] sm:$0xff]
  %v2454 = vld [vmem:[%s2328 + $0x3e8] sm:$0xff]
  %v2455 = vld [vmem:[%s2328 + $0x3f0] sm:$0xff]
  %v2456 = vld [vmem:[%s2328 + $0x3f8] sm:$0xff]
  %v2585 = vunpack.c.l.b16 %v2329
  %v2586 = vunpack.c.h.b16 %v2329
  %v2587 = vunpack.c.l.b16 %v2330
  %v2588 = vunpack.c.h.b16 %v2330
  %v2589 = vunpack.c.l.b16 %v2331
  %v2590 = vunpack.c.h.b16 %v2331
  %v2591 = vunpack.c.l.b16 %v2332
  %v2592 = vunpack.c.h.b16 %v2332
  %v2593 = vunpack.c.l.b16 %v2333
  %v2594 = vunpack.c.h.b16 %v2333
  %v2595 = vunpack.c.l.b16 %v2334
  %v2596 = vunpack.c.h.b16 %v2334
  %v2597 = vunpack.c.l.b16 %v2335
  %v2598 = vunpack.c.h.b16 %v2335
  %v2599 = vunpack.c.l.b16 %v2336
  %v2600 = vunpack.c.h.b16 %v2336
  %v2601 = vunpack.c.l.b16 %v2337
  %v2602 = vunpack.c.h.b16 %v2337
  %v2603 = vunpack.c.l.b16 %v2338
  %v2604 = vunpack.c.h.b16 %v2338
  %v2605 = vunpack.c.l.b16 %v2339
  %v2606 = vunpack.c.h.b16 %v2339
  %v2607 = vunpack.c.l.b16 %v2340
  %v2608 = vunpack.c.h.b16 %v2340
  %v2609 = vunpack.c.l.b16 %v2341
  %v2610 = vunpack.c.h.b16 %v2341
  %v2611 = vunpack.c.l.b16 %v2342
  %v2612 = vunpack.c.h.b16 %v2342
  %v2613 = vunpack.c.l.b16 %v2343
  %v2614 = vunpack.c.h.b16 %v2343
  %v2615 = vunpack.c.l.b16 %v2344
  %v2616 = vunpack.c.h.b16 %v2344
  %v2617 = vunpack.c.l.b16 %v2345
  %v2618 = vunpack.c.h.b16 %v2345
  %v2619 = vunpack.c.l.b16 %v2346
  %v2620 = vunpack.c.h.b16 %v2346
  %v2621 = vunpack.c.l.b16 %v2347
  %v2622 = vunpack.c.h.b16 %v2347
  %v2623 = vunpack.c.l.b16 %v2348
  %v2624 = vunpack.c.h.b16 %v2348
  %v2625 = vunpack.c.l.b16 %v2349
  %v2626 = vunpack.c.h.b16 %v2349
  %v2627 = vunpack.c.l.b16 %v2350
  %v2628 = vunpack.c.h.b16 %v2350
  %v2629 = vunpack.c.l.b16 %v2351
  %v2630 = vunpack.c.h.b16 %v2351
  %v2631 = vunpack.c.l.b16 %v2352
  %v2632 = vunpack.c.h.b16 %v2352
  %v2633 = vunpack.c.l.b16 %v2353
  %v2634 = vunpack.c.h.b16 %v2353
  %v2635 = vunpack.c.l.b16 %v2354
  %v2636 = vunpack.c.h.b16 %v2354
  %v2637 = vunpack.c.l.b16 %v2355
  %v2638 = vunpack.c.h.b16 %v2355
  %v2639 = vunpack.c.l.b16 %v2356
  %v2640 = vunpack.c.h.b16 %v2356
  %v2641 = vunpack.c.l.b16 %v2357
  %v2642 = vunpack.c.h.b16 %v2357
  %v2643 = vunpack.c.l.b16 %v2358
  %v2644 = vunpack.c.h.b16 %v2358
  %v2645 = vunpack.c.l.b16 %v2359
  %v2646 = vunpack.c.h.b16 %v2359
  %v2647 = vunpack.c.l.b16 %v2360
  %v2648 = vunpack.c.h.b16 %v2360
  %v2649 = vunpack.c.l.b16 %v2361
  %v2650 = vunpack.c.h.b16 %v2361
  %v2651 = vunpack.c.l.b16 %v2362
  %v2652 = vunpack.c.h.b16 %v2362
  %v2653 = vunpack.c.l.b16 %v2363
  %v2654 = vunpack.c.h.b16 %v2363
  %v2655 = vunpack.c.l.b16 %v2364
  %v2656 = vunpack.c.h.b16 %v2364
  %v2657 = vunpack.c.l.b16 %v2365
  %v2658 = vunpack.c.h.b16 %v2365
  %v2659 = vunpack.c.l.b16 %v2366
  %v2660 = vunpack.c.h.b16 %v2366
  %v2661 = vunpack.c.l.b16 %v2367
  %v2662 = vunpack.c.h.b16 %v2367
  %v2663 = vunpack.c.l.b16 %v2368
  %v2664 = vunpack.c.h.b16 %v2368
  %v2665 = vunpack.c.l.b16 %v2369
  %v2666 = vunpack.c.h.b16 %v2369
  %v2667 = vunpack.c.l.b16 %v2370
  %v2668 = vunpack.c.h.b16 %v2370
  %v2669 = vunpack.c.l.b16 %v2371
  %v2670 = vunpack.c.h.b16 %v2371
  %v2671 = vunpack.c.l.b16 %v2372
  %v2672 = vunpack.c.h.b16 %v2372
  %v2673 = vunpack.c.l.b16 %v2373
  %v2674 = vunpack.c.h.b16 %v2373
  %v2675 = vunpack.c.l.b16 %v2374
  %v2676 = vunpack.c.h.b16 %v2374
  %v2677 = vunpack.c.l.b16 %v2375
  %v2678 = vunpack.c.h.b16 %v2375
  %v2679 = vunpack.c.l.b16 %v2376
  %v2680 = vunpack.c.h.b16 %v2376
  %v2681 = vunpack.c.l.b16 %v2377
  %v2682 = vunpack.c.h.b16 %v2377
  %v2683 = vunpack.c.l.b16 %v2378
  %v2684 = vunpack.c.h.b16 %v2378
  %v2685 = vunpack.c.l.b16 %v2379
  %v2686 = vunpack.c.h.b16 %v2379
  %v2687 = vunpack.c.l.b16 %v2380
  %v2688 = vunpack.c.h.b16 %v2380
  %v2689 = vunpack.c.l.b16 %v2381
  %v2690 = vunpack.c.h.b16 %v2381
  %v2691 = vunpack.c.l.b16 %v2382
  %v2692 = vunpack.c.h.b16 %v2382
  %v2693 = vunpack.c.l.b16 %v2383
  %v2694 = vunpack.c.h.b16 %v2383
  %v2695 = vunpack.c.l.b16 %v2384
  %v2696 = vunpack.c.h.b16 %v2384
  %v2697 = vunpack.c.l.b16 %v2385
  %v2698 = vunpack.c.h.b16 %v2385
  %v2699 = vunpack.c.l.b16 %v2386
  %v2700 = vunpack.c.h.b16 %v2386
  %v2701 = vunpack.c.l.b16 %v2387
  %v2702 = vunpack.c.h.b16 %v2387
  %v2703 = vunpack.c.l.b16 %v2388
  %v2704 = vunpack.c.h.b16 %v2388
  %v2705 = vunpack.c.l.b16 %v2389
  %v2706 = vunpack.c.h.b16 %v2389
  %v2707 = vunpack.c.l.b16 %v2390
  %v2708 = vunpack.c.h.b16 %v2390
  %v2709 = vunpack.c.l.b16 %v2391
  %v2710 = vunpack.c.h.b16 %v2391
  %v2711 = vunpack.c.l.b16 %v2392
  %v2712 = vunpack.c.h.b16 %v2392
  %v2713 = vunpack.c.l.b16 %v2393
  %v2714 = vunpack.c.h.b16 %v2393
  %v2715 = vunpack.c.l.b16 %v2394
  %v2716 = vunpack.c.h.b16 %v2394
  %v2717 = vunpack.c.l.b16 %v2395
  %v2718 = vunpack.c.h.b16 %v2395
  %v2719 = vunpack.c.l.b16 %v2396
  %v2720 = vunpack.c.h.b16 %v2396
  %v2721 = vunpack.c.l.b16 %v2397
  %v2722 = vunpack.c.h.b16 %v2397
  %v2723 = vunpack.c.l.b16 %v2398
  %v2724 = vunpack.c.h.b16 %v2398
  %v2725 = vunpack.c.l.b16 %v2399
  %v2726 = vunpack.c.h.b16 %v2399
  %v2727 = vunpack.c.l.b16 %v2400
  %v2728 = vunpack.c.h.b16 %v2400
  %v2729 = vunpack.c.l.b16 %v2401
  %v2730 = vunpack.c.h.b16 %v2401
  %v2731 = vunpack.c.l.b16 %v2402
  %v2732 = vunpack.c.h.b16 %v2402
  %v2733 = vunpack.c.l.b16 %v2403
  %v2734 = vunpack.c.h.b16 %v2403
  %v2735 = vunpack.c.l.b16 %v2404
  %v2736 = vunpack.c.h.b16 %v2404
  %v2737 = vunpack.c.l.b16 %v2405
  %v2738 = vunpack.c.h.b16 %v2405
  %v2739 = vunpack.c.l.b16 %v2406
  %v2740 = vunpack.c.h.b16 %v2406
  %v2741 = vunpack.c.l.b16 %v2407
  %v2742 = vunpack.c.h.b16 %v2407
  %v2743 = vunpack.c.l.b16 %v2408
  %v2744 = vunpack.c.h.b16 %v2408
  %v2745 = vunpack.c.l.b16 %v2409
  %v2746 = vunpack.c.h.b16 %v2409
  %v2747 = vunpack.c.l.b16 %v2410
  %v2748 = vunpack.c.h.b16 %v2410
  %v2749 = vunpack.c.l.b16 %v2411
  %v2750 = vunpack.c.h.b16 %v2411
  %v2751 = vunpack.c.l.b16 %v2412
  %v2752 = vunpack.c.h.b16 %v2412
  %v2753 = vunpack.c.l.b16 %v2413
  %v2754 = vunpack.c.h.b16 %v2413
  %v2755 = vunpack.c.l.b16 %v2414
  %v2756 = vunpack.c.h.b16 %v2414
  %v2757 = vunpack.c.l.b16 %v2415
  %v2758 = vunpack.c.h.b16 %v2415
  %v2759 = vunpack.c.l.b16 %v2416
  %v2760 = vunpack.c.h.b16 %v2416
  %v2761 = vunpack.c.l.b16 %v2417
  %v2762 = vunpack.c.h.b16 %v2417
  %v2763 = vunpack.c.l.b16 %v2418
  %v2764 = vunpack.c.h.b16 %v2418
  %v2765 = vunpack.c.l.b16 %v2419
  %v2766 = vunpack.c.h.b16 %v2419
  %v2767 = vunpack.c.l.b16 %v2420
  %v2768 = vunpack.c.h.b16 %v2420
  %v2769 = vunpack.c.l.b16 %v2421
  %v2770 = vunpack.c.h.b16 %v2421
  %v2771 = vunpack.c.l.b16 %v2422
  %v2772 = vunpack.c.h.b16 %v2422
  %v2773 = vunpack.c.l.b16 %v2423
  %v2774 = vunpack.c.h.b16 %v2423
  %v2775 = vunpack.c.l.b16 %v2424
  %v2776 = vunpack.c.h.b16 %v2424
  %v2777 = vunpack.c.l.b16 %v2425
  %v2778 = vunpack.c.h.b16 %v2425
  %v2779 = vunpack.c.l.b16 %v2426
  %v2780 = vunpack.c.h.b16 %v2426
  %v2781 = vunpack.c.l.b16 %v2427
  %v2782 = vunpack.c.h.b16 %v2427
  %v2783 = vunpack.c.l.b16 %v2428
  %v2784 = vunpack.c.h.b16 %v2428
  %v2785 = vunpack.c.l.b16 %v2429
  %v2786 = vunpack.c.h.b16 %v2429
  %v2787 = vunpack.c.l.b16 %v2430
  %v2788 = vunpack.c.h.b16 %v2430
  %v2789 = vunpack.c.l.b16 %v2431
  %v2790 = vunpack.c.h.b16 %v2431
  %v2791 = vunpack.c.l.b16 %v2432
  %v2792 = vunpack.c.h.b16 %v2432
  %v2793 = vunpack.c.l.b16 %v2433
  %v2794 = vunpack.c.h.b16 %v2433
  %v2795 = vunpack.c.l.b16 %v2434
  %v2796 = vunpack.c.h.b16 %v2434
  %v2797 = vunpack.c.l.b16 %v2435
  %v2798 = vunpack.c.h.b16 %v2435
  %v2799 = vunpack.c.l.b16 %v2436
  %v2800 = vunpack.c.h.b16 %v2436
  %v2801 = vunpack.c.l.b16 %v2437
  %v2802 = vunpack.c.h.b16 %v2437
  %v2803 = vunpack.c.l.b16 %v2438
  %v2804 = vunpack.c.h.b16 %v2438
  %v2805 = vunpack.c.l.b16 %v2439
  %v2806 = vunpack.c.h.b16 %v2439
  %v2807 = vunpack.c.l.b16 %v2440
  %v2808 = vunpack.c.h.b16 %v2440
  %v2809 = vunpack.c.l.b16 %v2441
  %v2810 = vunpack.c.h.b16 %v2441
  %v2811 = vunpack.c.l.b16 %v2442
  %v2812 = vunpack.c.h.b16 %v2442
  %v2813 = vunpack.c.l.b16 %v2443
  %v2814 = vunpack.c.h.b16 %v2443
  %v2815 = vunpack.c.l.b16 %v2444
  %v2816 = vunpack.c.h.b16 %v2444
  %v2817 = vunpack.c.l.b16 %v2445
  %v2818 = vunpack.c.h.b16 %v2445
  %v2819 = vunpack.c.l.b16 %v2446
  %v2820 = vunpack.c.h.b16 %v2446
  %v2821 = vunpack.c.l.b16 %v2447
  %v2822 = vunpack.c.h.b16 %v2447
  %v2823 = vunpack.c.l.b16 %v2448
  %v2824 = vunpack.c.h.b16 %v2448
  %v2825 = vunpack.c.l.b16 %v2449
  %v2826 = vunpack.c.h.b16 %v2449
  %v2827 = vunpack.c.l.b16 %v2450
  %v2828 = vunpack.c.h.b16 %v2450
  %v2829 = vunpack.c.l.b16 %v2451
  %v2830 = vunpack.c.h.b16 %v2451
  %v2831 = vunpack.c.l.b16 %v2452
  %v2832 = vunpack.c.h.b16 %v2452
  %v2833 = vunpack.c.l.b16 %v2453
  %v2834 = vunpack.c.h.b16 %v2453
  %v2835 = vunpack.c.l.b16 %v2454
  %v2836 = vunpack.c.h.b16 %v2454
  %v2837 = vunpack.c.l.b16 %v2455
  %v2838 = vunpack.c.h.b16 %v2455
  %v2839 = vunpack.c.l.b16 %v2456
  %v2840 = vunpack.c.h.b16 %v2456
  %v2841 = vpack.c.b16 %v2589, %v2585
  %v2842 = vpack.c.b16 %v2590, %v2586
  %v2843 = vpack.c.b16 %v2591, %v2587
  %v2844 = vpack.c.b16 %v2592, %v2588
  %v2845 = vpack.c.b16 %v2597, %v2593
  %v2846 = vpack.c.b16 %v2598, %v2594
  %v2847 = vpack.c.b16 %v2599, %v2595
  %v2848 = vpack.c.b16 %v2600, %v2596
  %v2849 = vpack.c.b16 %v2605, %v2601
  %v2850 = vpack.c.b16 %v2606, %v2602
  %v2851 = vpack.c.b16 %v2607, %v2603
  %v2852 = vpack.c.b16 %v2608, %v2604
  %v2853 = vpack.c.b16 %v2613, %v2609
  %v2854 = vpack.c.b16 %v2614, %v2610
  %v2855 = vpack.c.b16 %v2615, %v2611
  %v2856 = vpack.c.b16 %v2616, %v2612
  %v2857 = vpack.c.b16 %v2621, %v2617
  %v2858 = vpack.c.b16 %v2622, %v2618
  %v2859 = vpack.c.b16 %v2623, %v2619
  %v2860 = vpack.c.b16 %v2624, %v2620
  %v2861 = vpack.c.b16 %v2629, %v2625
  %v2862 = vpack.c.b16 %v2630, %v2626
  %v2863 = vpack.c.b16 %v2631, %v2627
  %v2864 = vpack.c.b16 %v2632, %v2628
  %v2865 = vpack.c.b16 %v2637, %v2633
  %v2866 = vpack.c.b16 %v2638, %v2634
  %v2867 = vpack.c.b16 %v2639, %v2635
  %v2868 = vpack.c.b16 %v2640, %v2636
  %v2869 = vpack.c.b16 %v2645, %v2641
  %v2870 = vpack.c.b16 %v2646, %v2642
  %v2871 = vpack.c.b16 %v2647, %v2643
  %v2872 = vpack.c.b16 %v2648, %v2644
  %v2873 = vpack.c.b16 %v2653, %v2649
  %v2874 = vpack.c.b16 %v2654, %v2650
  %v2875 = vpack.c.b16 %v2655, %v2651
  %v2876 = vpack.c.b16 %v2656, %v2652
  %v2877 = vpack.c.b16 %v2661, %v2657
  %v2878 = vpack.c.b16 %v2662, %v2658
  %v2879 = vpack.c.b16 %v2663, %v2659
  %v2880 = vpack.c.b16 %v2664, %v2660
  %v2881 = vpack.c.b16 %v2669, %v2665
  %v2882 = vpack.c.b16 %v2670, %v2666
  %v2883 = vpack.c.b16 %v2671, %v2667
  %v2884 = vpack.c.b16 %v2672, %v2668
  %v2885 = vpack.c.b16 %v2677, %v2673
  %v2886 = vpack.c.b16 %v2678, %v2674
  %v2887 = vpack.c.b16 %v2679, %v2675
  %v2888 = vpack.c.b16 %v2680, %v2676
  %v2889 = vpack.c.b16 %v2685, %v2681
  %v2890 = vpack.c.b16 %v2686, %v2682
  %v2891 = vpack.c.b16 %v2687, %v2683
  %v2892 = vpack.c.b16 %v2688, %v2684
  %v2893 = vpack.c.b16 %v2693, %v2689
  %v2894 = vpack.c.b16 %v2694, %v2690
  %v2895 = vpack.c.b16 %v2695, %v2691
  %v2896 = vpack.c.b16 %v2696, %v2692
  %v2897 = vpack.c.b16 %v2701, %v2697
  %v2898 = vpack.c.b16 %v2702, %v2698
  %v2899 = vpack.c.b16 %v2703, %v2699
  %v2900 = vpack.c.b16 %v2704, %v2700
  %v2901 = vpack.c.b16 %v2709, %v2705
  %v2902 = vpack.c.b16 %v2710, %v2706
  %v2903 = vpack.c.b16 %v2711, %v2707
  %v2904 = vpack.c.b16 %v2712, %v2708
  %v2905 = vpack.c.b16 %v2717, %v2713
  %v2906 = vpack.c.b16 %v2718, %v2714
  %v2907 = vpack.c.b16 %v2719, %v2715
  %v2908 = vpack.c.b16 %v2720, %v2716
  %v2909 = vpack.c.b16 %v2725, %v2721
  %v2910 = vpack.c.b16 %v2726, %v2722
  %v2911 = vpack.c.b16 %v2727, %v2723
  %v2912 = vpack.c.b16 %v2728, %v2724
  %v2913 = vpack.c.b16 %v2733, %v2729
  %v2914 = vpack.c.b16 %v2734, %v2730
  %v2915 = vpack.c.b16 %v2735, %v2731
  %v2916 = vpack.c.b16 %v2736, %v2732
  %v2917 = vpack.c.b16 %v2741, %v2737
  %v2918 = vpack.c.b16 %v2742, %v2738
  %v2919 = vpack.c.b16 %v2743, %v2739
  %v2920 = vpack.c.b16 %v2744, %v2740
  %v2921 = vpack.c.b16 %v2749, %v2745
  %v2922 = vpack.c.b16 %v2750, %v2746
  %v2923 = vpack.c.b16 %v2751, %v2747
  %v2924 = vpack.c.b16 %v2752, %v2748
  %v2925 = vpack.c.b16 %v2757, %v2753
  %v2926 = vpack.c.b16 %v2758, %v2754
  %v2927 = vpack.c.b16 %v2759, %v2755
  %v2928 = vpack.c.b16 %v2760, %v2756
  %v2929 = vpack.c.b16 %v2765, %v2761
  %v2930 = vpack.c.b16 %v2766, %v2762
  %v2931 = vpack.c.b16 %v2767, %v2763
  %v2932 = vpack.c.b16 %v2768, %v2764
  %v2933 = vpack.c.b16 %v2773, %v2769
  %v2934 = vpack.c.b16 %v2774, %v2770
  %v2935 = vpack.c.b16 %v2775, %v2771
  %v2936 = vpack.c.b16 %v2776, %v2772
  %v2937 = vpack.c.b16 %v2781, %v2777
  %v2938 = vpack.c.b16 %v2782, %v2778
  %v2939 = vpack.c.b16 %v2783, %v2779
  %v2940 = vpack.c.b16 %v2784, %v2780
  %v2941 = vpack.c.b16 %v2789, %v2785
  %v2942 = vpack.c.b16 %v2790, %v2786
  %v2943 = vpack.c.b16 %v2791, %v2787
  %v2944 = vpack.c.b16 %v2792, %v2788
  %v2945 = vpack.c.b16 %v2797, %v2793
  %v2946 = vpack.c.b16 %v2798, %v2794
  %v2947 = vpack.c.b16 %v2799, %v2795
  %v2948 = vpack.c.b16 %v2800, %v2796
  %v2949 = vpack.c.b16 %v2805, %v2801
  %v2950 = vpack.c.b16 %v2806, %v2802
  %v2951 = vpack.c.b16 %v2807, %v2803
  %v2952 = vpack.c.b16 %v2808, %v2804
  %v2953 = vpack.c.b16 %v2813, %v2809
  %v2954 = vpack.c.b16 %v2814, %v2810
  %v2955 = vpack.c.b16 %v2815, %v2811
  %v2956 = vpack.c.b16 %v2816, %v2812
  %v2957 = vpack.c.b16 %v2821, %v2817
  %v2958 = vpack.c.b16 %v2822, %v2818
  %v2959 = vpack.c.b16 %v2823, %v2819
  %v2960 = vpack.c.b16 %v2824, %v2820
  %v2961 = vpack.c.b16 %v2829, %v2825
  %v2962 = vpack.c.b16 %v2830, %v2826
  %v2963 = vpack.c.b16 %v2831, %v2827
  %v2964 = vpack.c.b16 %v2832, %v2828
  %v2965 = vpack.c.b16 %v2837, %v2833
  %v2966 = vpack.c.b16 %v2838, %v2834
  %v2967 = vpack.c.b16 %v2839, %v2835
  %v2968 = vpack.c.b16 %v2840, %v2836
  %3097 = vmatprep.subr.bf16.mxu0 %v2842
  %3098 = vmatpush1.bf16.msra.mxu0 %v2841
  %3099 = vmatprep.subr.bf16.mxu0 %v2846
  %3100 = vmatpush1.bf16.msra.mxu0 %v2845
  %3101 = vmatprep.subr.bf16.mxu0 %v2850
  %3102 = vmatpush1.bf16.msra.mxu0 %v2849
  %3103 = vmatprep.subr.bf16.mxu0 %v2854
  %3104 = vmatpush1.bf16.msra.mxu0 %v2853
  %3105 = vmatprep.subr.bf16.mxu0 %v2858
  %3106 = vmatpush1.bf16.msra.mxu0 %v2857
  %3107 = vmatprep.subr.bf16.mxu0 %v2862
  %3108 = vmatpush1.bf16.msra.mxu0 %v2861
  %3109 = vmatprep.subr.bf16.mxu0 %v2866
  %3110 = vmatpush1.bf16.msra.mxu0 %v2865
  %3111 = vmatprep.subr.bf16.mxu0 %v2870
  %3112 = vmatpush1.bf16.msra.mxu0 %v2869
  %3113 = vmatprep.subr.bf16.mxu0 %v2874
  %3114 = vmatpush1.bf16.msra.mxu0 %v2873
  %3115 = vmatprep.subr.bf16.mxu0 %v2878
  %3116 = vmatpush1.bf16.msra.mxu0 %v2877
  %3117 = vmatprep.subr.bf16.mxu0 %v2882
  %3118 = vmatpush1.bf16.msra.mxu0 %v2881
  %3119 = vmatprep.subr.bf16.mxu0 %v2886
  %3120 = vmatpush1.bf16.msra.mxu0 %v2885
  %3121 = vmatprep.subr.bf16.mxu0 %v2890
  %3122 = vmatpush1.bf16.msra.mxu0 %v2889
  %3123 = vmatprep.subr.bf16.mxu0 %v2894
  %3124 = vmatpush1.bf16.msra.mxu0 %v2893
  %3125 = vmatprep.subr.bf16.mxu0 %v2898
  %3126 = vmatpush1.bf16.msra.mxu0 %v2897
  %3127 = vmatprep.subr.bf16.mxu0 %v2902
  %3128 = vmatpush1.bf16.msra.mxu0 %v2901
  %3129 = vmatprep.mubr.bf16.mxu0 %v2321
  %3130 = vmatmul.mubr.bf16.gmra.mrb[0].mxu0 %v2320
  %v3131 = vpop.f32.mrb[0].mxu0
  %v3132 = vadd.f32 0.0, %v3131
  %v3133 = vpop.f32.mrb[0].mxu0
  %v3134 = vadd.f32 0.0, %v3133
  %v3135 = vpop.f32.mrb[0].mxu0
  %v3136 = vadd.f32 0.0, %v3135
  %v3137 = vpop.f32.mrb[0].mxu0
  %3138 = vmatprep.mubr.bf16.mxu0 %v2325
  %3139 = vmatmul.mubr.bf16.gmra.mrb[0].mxu0 %v2324
  %v3140 = vpop.f32.mrb[0].mxu0
  %v3141 = vadd.f32 0.0, %v3140
  %v3142 = vpop.f32.mrb[0].mxu0
  %v3143 = vadd.f32 0.0, %v3142
  %v3144 = vpop.f32.mrb[0].mxu0
  %v3145 = vpop.f32.mrb[0].mxu0
  %3146 = vdwg.mxu0
  %3147 = vmatprep.subr.bf16.mxu0 %v2906
  %3148 = vmatpush1.bf16.msra.mxu0 %v2905
  %3149 = vmatprep.subr.bf16.mxu0 %v2910
  %3150 = vmatpush1.bf16.msra.mxu0 %v2909
  %3151 = vmatprep.subr.bf16.mxu0 %v2914
  %3152 = vmatpush1.bf16.msra.mxu0 %v2913
  %3153 = vmatprep.subr.bf16.mxu0 %v2918
  %3154 = vmatpush1.bf16.msra.mxu0 %v2917
  %3155 = vmatprep.subr.bf16.mxu0 %v2922
  %3156 = vmatpush1.bf16.msra.mxu0 %v2921
  %3157 = vmatprep.subr.bf16.mxu0 %v2926
  %3158 = vmatpush1.bf16.msra.mxu0 %v2925
  %3159 = vmatprep.subr.bf16.mxu0 %v2930
  %3160 = vmatpush1.bf16.msra.mxu0 %v2929
  %3161 = vmatprep.subr.bf16.mxu0 %v2934
  %3162 = vmatpush1.bf16.msra.mxu0 %v2933
  %3163 = vmatprep.subr.bf16.mxu0 %v2938
  %3164 = vmatpush1.bf16.msra.mxu0 %v2937
  %3165 = vmatprep.subr.bf16.mxu0 %v2942
  %3166 = vmatpush1.bf16.msra.mxu0 %v2941
  %3167 = vmatprep.subr.bf16.mxu0 %v2946
  %3168 = vmatpush1.bf16.msra.mxu0 %v2945
  %3169 = vmatprep.subr.bf16.mxu0 %v2950
  %3170 = vmatpush1.bf16.msra.mxu0 %v2949
  %3171 = vmatprep.subr.bf16.mxu0 %v2954
  %3172 = vmatpush1.bf16.msra.mxu0 %v2953
  %3173 = vmatprep.subr.bf16.mxu0 %v2958
  %3174 = vmatpush1.bf16.msra.mxu0 %v2957
  %3175 = vmatprep.subr.bf16.mxu0 %v2962
  %3176 = vmatpush1.bf16.msra.mxu0 %v2961
  %3177 = vmatprep.subr.bf16.mxu0 %v2966
  %3178 = vmatpush1.bf16.msra.mxu0 %v2965
  %3179 = vmatprep.mubr.bf16.mxu0 %v2323
  %3180 = vmatmul.mubr.bf16.gmra.mrb[0].mxu0 %v2322
  %v3181 = vpop.f32.mrb[0].mxu0
  %v3182 = vadd.f32 %v3132, %v3181
  %v3183 = vpop.f32.mrb[0].mxu0
  %v3184 = vadd.f32 %v3134, %v3183
  %v3185 = vpop.f32.mrb[0].mxu0
  %v3186 = vadd.f32 %v3136, %v3185
  %v3187 = vpop.f32.mrb[0].mxu0
  %3188 = vmatprep.mubr.bf16.mxu0 %v2327
  %3189 = vmatmul.mubr.bf16.gmra.mrb[0].mxu0 %v2326
  %v3190 = vpop.f32.mrb[0].mxu0
  %v3191 = vadd.f32 %v3141, %v3190
  %v3192 = vpop.f32.mrb[0].mxu0
  %v3193 = vadd.f32 %v3143, %v3192
  %v3194 = vpop.f32.mrb[0].mxu0
  %v3195 = vpop.f32.mrb[0].mxu0
  %3196 = vdwg.mxu0
  %3197 = vmatprep.subr.bf16.mxu0 %v2844
  %3198 = vmatpush1.bf16.msra.mxu0 %v2843
  %3199 = vmatprep.subr.bf16.mxu0 %v2848
  %3200 = vmatpush1.bf16.msra.mxu0 %v2847
  %3201 = vmatprep.subr.bf16.mxu0 %v2852
  %3202 = vmatpush1.bf16.msra.mxu0 %v2851
  %3203 = vmatprep.subr.bf16.mxu0 %v2856
  %3204 = vmatpush1.bf16.msra.mxu0 %v2855
  %3205 = vmatprep.subr.bf16.mxu0 %v2860
  %3206 = vmatpush1.bf16.msra.mxu0 %v2859
  %3207 = vmatprep.subr.bf16.mxu0 %v2864
  %3208 = vmatpush1.bf16.msra.mxu0 %v2863
  %3209 = vmatprep.subr.bf16.mxu0 %v2868
  %3210 = vmatpush1.bf16.msra.mxu0 %v2867
  %3211 = vmatprep.subr.bf16.mxu0 %v2872
  %3212 = vmatpush1.bf16.msra.mxu0 %v2871
  %3213 = vmatprep.subr.bf16.mxu0 %v2876
  %3214 = vmatpush1.bf16.msra.mxu0 %v2875
  %3215 = vmatprep.subr.bf16.mxu0 %v2880
  %3216 = vmatpush1.bf16.msra.mxu0 %v2879
  %3217 = vmatprep.subr.bf16.mxu0 %v2884
  %3218 = vmatpush1.bf16.msra.mxu0 %v2883
  %3219 = vmatprep.subr.bf16.mxu0 %v2888
  %3220 = vmatpush1.bf16.msra.mxu0 %v2887
  %3221 = vmatprep.subr.bf16.mxu0 %v2892
  %3222 = vmatpush1.bf16.msra.mxu0 %v2891
  %3223 = vmatprep.subr.bf16.mxu0 %v2896
  %3224 = vmatpush1.bf16.msra.mxu0 %v2895
  %3225 = vmatprep.subr.bf16.mxu0 %v2900
  %3226 = vmatpush1.bf16.msra.mxu0 %v2899
  %3227 = vmatprep.subr.bf16.mxu0 %v2904
  %3228 = vmatpush1.bf16.msra.mxu0 %v2903
  %3229 = vmatprep.mubr.bf16.mxu0 %v2321
  %3230 = vmatmul.mubr.bf16.gmra.mrb[0].mxu0 %v2320
  %v3231 = vpop.f32.mrb[0].mxu0
  %v3232 = vadd.f32 0.0, %v3231
  %v3233 = vpop.f32.mrb[0].mxu0
  %v3234 = vadd.f32 0.0, %v3233
  %v3235 = vpop.f32.mrb[0].mxu0
  %v3236 = vadd.f32 0.0, %v3235
  %v3237 = vpop.f32.mrb[0].mxu0
  %v3238 = vadd.f32 0.0, %v3237
  %3239 = vmatprep.mubr.bf16.mxu0 %v2325
  %3240 = vmatmul.mubr.bf16.gmra.mrb[0].mxu0 %v2324
  %v3241 = vpop.f32.mrb[0].mxu0
  %v3242 = vadd.f32 0.0, %v3241
  %v3243 = vpop.f32.mrb[0].mxu0
  %v3244 = vadd.f32 0.0, %v3243
  %v3245 = vpop.f32.mrb[0].mxu0
  %v3246 = vpop.f32.mrb[0].mxu0
  %v3247 = vadd.f32 0.0, %v3246
  %3248 = vdwg.mxu0
  %3249 = vmatprep.subr.bf16.mxu0 %v2908
  %3250 = vmatpush1.bf16.msra.mxu0 %v2907
  %3251 = vmatprep.subr.bf16.mxu0 %v2912
  %3252 = vmatpush1.bf16.msra.mxu0 %v2911
  %3253 = vmatprep.subr.bf16.mxu0 %v2916
  %3254 = vmatpush1.bf16.msra.mxu0 %v2915
  %3255 = vmatprep.subr.bf16.mxu0 %v2920
  %3256 = vmatpush1.bf16.msra.mxu0 %v2919
  %3257 = vmatprep.subr.bf16.mxu0 %v2924
  %3258 = vmatpush1.bf16.msra.mxu0 %v2923
  %3259 = vmatprep.subr.bf16.mxu0 %v2928
  %3260 = vmatpush1.bf16.msra.mxu0 %v2927
  %3261 = vmatprep.subr.bf16.mxu0 %v2932
  %3262 = vmatpush1.bf16.msra.mxu0 %v2931
  %3263 = vmatprep.subr.bf16.mxu0 %v2936
  %3264 = vmatpush1.bf16.msra.mxu0 %v2935
  %3265 = vmatprep.subr.bf16.mxu0 %v2940
  %3266 = vmatpush1.bf16.msra.mxu0 %v2939
  %3267 = vmatprep.subr.bf16.mxu0 %v2944
  %3268 = vmatpush1.bf16.msra.mxu0 %v2943
  %3269 = vmatprep.subr.bf16.mxu0 %v2948
  %3270 = vmatpush1.bf16.msra.mxu0 %v2947
  %3271 = vmatprep.subr.bf16.mxu0 %v2952
  %3272 = vmatpush1.bf16.msra.mxu0 %v2951
  %3273 = vmatprep.subr.bf16.mxu0 %v2956
  %3274 = vmatpush1.bf16.msra.mxu0 %v2955
  %3275 = vmatprep.subr.bf16.mxu0 %v2960
  %3276 = vmatpush1.bf16.msra.mxu0 %v2959
  %3277 = vmatprep.subr.bf16.mxu0 %v2964
  %3278 = vmatpush1.bf16.msra.mxu0 %v2963
  %3279 = vmatprep.subr.bf16.mxu0 %v2968
  %3280 = vmatpush1.bf16.msra.mxu0 %v2967
  %3281 = vmatprep.mubr.bf16.mxu0 %v2323
  %3282 = vmatmul.mubr.bf16.gmra.mrb[0].mxu0 %v2322
  %v3283 = vpop.f32.mrb[0].mxu0
  %v3284 = vadd.f32 %v3232, %v3283
  %v3285 = vpop.f32.mrb[0].mxu0
  %v3286 = vadd.f32 %v3234, %v3285
  %v3287 = vpop.f32.mrb[0].mxu0
  %v3288 = vadd.f32 %v3236, %v3287
  %v3289 = vpop.f32.mrb[0].mxu0
  %v3290 = vadd.f32 %v3238, %v3289
  %3291 = vmatprep.mubr.bf16.mxu0 %v2327
  %3292 = vmatmul.mubr.bf16.gmra.mrb[0].mxu0 %v2326
  %v3293 = vpop.f32.mrb[0].mxu0
  %v3294 = vadd.f32 %v3242, %v3293
  %v3295 = vpop.f32.mrb[0].mxu0
  %v3296 = vadd.f32 %v3244, %v3295
  %v3297 = vpop.f32.mrb[0].mxu0
  %v3298 = vpop.f32.mrb[0].mxu0
  %v3299 = vadd.f32 %v3247, %v3298
  %3300 = vdwg.mxu0
  %v3302 = vrot.slane %v3184, 2
  %v3304 = vadd.f32 %v3182, %v3302
  %v3306 = vrot.slane %v3284, 4
  %v3308 = vadd.f32 %v3304, %v3306
  %v3310 = vrot.slane %v3286, 6
  %v3312 = vadd.f32 %v3308, %v3310
  %s3313 = scalar_lea.vmem %s4, 1
  %v3314 = vld [vmem:[%s3313] sm:$0x1]
  %v3316 = vlaneseq
  %v3317 = vshrl.u32 %v3316, 7
  %v3318 = vsub.s32 0, %v3317
  %v3319 = vrot.slane %v3314, %v3318
  %v3321 = vadd.f32 %v3312, %v3319
  %v3322 = vmax.f32 %v3321, 0.0
  %v3324 = vrot.slane %v3288, 4
  %v3326 = vadd.f32 %v3304, %v3324
  %v3328 = vrot.slane %v3290, 6
  %v3330 = vadd.f32 %v3326, %v3328
  %v3331 = vadd.f32 %v3330, %v3319
  %v3332 = vmax.f32 %v3331, 0.0
  %v3334 = vrot.slane %v3332, 4
  %v3336 = vadd.f32 %v3322, %v3334
  %v3338 = vrot.slane %v3193, 2
  %v3340 = vadd.f32 %v3186, %v3338
  %v3342 = vrot.slane %v3294, 4
  %v3344 = vadd.f32 %v3340, %v3342
  %v3346 = vrot.slane %v3296, 6
  %v3348 = vadd.f32 %v3344, %v3346
  %v3349 = vadd.f32 %v3348, %v3319
  %v3350 = vmax.f32 %v3349, 0.0
  %v3352 = vrot.slane %v3350, 6
  %v3354 = vadd.f32 %v3336, %v3352
  %v3355 = vadd.f32 %v3191, %v3338
  %v3356 = vadd.f32 %v3355, %v3342
  %v3358 = vrot.slane %v3299, 6
  %v3360 = vadd.f32 %v3356, %v3358
  %v3361 = vadd.f32 %v3360, %v3319
  %v3362 = vmax.f32 %v3361, 0.0
  %v3364 = vrot.slane %v3362, 2
  %v3366 = vadd.f32 %v3354, %v3364
  %v3367 = vmul.f32 %v3366, 0.25
  %s3368 = scalar_lea.vmem %s5, 384
  %v3369 = vld [vmem:[%s3368] sm:$0xff]
  %v3370 = vld [vmem:[%s3368 + $0x8] sm:$0xff]
  %v3371 = vld [vmem:[%s3368 + $0x10] sm:$0xff]
  %v3372 = vld [vmem:[%s3368 + $0x18] sm:$0xff]
  %v3373 = vld [vmem:[%s3368 + $0x20] sm:$0xff]
  %v3374 = vld [vmem:[%s3368 + $0x28] sm:$0xff]
  %v3375 = vld [vmem:[%s3368 + $0x30] sm:$0xff]
  %v3376 = vld [vmem:[%s3368 + $0x38] sm:$0xff]
  %v3377 = vld [vmem:[%s3368 + $0x40] sm:$0xff]
  %v3378 = vld [vmem:[%s3368 + $0x48] sm:$0xff]
  %v3379 = vld [vmem:[%s3368 + $0x50] sm:$0xff]
  %v3380 = vld [vmem:[%s3368 + $0x58] sm:$0xff]
  %v3381 = vld [vmem:[%s3368 + $0x60] sm:$0xff]
  %v3382 = vld [vmem:[%s3368 + $0x68] sm:$0xff]
  %v3383 = vld [vmem:[%s3368 + $0x70] sm:$0xff]
  %v3384 = vld [vmem:[%s3368 + $0x78] sm:$0xff]
  %v3385 = vld [vmem:[%s3368 + $0x80] sm:$0xff]
  %v3386 = vld [vmem:[%s3368 + $0x88] sm:$0xff]
  %v3387 = vld [vmem:[%s3368 + $0x90] sm:$0xff]
  %v3388 = vld [vmem:[%s3368 + $0x98] sm:$0xff]
  %v3389 = vld [vmem:[%s3368 + $0xa0] sm:$0xff]
  %v3390 = vld [vmem:[%s3368 + $0xa8] sm:$0xff]
  %v3391 = vld [vmem:[%s3368 + $0xb0] sm:$0xff]
  %v3392 = vld [vmem:[%s3368 + $0xb8] sm:$0xff]
  %v3393 = vld [vmem:[%s3368 + $0xc0] sm:$0xff]
  %v3394 = vld [vmem:[%s3368 + $0xc8] sm:$0xff]
  %v3395 = vld [vmem:[%s3368 + $0xd0] sm:$0xff]
  %v3396 = vld [vmem:[%s3368 + $0xd8] sm:$0xff]
  %v3397 = vld [vmem:[%s3368 + $0xe0] sm:$0xff]
  %v3398 = vld [vmem:[%s3368 + $0xe8] sm:$0xff]
  %v3399 = vld [vmem:[%s3368 + $0xf0] sm:$0xff]
  %v3400 = vld [vmem:[%s3368 + $0xf8] sm:$0xff]
  %v3401 = vld [vmem:[%s3368 + $0x100] sm:$0xff]
  %v3402 = vld [vmem:[%s3368 + $0x108] sm:$0xff]
  %v3403 = vld [vmem:[%s3368 + $0x110] sm:$0xff]
  %v3404 = vld [vmem:[%s3368 + $0x118] sm:$0xff]
  %v3405 = vld [vmem:[%s3368 + $0x120] sm:$0xff]
  %v3406 = vld [vmem:[%s3368 + $0x128] sm:$0xff]
  %v3407 = vld [vmem:[%s3368 + $0x130] sm:$0xff]
  %v3408 = vld [vmem:[%s3368 + $0x138] sm:$0xff]
  %v3409 = vld [vmem:[%s3368 + $0x140] sm:$0xff]
  %v3410 = vld [vmem:[%s3368 + $0x148] sm:$0xff]
  %v3411 = vld [vmem:[%s3368 + $0x150] sm:$0xff]
  %v3412 = vld [vmem:[%s3368 + $0x158] sm:$0xff]
  %v3413 = vld [vmem:[%s3368 + $0x160] sm:$0xff]
  %v3414 = vld [vmem:[%s3368 + $0x168] sm:$0xff]
  %v3415 = vld [vmem:[%s3368 + $0x170] sm:$0xff]
  %v3416 = vld [vmem:[%s3368 + $0x178] sm:$0xff]
  %3417 = vmatprep.subr.mxu0 %v3370
  %3418 = vmatpush1.msra.mxu0 %v3369
  %3419 = vmatprep.subr.mxu0 %v3373
  %3420 = vmatpush1.msra.mxu0 %v3372
  %3421 = vmatprep.subr.mxu0 %v3376
  %3422 = vmatpush1.msra.mxu0 %v3375
  %3423 = vmatprep.subr.mxu0 %v3379
  %3424 = vmatpush1.msra.mxu0 %v3378
  %3425 = vmatprep.subr.mxu0 %v3382
  %3426 = vmatpush1.msra.mxu0 %v3381
  %3427 = vmatprep.subr.mxu0 %v3385
  %3428 = vmatpush1.msra.mxu0 %v3384
  %3429 = vmatprep.subr.mxu0 %v3388
  %3430 = vmatpush1.msra.mxu0 %v3387
  %3431 = vmatprep.subr.mxu0 %v3391
  %3432 = vmatpush1.msra.mxu0 %v3390
  %3433 = vmatprep.subr.mxu0 %v3394
  %3434 = vmatpush1.msra.mxu0 %v3393
  %3435 = vmatprep.subr.mxu0 %v3397
  %3436 = vmatpush1.msra.mxu0 %v3396
  %3437 = vmatprep.subr.mxu0 %v3400
  %3438 = vmatpush1.msra.mxu0 %v3399
  %3439 = vmatprep.subr.mxu0 %v3403
  %3440 = vmatpush1.msra.mxu0 %v3402
  %3441 = vmatprep.subr.mxu0 %v3406
  %3442 = vmatpush1.msra.mxu0 %v3405
  %3443 = vmatprep.subr.mxu0 %v3409
  %3444 = vmatpush1.msra.mxu0 %v3408
  %3445 = vmatprep.subr.mxu0 %v3412
  %3446 = vmatpush1.msra.mxu0 %v3411
  %3447 = vmatprep.subr.mxu0 %v3415
  %3448 = vmatpush1.msra.mxu0 %v3414
  %3449 = vmatprep.subr.mxu0 0.0
  %3450 = vmatpush1.msra.mxu0 0.0
  %3451 = vmatprep.subr.mxu0 0.0
  %3452 = vmatpush1.msra.mxu0 0.0
  %3453 = vmatprep.subr.mxu0 0.0
  %3454 = vmatpush1.msra.mxu0 0.0
  %3455 = vmatprep.subr.mxu0 0.0
  %3456 = vmatpush1.msra.mxu0 0.0
  %3457 = vmatprep.subr.mxu0 0.0
  %3458 = vmatpush1.msra.mxu0 0.0
  %3459 = vmatprep.subr.mxu0 0.0
  %3460 = vmatpush1.msra.mxu0 0.0
  %3461 = vmatprep.subr.mxu0 0.0
  %3462 = vmatpush1.msra.mxu0 0.0
  %3463 = vmatprep.subr.mxu0 0.0
  %3464 = vmatpush1.msra.mxu0 0.0
  %3465 = vmatprep.subr.mxu0 0.0
  %3466 = vmatpush1.msra.mxu0 0.0
  %3467 = vmatprep.subr.mxu0 0.0
  %3468 = vmatpush1.msra.mxu0 0.0
  %3469 = vmatprep.subr.mxu0 0.0
  %3470 = vmatpush1.msra.mxu0 0.0
  %3471 = vmatprep.subr.mxu0 0.0
  %3472 = vmatpush1.msra.mxu0 0.0
  %3473 = vmatprep.subr.mxu0 0.0
  %3474 = vmatpush1.msra.mxu0 0.0
  %3475 = vmatprep.subr.mxu0 0.0
  %3476 = vmatpush1.msra.mxu0 0.0
  %3477 = vmatprep.subr.mxu0 0.0
  %3478 = vmatpush1.msra.mxu0 0.0
  %3479 = vmatprep.subr.mxu0 0.0
  %3480 = vmatpush1.msra.mxu0 0.0
  %3481 = vmatprep.mubr.f32.mxu0 0.0
  %3482 = vmatmul.mubr.f32.gmra.mrb[0].mxu0 %v3367
  %v3483 = vpop.f32.mrb[0].mxu0
  %v3484 = vadd.f32 0.0, %v3483
  %v3485 = vpop.f32.mrb[0].mxu0
  %v3486 = vadd.f32 0.0, %v3485
  %3487 = vdwg.mxu0
  %3488 = vmatprep.subr.mxu0 0.0
  %3489 = vmatpush1.msra.mxu0 %v3371
  %3490 = vmatprep.subr.mxu0 0.0
  %3491 = vmatpush1.msra.mxu0 %v3374
  %3492 = vmatprep.subr.mxu0 0.0
  %3493 = vmatpush1.msra.mxu0 %v3377
  %3494 = vmatprep.subr.mxu0 0.0
  %3495 = vmatpush1.msra.mxu0 %v3380
  %3496 = vmatprep.subr.mxu0 0.0
  %3497 = vmatpush1.msra.mxu0 %v3383
  %3498 = vmatprep.subr.mxu0 0.0
  %3499 = vmatpush1.msra.mxu0 %v3386
  %3500 = vmatprep.subr.mxu0 0.0
  %3501 = vmatpush1.msra.mxu0 %v3389
  %3502 = vmatprep.subr.mxu0 0.0
  %3503 = vmatpush1.msra.mxu0 %v3392
  %3504 = vmatprep.subr.mxu0 0.0
  %3505 = vmatpush1.msra.mxu0 %v3395
  %3506 = vmatprep.subr.mxu0 0.0
  %3507 = vmatpush1.msra.mxu0 %v3398
  %3508 = vmatprep.subr.mxu0 0.0
  %3509 = vmatpush1.msra.mxu0 %v3401
  %3510 = vmatprep.subr.mxu0 0.0
  %3511 = vmatpush1.msra.mxu0 %v3404
  %3512 = vmatprep.subr.mxu0 0.0
  %3513 = vmatpush1.msra.mxu0 %v3407
  %3514 = vmatprep.subr.mxu0 0.0
  %3515 = vmatpush1.msra.mxu0 %v3410
  %3516 = vmatprep.subr.mxu0 0.0
  %3517 = vmatpush1.msra.mxu0 %v3413
  %3518 = vmatprep.subr.mxu0 0.0
  %3519 = vmatpush1.msra.mxu0 %v3416
  %3520 = vmatprep.subr.mxu0 0.0
  %3521 = vmatpush1.msra.mxu0 0.0
  %3522 = vmatprep.subr.mxu0 0.0
  %3523 = vmatpush1.msra.mxu0 0.0
  %3524 = vmatprep.subr.mxu0 0.0
  %3525 = vmatpush1.msra.mxu0 0.0
  %3526 = vmatprep.subr.mxu0 0.0
  %3527 = vmatpush1.msra.mxu0 0.0
  %3528 = vmatprep.subr.mxu0 0.0
  %3529 = vmatpush1.msra.mxu0 0.0
  %3530 = vmatprep.subr.mxu0 0.0
  %3531 = vmatpush1.msra.mxu0 0.0
  %3532 = vmatprep.subr.mxu0 0.0
  %3533 = vmatpush1.msra.mxu0 0.0
  %3534 = vmatprep.subr.mxu0 0.0
  %3535 = vmatpush1.msra.mxu0 0.0
  %3536 = vmatprep.subr.mxu0 0.0
  %3537 = vmatpush1.msra.mxu0 0.0
  %3538 = vmatprep.subr.mxu0 0.0
  %3539 = vmatpush1.msra.mxu0 0.0
  %3540 = vmatprep.subr.mxu0 0.0
  %3541 = vmatpush1.msra.mxu0 0.0
  %3542 = vmatprep.subr.mxu0 0.0
  %3543 = vmatpush1.msra.mxu0 0.0
  %3544 = vmatprep.subr.mxu0 0.0
  %3545 = vmatpush1.msra.mxu0 0.0
  %3546 = vmatprep.subr.mxu0 0.0
  %3547 = vmatpush1.msra.mxu0 0.0
  %3548 = vmatprep.subr.mxu0 0.0
  %3549 = vmatpush1.msra.mxu0 0.0
  %3550 = vmatprep.subr.mxu0 0.0
  %3551 = vmatpush1.msra.mxu0 0.0
  %3552 = vmatprep.mubr.f32.mxu0 0.0
  %3553 = vmatmul.mubr.f32.gmra.mrb[0].mxu0 %v3367
  %v3554 = vpop.f32.mrb[0].mxu0
  %v3555 = vadd.f32 0.0, %v3554
  %v3556 = vpop.f32.mrb[0].mxu0
  %3557 = vdwg.mxu0
  %v3558 = vadd.f32 %v1901, %v3484
  %v3559 = vadd.f32 %v1902, %v3486
  %v3560 = vadd.f32 %v1903, %v3555
  %vm3561 = vcmask 1041408
  %v3562 = vsel %vm3561, %v3558, 0.0
  %3563 = vadd.xlane.f32.xlu0 %v3562
  %v3564 = vpop.xlane.xlu0 %3563
  %v3565 = vrcp.pop 128.0
  %v3566 = vmul.f32 %v3564, %v3565
  %v3567 = vsub.f32 %v3558, %v3566
  %v3568 = vmul.f32 %v3567, %v3567
  %v3569 = vsel %vm3561, %v3568, 0.0
  %3570 = vadd.xlane.f32.xlu0 %v3569
  %v3571 = vpop.xlane.xlu0 %3570
  %v3572 = vmul.f32 %v3571, %v3565
  %v3573 = vadd.f32 %v3572, 1e-05
  %v3574 = vrsqrt.pop %v3573
  %v3575 = vmul.f32 %v3567, %v3574
  %v3576 = vmax.f32 %v3575, 0.0
  %v3577 = vsel %vm3561, %v3559, 0.0
  %3578 = vadd.xlane.f32.xlu0 %v3577
  %v3579 = vpop.xlane.xlu0 %3578
  %v3580 = vmul.f32 %v3579, %v3565
  %v3581 = vsub.f32 %v3559, %v3580
  %v3582 = vmul.f32 %v3581, %v3581
  %v3583 = vsel %vm3561, %v3582, 0.0
  %3584 = vadd.xlane.f32.xlu0 %v3583
  %v3585 = vpop.xlane.xlu0 %3584
  %v3586 = vmul.f32 %v3585, %v3565
  %v3587 = vadd.f32 %v3586, 1e-05
  %v3588 = vrsqrt.pop %v3587
  %v3589 = vmul.f32 %v3581, %v3588
  %v3590 = vmax.f32 %v3589, 0.0
  %v3591 = vsel %vm3561, %v3560, 0.0
  %3592 = vadd.xlane.f32.xlu0 %v3591
  %v3593 = vpop.xlane.xlu0 %3592
  %v3594 = vmul.f32 %v3593, %v3565
  %v3595 = vsub.f32 %v3560, %v3594
  %v3596 = vmul.f32 %v3595, %v3595
  %v3597 = vsel %vm3561, %v3596, 0.0
  %3598 = vadd.xlane.f32.xlu0 %v3597
  %v3599 = vpop.xlane.xlu0 %3598
  %v3600 = vmul.f32 %v3599, %v3565
  %v3601 = vadd.f32 %v3600, 1e-05
  %v3602 = vrsqrt.pop %v3601
  %v3603 = vmul.f32 %v3595, %v3602
  %v3604 = vmax.f32 %v3603, 0.0
  %v3605 = vld [vmem:[%s9] sm:$0xff]
  %v3606 = vld [vmem:[%s9 + $0x8] sm:$0xff]
  %v3607 = vld [vmem:[%s9 + $0x10] sm:$0xff]
  %v3608 = vld [vmem:[%s9 + $0x18] sm:$0xff]
  %v3609 = vld [vmem:[%s9 + $0x20] sm:$0xff]
  %v3610 = vld [vmem:[%s9 + $0x28] sm:$0xff]
  %v3611 = vld [vmem:[%s9 + $0x30] sm:$0xff]
  %v3612 = vld [vmem:[%s9 + $0x38] sm:$0xff]
  %v3613 = vld [vmem:[%s9 + $0x40] sm:$0xff]
  %v3614 = vld [vmem:[%s9 + $0x48] sm:$0xff]
  %v3615 = vld [vmem:[%s9 + $0x50] sm:$0xff]
  %v3616 = vld [vmem:[%s9 + $0x58] sm:$0xff]
  %v3617 = vld [vmem:[%s9 + $0x60] sm:$0xff]
  %v3618 = vld [vmem:[%s9 + $0x68] sm:$0xff]
  %v3619 = vld [vmem:[%s9 + $0x70] sm:$0xff]
  %v3620 = vld [vmem:[%s9 + $0x78] sm:$0xff]
  %v3621 = vld [vmem:[%s9 + $0x80] sm:$0xff]
  %v3622 = vld [vmem:[%s9 + $0x88] sm:$0xff]
  %v3623 = vld [vmem:[%s9 + $0x90] sm:$0xff]
  %v3624 = vld [vmem:[%s9 + $0x98] sm:$0xff]
  %v3625 = vld [vmem:[%s9 + $0xa0] sm:$0xff]
  %v3626 = vld [vmem:[%s9 + $0xa8] sm:$0xff]
  %v3627 = vld [vmem:[%s9 + $0xb0] sm:$0xff]
  %v3628 = vld [vmem:[%s9 + $0xb8] sm:$0xff]
  %v3629 = vld [vmem:[%s9 + $0xc0] sm:$0xff]
  %v3630 = vld [vmem:[%s9 + $0xc8] sm:$0xff]
  %v3631 = vld [vmem:[%s9 + $0xd0] sm:$0xff]
  %v3632 = vld [vmem:[%s9 + $0xd8] sm:$0xff]
  %v3633 = vld [vmem:[%s9 + $0xe0] sm:$0xff]
  %v3634 = vld [vmem:[%s9 + $0xe8] sm:$0xff]
  %v3635 = vld [vmem:[%s9 + $0xf0] sm:$0xff]
  %v3636 = vld [vmem:[%s9 + $0xf8] sm:$0xff]
  %v3637 = vld [vmem:[%s9 + $0x100] sm:$0xff]
  %v3638 = vld [vmem:[%s9 + $0x108] sm:$0xff]
  %v3639 = vld [vmem:[%s9 + $0x110] sm:$0xff]
  %v3640 = vld [vmem:[%s9 + $0x118] sm:$0xff]
  %v3641 = vld [vmem:[%s9 + $0x120] sm:$0xff]
  %v3642 = vld [vmem:[%s9 + $0x128] sm:$0xff]
  %v3643 = vld [vmem:[%s9 + $0x130] sm:$0xff]
  %v3644 = vld [vmem:[%s9 + $0x138] sm:$0xff]
  %v3645 = vld [vmem:[%s9 + $0x140] sm:$0xff]
  %v3646 = vld [vmem:[%s9 + $0x148] sm:$0xff]
  %v3647 = vld [vmem:[%s9 + $0x150] sm:$0xff]
  %v3648 = vld [vmem:[%s9 + $0x158] sm:$0xff]
  %v3649 = vld [vmem:[%s9 + $0x160] sm:$0xff]
  %v3650 = vld [vmem:[%s9 + $0x168] sm:$0xff]
  %v3651 = vld [vmem:[%s9 + $0x170] sm:$0xff]
  %v3652 = vld [vmem:[%s9 + $0x178] sm:$0xff]
  %v3653 = vld [vmem:[%s10] sm:$0x1]
  %v3655 = vlaneseq
  %v3656 = vshrl.u32 %v3655, 7
  %v3657 = vsub.s32 0, %v3656
  %v3658 = vrot.slane %v3653, %v3657
  %3660 = vmatprep.subr.mxu0 0.0
  %3661 = vmatpush1.msra.mxu0 %v3605
  %3662 = vmatprep.subr.mxu0 0.0
  %3663 = vmatpush1.msra.mxu0 %v3606
  %3664 = vmatprep.subr.mxu0 0.0
  %3665 = vmatpush1.msra.mxu0 %v3607
  %3666 = vmatprep.subr.mxu0 0.0
  %3667 = vmatpush1.msra.mxu0 %v3608
  %3668 = vmatprep.subr.mxu0 0.0
  %3669 = vmatpush1.msra.mxu0 %v3609
  %3670 = vmatprep.subr.mxu0 0.0
  %3671 = vmatpush1.msra.mxu0 %v3610
  %3672 = vmatprep.subr.mxu0 0.0
  %3673 = vmatpush1.msra.mxu0 %v3611
  %3674 = vmatprep.subr.mxu0 0.0
  %3675 = vmatpush1.msra.mxu0 %v3612
  %3676 = vmatprep.subr.mxu0 0.0
  %3677 = vmatpush1.msra.mxu0 %v3613
  %3678 = vmatprep.subr.mxu0 0.0
  %3679 = vmatpush1.msra.mxu0 %v3614
  %3680 = vmatprep.subr.mxu0 0.0
  %3681 = vmatpush1.msra.mxu0 %v3615
  %3682 = vmatprep.subr.mxu0 0.0
  %3683 = vmatpush1.msra.mxu0 %v3616
  %3684 = vmatprep.subr.mxu0 0.0
  %3685 = vmatpush1.msra.mxu0 %v3617
  %3686 = vmatprep.subr.mxu0 0.0
  %3687 = vmatpush1.msra.mxu0 %v3618
  %3688 = vmatprep.subr.mxu0 0.0
  %3689 = vmatpush1.msra.mxu0 %v3619
  %3690 = vmatprep.subr.mxu0 0.0
  %3691 = vmatpush1.msra.mxu0 %v3620
  %3692 = vmatprep.subr.mxu0 0.0
  %3693 = vmatpush1.msra.mxu0 %v3621
  %3694 = vmatprep.subr.mxu0 0.0
  %3695 = vmatpush1.msra.mxu0 %v3622
  %3696 = vmatprep.subr.mxu0 0.0
  %3697 = vmatpush1.msra.mxu0 %v3623
  %3698 = vmatprep.subr.mxu0 0.0
  %3699 = vmatpush1.msra.mxu0 %v3624
  %3700 = vmatprep.subr.mxu0 0.0
  %3701 = vmatpush1.msra.mxu0 %v3625
  %3702 = vmatprep.subr.mxu0 0.0
  %3703 = vmatpush1.msra.mxu0 %v3626
  %3704 = vmatprep.subr.mxu0 0.0
  %3705 = vmatpush1.msra.mxu0 %v3627
  %3706 = vmatprep.subr.mxu0 0.0
  %3707 = vmatpush1.msra.mxu0 %v3628
  %3708 = vmatprep.subr.mxu0 0.0
  %3709 = vmatpush1.msra.mxu0 %v3629
  %3710 = vmatprep.subr.mxu0 0.0
  %3711 = vmatpush1.msra.mxu0 %v3630
  %3712 = vmatprep.subr.mxu0 0.0
  %3713 = vmatpush1.msra.mxu0 %v3631
  %3714 = vmatprep.subr.mxu0 0.0
  %3715 = vmatpush1.msra.mxu0 %v3632
  %3716 = vmatprep.subr.mxu0 0.0
  %3717 = vmatpush1.msra.mxu0 %v3633
  %3718 = vmatprep.subr.mxu0 0.0
  %3719 = vmatpush1.msra.mxu0 %v3634
  %3720 = vmatprep.subr.mxu0 0.0
  %3721 = vmatpush1.msra.mxu0 %v3635
  %3722 = vmatprep.subr.mxu0 0.0
  %3723 = vmatpush1.msra.mxu0 %v3636
  %3724 = vmatprep.mubr.f32.mxu0 %v3590
  %3725 = vmatmul.mubr.f32.gmra.mrb[0].mxu0 %v3576
  %v3726 = vpop.f32.mrb[0].mxu0
  %v3727 = vadd.f32 %v3658, %v3726
  %v3728 = vpop.f32.mrb[0].mxu0
  %3729 = vdwg.mxu0
  %3730 = vmatprep.subr.mxu0 0.0
  %3731 = vmatpush1.msra.mxu0 %v3637
  %3732 = vmatprep.subr.mxu0 0.0
  %3733 = vmatpush1.msra.mxu0 %v3638
  %3734 = vmatprep.subr.mxu0 0.0
  %3735 = vmatpush1.msra.mxu0 %v3639
  %3736 = vmatprep.subr.mxu0 0.0
  %3737 = vmatpush1.msra.mxu0 %v3640
  %3738 = vmatprep.subr.mxu0 0.0
  %3739 = vmatpush1.msra.mxu0 %v3641
  %3740 = vmatprep.subr.mxu0 0.0
  %3741 = vmatpush1.msra.mxu0 %v3642
  %3742 = vmatprep.subr.mxu0 0.0
  %3743 = vmatpush1.msra.mxu0 %v3643
  %3744 = vmatprep.subr.mxu0 0.0
  %3745 = vmatpush1.msra.mxu0 %v3644
  %3746 = vmatprep.subr.mxu0 0.0
  %3747 = vmatpush1.msra.mxu0 %v3645
  %3748 = vmatprep.subr.mxu0 0.0
  %3749 = vmatpush1.msra.mxu0 %v3646
  %3750 = vmatprep.subr.mxu0 0.0
  %3751 = vmatpush1.msra.mxu0 %v3647
  %3752 = vmatprep.subr.mxu0 0.0
  %3753 = vmatpush1.msra.mxu0 %v3648
  %3754 = vmatprep.subr.mxu0 0.0
  %3755 = vmatpush1.msra.mxu0 %v3649
  %3756 = vmatprep.subr.mxu0 0.0
  %3757 = vmatpush1.msra.mxu0 %v3650
  %3758 = vmatprep.subr.mxu0 0.0
  %3759 = vmatpush1.msra.mxu0 %v3651
  %3760 = vmatprep.subr.mxu0 0.0
  %3761 = vmatpush1.msra.mxu0 %v3652
  %3762 = vmatprep.subr.mxu0 0.0
  %3763 = vmatpush1.msra.mxu0 0.0
  %3764 = vmatprep.subr.mxu0 0.0
  %3765 = vmatpush1.msra.mxu0 0.0
  %3766 = vmatprep.subr.mxu0 0.0
  %3767 = vmatpush1.msra.mxu0 0.0
  %3768 = vmatprep.subr.mxu0 0.0
  %3769 = vmatpush1.msra.mxu0 0.0
  %3770 = vmatprep.subr.mxu0 0.0
  %3771 = vmatpush1.msra.mxu0 0.0
  %3772 = vmatprep.subr.mxu0 0.0
  %3773 = vmatpush1.msra.mxu0 0.0
  %3774 = vmatprep.subr.mxu0 0.0
  %3775 = vmatpush1.msra.mxu0 0.0
  %3776 = vmatprep.subr.mxu0 0.0
  %3777 = vmatpush1.msra.mxu0 0.0
  %3778 = vmatprep.subr.mxu0 0.0
  %3779 = vmatpush1.msra.mxu0 0.0
  %3780 = vmatprep.subr.mxu0 0.0
  %3781 = vmatpush1.msra.mxu0 0.0
  %3782 = vmatprep.subr.mxu0 0.0
  %3783 = vmatpush1.msra.mxu0 0.0
  %3784 = vmatprep.subr.mxu0 0.0
  %3785 = vmatpush1.msra.mxu0 0.0
  %3786 = vmatprep.subr.mxu0 0.0
  %3787 = vmatpush1.msra.mxu0 0.0
  %3788 = vmatprep.subr.mxu0 0.0
  %3789 = vmatpush1.msra.mxu0 0.0
  %3790 = vmatprep.subr.mxu0 0.0
  %3791 = vmatpush1.msra.mxu0 0.0
  %3792 = vmatprep.subr.mxu0 0.0
  %3793 = vmatpush1.msra.mxu0 0.0
  %3794 = vmatprep.mubr.f32.mxu0 0.0
  %3795 = vmatmul.mubr.f32.gmra.mrb[0].mxu0 %v3604
  %v3796 = vpop.f32.mrb[0].mxu0
  %v3797 = vadd.f32 %v3727, %v3796
  %v3798 = vpop.f32.mrb[0].mxu0
  %3799 = vdwg.mxu0
  %v3800 = vlaneseq
  %v3801 = vand.u32 %v3800, 127
  %vm3802 = vcmp.lt.s32.totalorder %v3801, 4
  %vm3803 = vcmp.gt.f32.partialorder %v3797, 20.0
  %v3804 = vmin.f32 %v3797, 20.0
  %v3805 = vmul.f32 %v3804, 1.442695
  %v3806 = vpow.pop %v3805
  %v3807 = vadd.f32 %v3806, 1.0
  %v3808 = vlog2.pop %v3807
  %v3809 = vmul.f32 %v3808, 0.6931472
  %v3810 = vmul.f32 -0.5, %v3806
  %v3811 = vadd.f32 %v3810, 1.0
  %v3812 = vmul.f32 %v3811, %v3806
  %v3813 = vand.u32 2147483647, %v3806
  %vm3814 = vcmp.lt.f32.partialorder %v3813, 0.0004427343
  %v3815 = vsel %vm3814, %v3812, %v3809
  %v3816 = vsel %vm3803, %v3797, %v3815
  %v3817 = vadd.f32 %v3816, 1e-05
  %v3818 = vsel %vm3802, %v3797, %v3817
  %vm3819 = vcmask 58368
  %3820 = vst.msk [vmem:[%s13] sm:$0x3] %vm3819, %v3818
  %3822 = vrot.lane.b32.xlu0 %v3797, 124
  %v3823 = vpop.permute.xlu0 %3822
  %v3825 = vmin.f32 %v3797, %v3823
  %vm3826 = vcmask 91200
  %3827 = vst.msk [vmem:[%s13] sm:$0x3] %vm3826, %v3825
  // Predicated region
  $region54: #{actor_critic_forward.1} parent=0 // pred_check
    _
  $region55: #{actor_critic_forward.1} parent=0 // pred_check_branch
    %3829 = sbr.rel (0) target = $region57
  $region56: #{actor_critic_forward.1} parent=0 // pred_region
    _
  $region57: #{actor_critic_forward.1} parent=0 // pred_fallthru
    _
  // Predicated region
  $region58: #{actor_critic_forward.1} parent=0 // pred_check
    _
  $region59: #{actor_critic_forward.1} parent=0 // pred_check_branch
    %3831 = sbr.rel (0) target = $region61
  $region60: #{actor_critic_forward.1} parent=0 // pred_region
    _
  $region61: #{actor_critic_forward.1} parent=0 // pred_fallthru
    _

</llo_original>
